<compile_context>
chip_gen: v6e
topology: v6e:2x2x1
jax: 0.10.0
libtpu: 0.0.40
codegen_flags: <defaults>
</compile_context>

<pallas_src>
import functools

import jax
import jax.numpy as jnp
from jax.experimental import pallas as pl
from jax.experimental.pallas import tpu as pltpu

# ---- model dimensions (small, TPU-layout friendly) ----
B = 8          # batch
E = 128        # embedding dim
H = 128        # cell hidden size
V = 128        # vocab size
MAXLEN = 8     # sequence length to generate
SOS_IDX = 1
EOS_IDX = 2
PAD_IDX = 0


def ar_generate_kernel(g_ref, wcomb_ref, whh_ref, brz_ref, bin_ref, bhn_ref,
                       wout_ref, bout_ref, ids_ref, *, sos_idx, temperature):
    maxlen, b, v = g_ref.shape
    h_dim = whh_ref.shape[0]

    # Hoisted constants / weight loads (done once for the whole sequence).
    iota_v = jax.lax.broadcasted_iota(jnp.int32, (b, v), 1)
    w_comb = wcomb_ref[...]          # (V, 3H)  bf16 : Emb @ W_ih^T
    w_hh = whh_ref[...]              # (H, 3H)  bf16
    w_out = wout_ref[...]            # (H, V)   bf16
    b_rz = brz_ref[...]              # (1, 2H)  f32  : (b_ih + b_hh)[:, :2H]
    b_in = bin_ref[...]              # (1, H)   f32  : b_ih[:, 2H:]
    b_hn = bhn_ref[...]              # (1, H)   f32  : b_hh[:, 2H:]
    b_out = bout_ref[...]            # (1, V)   f32

    inv_temp = None if temperature is None else jnp.float32(1.0 / temperature)

    # Loop carries: recurrent state (f32) and current-token one-hot (bf16).
    state = jnp.zeros((b, h_dim), jnp.float32)
    onehot = (iota_v == sos_idx).astype(jnp.bfloat16)

    for t in range(maxlen):  # fully unrolled at trace time (maxlen is small)
        # ---- GRU gates; embedding lookup folded into w_comb ----
        gi = jnp.dot(onehot, w_comb, preferred_element_type=jnp.float32)        # (B, 3H)
        gh = jnp.dot(state.astype(jnp.bfloat16), w_hh,
                     preferred_element_type=jnp.float32)                        # (B, 3H)
        rz = jax.nn.sigmoid(gi[:, :2 * h_dim] + gh[:, :2 * h_dim] + b_rz)       # (B, 2H)
        r = rz[:, :h_dim]
        z = rz[:, h_dim:]
        n = jnp.tanh(gi[:, 2 * h_dim:] + b_in + r * (gh[:, 2 * h_dim:] + b_hn))
        state = (1.0 - z) * n + z * state                                       # (B, H)

        # ---- output_layer(state): Linear H -> V, then temperature ----
        logits = jnp.dot(state.astype(jnp.bfloat16), w_out,
                         preferred_element_type=jnp.float32) + b_out            # (B, V)
        if inv_temp is not None:
            logits = logits * inv_temp

        # ---- random_choice_by_logits: Gumbel-max (first-index tie-break) ----
        perturbed = logits + g_ref[t]                                           # (B, V)
        m = jnp.max(perturbed, axis=-1, keepdims=True)
        sampled = jnp.min(jnp.where(perturbed == m, iota_v, v),
                          axis=-1).astype(jnp.int32)                            # (B,)

        # feed sampled token back as next-step one-hot; record id (time-major)
        onehot = (iota_v == sampled[:, None]).astype(jnp.bfloat16)
        ids_ref[pl.ds(t, 1), :] = sampled.reshape(1, b)


def autoregressive_generate(params, gumbel, *, sos_idx=SOS_IDX, temperature=None):
    """Returns sampled token ids of shape (B, maxlen), int32."""
    emb, w_ih, w_hh, b_ih, b_hh, w_out, b_out = params
    maxlen, batch, vocab = gumbel.shape
    hidden = w_hh.shape[0]

    # ---- offline folding (exact in f32, then bf16-quantized for the MXU) ----
    w_comb = jnp.dot(emb, w_ih).astype(jnp.bfloat16)        # (V, 3H): Emb @ W_ih^T
    w_hh_b = w_hh.astype(jnp.bfloat16)                      # (H, 3H)
    w_out_b = w_out.astype(jnp.bfloat16)                    # (H, V)
    b_rz = (b_ih + b_hh)[:, :2 * hidden]                    # (1, 2H)
    b_in = b_ih[:, 2 * hidden:]                             # (1, H)
    b_hn = b_hh[:, 2 * hidden:]                             # (1, H)

    kernel = functools.partial(ar_generate_kernel,
                               sos_idx=sos_idx, temperature=temperature)

    vmem_spec = lambda: pl.BlockSpec(memory_space=pltpu.MemorySpace.VMEM)
    ids_tm = pl.pallas_call(
        kernel,
        out_shape=jax.ShapeDtypeStruct((maxlen, batch), jnp.int32),
        in_specs=[vmem_spec() for _ in range(8)],
        out_specs=vmem_spec(),
    )(gumbel, w_comb, w_hh_b, b_rz, b_in, b_hn, w_out_b, b_out)

    return ids_tm.T  # (B, maxlen), matches torch.stack(ids_list, axis=1)


def init_params(key):
    """Deterministic synthetic parameters (shapes implied by the module)."""
    ks = jax.random.split(key, 7)
    s_emb = 1.0
    s_ih = 1.0 / jnp.sqrt(jnp.float32(E))
    s_hh = 1.0 / jnp.sqrt(jnp.float32(H))
    emb = jax.random.normal(ks[0], (V, E), jnp.float32) * s_emb          # embedder.weight
    w_ih = jax.random.normal(ks[1], (E, 3 * H), jnp.float32) * s_ih      # GRU W_ih^T
    w_hh = jax.random.normal(ks[2], (H, 3 * H), jnp.float32) * s_hh      # GRU W_hh^T
    b_ih = jax.random.normal(ks[3], (1, 3 * H), jnp.float32) * s_hh
    b_hh = jax.random.normal(ks[4], (1, 3 * H), jnp.float32) * s_hh
    w_out = jax.random.normal(ks[5], (H, V), jnp.float32) * s_hh         # output_layer.weight^T
    b_out = jax.random.normal(ks[6], (1, V), jnp.float32) * 0.1          # output_layer.bias
    return (emb, w_ih, w_hh, b_ih, b_hh, w_out, b_out)


if __name__ == "__main__":
    key = jax.random.PRNGKey(0)
    k_params, k_noise = jax.random.split(key)
    params = init_params(k_params)

    # Gumbel noise for random_choice_by_logits, precomputed deterministically.
    u = jax.random.uniform(k_noise, (MAXLEN, B, V), jnp.float32,
                           minval=1e-6, maxval=1.0 - 1e-6)
    gumbel = -jnp.log(-jnp.log(u))

    ids = autoregressive_generate(params, gumbel, temperature=1.0)
    ids = jax.block_until_ready(ids)

    assert ids.shape == (B, MAXLEN), ids.shape
    assert ids.dtype == jnp.int32
    assert bool(jnp.all((ids >= 0) & (ids < V)))
    # TODO(synk): SampledTokenSequence bookkeeping (per-step logits/gumbel_vars,
    # EOS->PAD masking, seq_neg_logprobs) not reproduced; forward() only returns .ids.
    print("KERNEL_OK")
</pallas_src>

<mosaic_0001>
module attributes {stable_mosaic.version = 11 : i64} {
  func.func @ar_generate_kernel(%arg0: memref<8x8x128xf32, #tpu.memory_space<vmem>>, %arg1: memref<128x384xbf16, #tpu.memory_space<vmem>>, %arg2: memref<128x384xbf16, #tpu.memory_space<vmem>>, %arg3: memref<1x256xf32, #tpu.memory_space<vmem>>, %arg4: memref<1x128xf32, #tpu.memory_space<vmem>>, %arg5: memref<1x128xf32, #tpu.memory_space<vmem>>, %arg6: memref<128x128xbf16, #tpu.memory_space<vmem>>, %arg7: memref<1x128xf32, #tpu.memory_space<vmem>>, %arg8: memref<8x8xi32, #tpu.memory_space<vmem>>) attributes {dimension_semantics = [], scalar_prefetch = 0 : i64, scratch_operands = 0 : i64, tpu.core_type = #tpu.core_type<tc>} {
    %0 = tpu.iota {dimensions = array<i32: 1>} : vector<8x128xi32>
    %c0 = arith.constant 0 : index
    %c0_0 = arith.constant 0 : index
    %1 = vector.load %arg1[%c0, %c0_0] : memref<128x384xbf16, #tpu.memory_space<vmem>>, vector<128x384xbf16>
    %c0_1 = arith.constant 0 : index
    %c0_2 = arith.constant 0 : index
    %2 = vector.load %arg2[%c0_1, %c0_2] : memref<128x384xbf16, #tpu.memory_space<vmem>>, vector<128x384xbf16>
    %c0_3 = arith.constant 0 : index
    %c0_4 = arith.constant 0 : index
    %3 = vector.load %arg6[%c0_3, %c0_4] : memref<128x128xbf16, #tpu.memory_space<vmem>>, vector<128x128xbf16>
    %c0_5 = arith.constant 0 : index
    %c0_6 = arith.constant 0 : index
    %4 = vector.load %arg3[%c0_5, %c0_6] : memref<1x256xf32, #tpu.memory_space<vmem>>, vector<1x256xf32>
    %c0_7 = arith.constant 0 : index
    %c0_8 = arith.constant 0 : index
    %5 = vector.load %arg4[%c0_7, %c0_8] : memref<1x128xf32, #tpu.memory_space<vmem>>, vector<1x128xf32>
    %c0_9 = arith.constant 0 : index
    %c0_10 = arith.constant 0 : index
    %6 = vector.load %arg5[%c0_9, %c0_10] : memref<1x128xf32, #tpu.memory_space<vmem>>, vector<1x128xf32>
    %c0_11 = arith.constant 0 : index
    %c0_12 = arith.constant 0 : index
    %7 = vector.load %arg7[%c0_11, %c0_12] : memref<1x128xf32, #tpu.memory_space<vmem>>, vector<1x128xf32>
    %cst = arith.constant 0.000000e+00 : f32
    %8 = vector.broadcast %cst : f32 to vector<8x128xf32>
    %c1_i32 = arith.constant 1 : i32
    %9 = vector.broadcast %c1_i32 : i32 to vector<8x128xi32>
    %10 = arith.cmpi eq, %0, %9 : vector<8x128xi32>
    %11 = arith.extui %10 : vector<8x128xi1> to vector<8x128xi32>
    %12 = arith.sitofp %11 : vector<8x128xi32> to vector<8x128xf32>
    %13 = arith.truncf %12 : vector<8x128xf32> to vector<8x128xbf16>
    %cst_13 = arith.constant dense<0.000000e+00> : vector<8x384xf32>
    %14 = tpu.matmul %13, %1, %cst_13 {dimension_numbers = #tpu.dot_dimension_numbers<[1], [0], [0], [1], [0, 0, 1, 1], [], []>} : vector<8x128xbf16>, vector<128x384xbf16>, vector<8x384xf32> -> vector<8x384xf32>
    %15 = arith.truncf %8 : vector<8x128xf32> to vector<8x128xbf16>
    %cst_14 = arith.constant dense<0.000000e+00> : vector<8x384xf32>
    %16 = tpu.matmul %15, %2, %cst_14 {dimension_numbers = #tpu.dot_dimension_numbers<[1], [0], [0], [1], [0, 0, 1, 1], [], []>} : vector<8x128xbf16>, vector<128x384xbf16>, vector<8x384xf32> -> vector<8x384xf32>
    %17 = vector.extract_strided_slice %14 {offsets = [0, 0], sizes = [8, 256], strides = [1, 1]} : vector<8x384xf32> to vector<8x256xf32>
    %18 = vector.extract_strided_slice %16 {offsets = [0, 0], sizes = [8, 256], strides = [1, 1]} : vector<8x384xf32> to vector<8x256xf32>
    %19 = arith.addf %17, %18 : vector<8x256xf32>
    %20 = vector.broadcast %4 : vector<1x256xf32> to vector<8x256xf32>
    %21 = arith.addf %19, %20 : vector<8x256xf32>
    %22 = arith.negf %21 : vector<8x256xf32>
    %23 = math.exp %22 : vector<8x256xf32>
    %cst_15 = arith.constant 1.000000e+00 : f32
    %24 = vector.broadcast %cst_15 : f32 to vector<8x256xf32>
    %25 = arith.addf %24, %23 : vector<8x256xf32>
    %26 = arith.divf %24, %25 : vector<8x256xf32>
    %27 = vector.extract_strided_slice %26 {offsets = [0, 0], sizes = [8, 128], strides = [1, 1]} : vector<8x256xf32> to vector<8x128xf32>
    %28 = vector.extract_strided_slice %26 {offsets = [0, 128], sizes = [8, 128], strides = [1, 1]} : vector<8x256xf32> to vector<8x128xf32>
    %29 = vector.extract_strided_slice %14 {offsets = [0, 256], sizes = [8, 128], strides = [1, 1]} : vector<8x384xf32> to vector<8x128xf32>
    %30 = vector.broadcast %5 : vector<1x128xf32> to vector<8x128xf32>
    %31 = arith.addf %29, %30 : vector<8x128xf32>
    %32 = vector.extract_strided_slice %16 {offsets = [0, 256], sizes = [8, 128], strides = [1, 1]} : vector<8x384xf32> to vector<8x128xf32>
    %33 = vector.broadcast %6 : vector<1x128xf32> to vector<8x128xf32>
    %34 = arith.addf %32, %33 : vector<8x128xf32>
    %35 = arith.mulf %27, %34 : vector<8x128xf32>
    %36 = arith.addf %31, %35 : vector<8x128xf32>
    %37 = math.tanh %36 : vector<8x128xf32>
    %cst_16 = arith.constant 1.000000e+00 : f32
    %38 = vector.broadcast %cst_16 : f32 to vector<8x128xf32>
    %39 = arith.subf %38, %28 : vector<8x128xf32>
    %40 = arith.mulf %39, %37 : vector<8x128xf32>
    %41 = arith.mulf %28, %8 : vector<8x128xf32>
    %42 = arith.addf %40, %41 : vector<8x128xf32>
    %43 = arith.truncf %42 : vector<8x128xf32> to vector<8x128xbf16>
    %cst_17 = arith.constant dense<0.000000e+00> : vector<8x128xf32>
    %44 = tpu.matmul %43, %3, %cst_17 {dimension_numbers = #tpu.dot_dimension_numbers<[1], [0], [0], [1], [0, 0, 1, 1], [], []>} : vector<8x128xbf16>, vector<128x128xbf16>, vector<8x128xf32> -> vector<8x128xf32>
    %45 = vector.broadcast %7 : vector<1x128xf32> to vector<8x128xf32>
    %46 = arith.addf %44, %45 : vector<8x128xf32>
    %cst_18 = arith.constant 1.000000e+00 : f32
    %47 = vector.broadcast %cst_18 : f32 to vector<8x128xf32>
    %48 = arith.mulf %46, %47 : vector<8x128xf32>
    %c0_19 = arith.constant 0 : index
    %c0_20 = arith.constant 0 : index
    %c0_21 = arith.constant 0 : index
    %49 = vector.load %arg0[%c0_19, %c0_20, %c0_21] : memref<8x8x128xf32, #tpu.memory_space<vmem>>, vector<1x8x128xf32>
    %50 = vector.shape_cast %49 : vector<1x8x128xf32> to vector<8x128xf32>
    %51 = arith.addf %48, %50 : vector<8x128xf32>
    %cst_22 = arith.constant dense<0xFF800000> : vector<8xf32>
    %52 = vector.multi_reduction <maximumf>, %51, %cst_22 [1] : vector<8x128xf32> to vector<8xf32>
    %53 = vector.shape_cast %52 : vector<8xf32> to vector<8x1xf32>
    %54 = vector.broadcast %53 : vector<8x1xf32> to vector<8x128xf32>
    %55 = arith.cmpf oeq, %51, %54 : vector<8x128xf32>
    %c128_i32 = arith.constant 128 : i32
    %56 = vector.broadcast %c128_i32 : i32 to vector<8x128xi32>
    %57 = arith.select %55, %0, %56 : vector<8x128xi1>, vector<8x128xi32>
    %cst_23 = arith.constant dense<2147483647> : vector<8xi32>
    %58 = vector.multi_reduction <minsi>, %57, %cst_23 [1] : vector<8x128xi32> to vector<8xi32>
    %59 = vector.shape_cast %58 : vector<8xi32> to vector<8x1xi32>
    %60 = vector.broadcast %59 : vector<8x1xi32> to vector<8x128xi32>
    %61 = arith.cmpi eq, %0, %60 : vector<8x128xi32>
    %62 = arith.extui %61 : vector<8x128xi1> to vector<8x128xi32>
    %63 = arith.sitofp %62 : vector<8x128xi32> to vector<8x128xf32>
    %64 = arith.truncf %63 : vector<8x128xf32> to vector<8x128xbf16>
    %65 = vector.shape_cast %58 : vector<8xi32> to vector<1x8xi32>
    %c0_24 = arith.constant 0 : index
    %c0_25 = arith.constant 0 : index
    %66 = vector.load %arg8[%c0_24, %c0_25] : memref<8x8xi32, #tpu.memory_space<vmem>>, vector<1x8xi32>
    tpu.vector_store %arg8[%c0_24, %c0_25], %65 {strides = array<i32>} : memref<8x8xi32, #tpu.memory_space<vmem>>, vector<1x8xi32>,
    %cst_26 = arith.constant dense<0.000000e+00> : vector<8x384xf32>
    %67 = tpu.matmul %64, %1, %cst_26 {dimension_numbers = #tpu.dot_dimension_numbers<[1], [0], [0], [1], [0, 0, 1, 1], [], []>} : vector<8x128xbf16>, vector<128x384xbf16>, vector<8x384xf32> -> vector<8x384xf32>
    %68 = arith.truncf %42 : vector<8x128xf32> to vector<8x128xbf16>
    %cst_27 = arith.constant dense<0.000000e+00> : vector<8x384xf32>
    %69 = tpu.matmul %68, %2, %cst_27 {dimension_numbers = #tpu.dot_dimension_numbers<[1], [0], [0], [1], [0, 0, 1, 1], [], []>} : vector<8x128xbf16>, vector<128x384xbf16>, vector<8x384xf32> -> vector<8x384xf32>
    %70 = vector.extract_strided_slice %67 {offsets = [0, 0], sizes = [8, 256], strides = [1, 1]} : vector<8x384xf32> to vector<8x256xf32>
    %71 = vector.extract_strided_slice %69 {offsets = [0, 0], sizes = [8, 256], strides = [1, 1]} : vector<8x384xf32> to vector<8x256xf32>
    %72 = arith.addf %70, %71 : vector<8x256xf32>
    %73 = vector.broadcast %4 : vector<1x256xf32> to vector<8x256xf32>
    %74 = arith.addf %72, %73 : vector<8x256xf32>
    %75 = arith.negf %74 : vector<8x256xf32>
    %76 = math.exp %75 : vector<8x256xf32>
    %cst_28 = arith.constant 1.000000e+00 : f32
    %77 = vector.broadcast %cst_28 : f32 to vector<8x256xf32>
    %78 = arith.addf %77, %76 : vector<8x256xf32>
    %79 = arith.divf %77, %78 : vector<8x256xf32>
    %80 = vector.extract_strided_slice %79 {offsets = [0, 0], sizes = [8, 128], strides = [1, 1]} : vector<8x256xf32> to vector<8x128xf32>
    %81 = vector.extract_strided_slice %79 {offsets = [0, 128], sizes = [8, 128], strides = [1, 1]} : vector<8x256xf32> to vector<8x128xf32>
    %82 = vector.extract_strided_slice %67 {offsets = [0, 256], sizes = [8, 128], strides = [1, 1]} : vector<8x384xf32> to vector<8x128xf32>
    %83 = vector.broadcast %5 : vector<1x128xf32> to vector<8x128xf32>
    %84 = arith.addf %82, %83 : vector<8x128xf32>
    %85 = vector.extract_strided_slice %69 {offsets = [0, 256], sizes = [8, 128], strides = [1, 1]} : vector<8x384xf32> to vector<8x128xf32>
    %86 = vector.broadcast %6 : vector<1x128xf32> to vector<8x128xf32>
    %87 = arith.addf %85, %86 : vector<8x128xf32>
    %88 = arith.mulf %80, %87 : vector<8x128xf32>
    %89 = arith.addf %84, %88 : vector<8x128xf32>
    %90 = math.tanh %89 : vector<8x128xf32>
    %cst_29 = arith.constant 1.000000e+00 : f32
    %91 = vector.broadcast %cst_29 : f32 to vector<8x128xf32>
    %92 = arith.subf %91, %81 : vector<8x128xf32>
    %93 = arith.mulf %92, %90 : vector<8x128xf32>
    %94 = arith.mulf %81, %42 : vector<8x128xf32>
    %95 = arith.addf %93, %94 : vector<8x128xf32>
    %96 = arith.truncf %95 : vector<8x128xf32> to vector<8x128xbf16>
    %cst_30 = arith.constant dense<0.000000e+00> : vector<8x128xf32>
    %97 = tpu.matmul %96, %3, %cst_30 {dimension_numbers = #tpu.dot_dimension_numbers<[1], [0], [0], [1], [0, 0, 1, 1], [], []>} : vector<8x128xbf16>, vector<128x128xbf16>, vector<8x128xf32> -> vector<8x128xf32>
    %98 = vector.broadcast %7 : vector<1x128xf32> to vector<8x128xf32>
    %99 = arith.addf %97, %98 : vector<8x128xf32>
    %cst_31 = arith.constant 1.000000e+00 : f32
    %100 = vector.broadcast %cst_31 : f32 to vector<8x128xf32>
    %101 = arith.mulf %99, %100 : vector<8x128xf32>
    %c1 = arith.constant 1 : index
    %c0_32 = arith.constant 0 : index
    %c0_33 = arith.constant 0 : index
    %102 = vector.load %arg0[%c1, %c0_32, %c0_33] : memref<8x8x128xf32, #tpu.memory_space<vmem>>, vector<1x8x128xf32>
    %103 = vector.shape_cast %102 : vector<1x8x128xf32> to vector<8x128xf32>
    %104 = arith.addf %101, %103 : vector<8x128xf32>
    %cst_34 = arith.constant dense<0xFF800000> : vector<8xf32>
    %105 = vector.multi_reduction <maximumf>, %104, %cst_34 [1] : vector<8x128xf32> to vector<8xf32>
    %106 = vector.shape_cast %105 : vector<8xf32> to vector<8x1xf32>
    %107 = vector.broadcast %106 : vector<8x1xf32> to vector<8x128xf32>
    %108 = arith.cmpf oeq, %104, %107 : vector<8x128xf32>
    %c128_i32_35 = arith.constant 128 : i32
    %109 = vector.broadcast %c128_i32_35 : i32 to vector<8x128xi32>
    %110 = arith.select %108, %0, %109 : vector<8x128xi1>, vector<8x128xi32>
    %cst_36 = arith.constant dense<2147483647> : vector<8xi32>
    %111 = vector.multi_reduction <minsi>, %110, %cst_36 [1] : vector<8x128xi32> to vector<8xi32>
    %112 = vector.shape_cast %111 : vector<8xi32> to vector<8x1xi32>
    %113 = vector.broadcast %112 : vector<8x1xi32> to vector<8x128xi32>
    %114 = arith.cmpi eq, %0, %113 : vector<8x128xi32>
    %115 = arith.extui %114 : vector<8x128xi1> to vector<8x128xi32>
    %116 = arith.sitofp %115 : vector<8x128xi32> to vector<8x128xf32>
    %117 = arith.truncf %116 : vector<8x128xf32> to vector<8x128xbf16>
    %118 = vector.shape_cast %111 : vector<8xi32> to vector<1x8xi32>
    %c1_37 = arith.constant 1 : index
    %c0_38 = arith.constant 0 : index
    %119 = vector.load %arg8[%c1_37, %c0_38] : memref<8x8xi32, #tpu.memory_space<vmem>>, vector<1x8xi32>
    tpu.vector_store %arg8[%c1_37, %c0_38], %118 {strides = array<i32>} : memref<8x8xi32, #tpu.memory_space<vmem>>, vector<1x8xi32>,
    %cst_39 = arith.constant dense<0.000000e+00> : vector<8x384xf32>
    %120 = tpu.matmul %117, %1, %cst_39 {dimension_numbers = #tpu.dot_dimension_numbers<[1], [0], [0], [1], [0, 0, 1, 1], [], []>} : vector<8x128xbf16>, vector<128x384xbf16>, vector<8x384xf32> -> vector<8x384xf32>
    %121 = arith.truncf %95 : vector<8x128xf32> to vector<8x128xbf16>
    %cst_40 = arith.constant dense<0.000000e+00> : vector<8x384xf32>
    %122 = tpu.matmul %121, %2, %cst_40 {dimension_numbers = #tpu.dot_dimension_numbers<[1], [0], [0], [1], [0, 0, 1, 1], [], []>} : vector<8x128xbf16>, vector<128x384xbf16>, vector<8x384xf32> -> vector<8x384xf32>
    %123 = vector.extract_strided_slice %120 {offsets = [0, 0], sizes = [8, 256], strides = [1, 1]} : vector<8x384xf32> to vector<8x256xf32>
    %124 = vector.extract_strided_slice %122 {offsets = [0, 0], sizes = [8, 256], strides = [1, 1]} : vector<8x384xf32> to vector<8x256xf32>
    %125 = arith.addf %123, %124 : vector<8x256xf32>
    %126 = vector.broadcast %4 : vector<1x256xf32> to vector<8x256xf32>
    %127 = arith.addf %125, %126 : vector<8x256xf32>
    %128 = arith.negf %127 : vector<8x256xf32>
    %129 = math.exp %128 : vector<8x256xf32>
    %cst_41 = arith.constant 1.000000e+00 : f32
    %130 = vector.broadcast %cst_41 : f32 to vector<8x256xf32>
    %131 = arith.addf %130, %129 : vector<8x256xf32>
    %132 = arith.divf %130, %131 : vector<8x256xf32>
    %133 = vector.extract_strided_slice %132 {offsets = [0, 0], sizes = [8, 128], strides = [1, 1]} : vector<8x256xf32> to vector<8x128xf32>
    %134 = vector.extract_strided_slice %132 {offsets = [0, 128], sizes = [8, 128], strides = [1, 1]} : vector<8x256xf32> to vector<8x128xf32>
    %135 = vector.extract_strided_slice %120 {offsets = [0, 256], sizes = [8, 128], strides = [1, 1]} : vector<8x384xf32> to vector<8x128xf32>
    %136 = vector.broadcast %5 : vector<1x128xf32> to vector<8x128xf32>
    %137 = arith.addf %135, %136 : vector<8x128xf32>
    %138 = vector.extract_strided_slice %122 {offsets = [0, 256], sizes = [8, 128], strides = [1, 1]} : vector<8x384xf32> to vector<8x128xf32>
    %139 = vector.broadcast %6 : vector<1x128xf32> to vector<8x128xf32>
    %140 = arith.addf %138, %139 : vector<8x128xf32>
    %141 = arith.mulf %133, %140 : vector<8x128xf32>
    %142 = arith.addf %137, %141 : vector<8x128xf32>
    %143 = math.tanh %142 : vector<8x128xf32>
    %cst_42 = arith.constant 1.000000e+00 : f32
    %144 = vector.broadcast %cst_42 : f32 to vector<8x128xf32>
    %145 = arith.subf %144, %134 : vector<8x128xf32>
    %146 = arith.mulf %145, %143 : vector<8x128xf32>
    %147 = arith.mulf %134, %95 : vector<8x128xf32>
    %148 = arith.addf %146, %147 : vector<8x128xf32>
    %149 = arith.truncf %148 : vector<8x128xf32> to vector<8x128xbf16>
    %cst_43 = arith.constant dense<0.000000e+00> : vector<8x128xf32>
    %150 = tpu.matmul %149, %3, %cst_43 {dimension_numbers = #tpu.dot_dimension_numbers<[1], [0], [0], [1], [0, 0, 1, 1], [], []>} : vector<8x128xbf16>, vector<128x128xbf16>, vector<8x128xf32> -> vector<8x128xf32>
    %151 = vector.broadcast %7 : vector<1x128xf32> to vector<8x128xf32>
    %152 = arith.addf %150, %151 : vector<8x128xf32>
    %cst_44 = arith.constant 1.000000e+00 : f32
    %153 = vector.broadcast %cst_44 : f32 to vector<8x128xf32>
    %154 = arith.mulf %152, %153 : vector<8x128xf32>
    %c2 = arith.constant 2 : index
    %c0_45 = arith.constant 0 : index
    %c0_46 = arith.constant 0 : index
    %155 = vector.load %arg0[%c2, %c0_45, %c0_46] : memref<8x8x128xf32, #tpu.memory_space<vmem>>, vector<1x8x128xf32>
    %156 = vector.shape_cast %155 : vector<1x8x128xf32> to vector<8x128xf32>
    %157 = arith.addf %154, %156 : vector<8x128xf32>
    %cst_47 = arith.constant dense<0xFF800000> : vector<8xf32>
    %158 = vector.multi_reduction <maximumf>, %157, %cst_47 [1] : vector<8x128xf32> to vector<8xf32>
    %159 = vector.shape_cast %158 : vector<8xf32> to vector<8x1xf32>
    %160 = vector.broadcast %159 : vector<8x1xf32> to vector<8x128xf32>
    %161 = arith.cmpf oeq, %157, %160 : vector<8x128xf32>
    %c128_i32_48 = arith.constant 128 : i32
    %162 = vector.broadcast %c128_i32_48 : i32 to vector<8x128xi32>
    %163 = arith.select %161, %0, %162 : vector<8x128xi1>, vector<8x128xi32>
    %cst_49 = arith.constant dense<2147483647> : vector<8xi32>
    %164 = vector.multi_reduction <minsi>, %163, %cst_49 [1] : vector<8x128xi32> to vector<8xi32>
    %165 = vector.shape_cast %164 : vector<8xi32> to vector<8x1xi32>
    %166 = vector.broadcast %165 : vector<8x1xi32> to vector<8x128xi32>
    %167 = arith.cmpi eq, %0, %166 : vector<8x128xi32>
    %168 = arith.extui %167 : vector<8x128xi1> to vector<8x128xi32>
    %169 = arith.sitofp %168 : vector<8x128xi32> to vector<8x128xf32>
    %170 = arith.truncf %169 : vector<8x128xf32> to vector<8x128xbf16>
    %171 = vector.shape_cast %164 : vector<8xi32> to vector<1x8xi32>
    %c2_50 = arith.constant 2 : index
    %c0_51 = arith.constant 0 : index
    %172 = vector.load %arg8[%c2_50, %c0_51] : memref<8x8xi32, #tpu.memory_space<vmem>>, vector<1x8xi32>
    tpu.vector_store %arg8[%c2_50, %c0_51], %171 {strides = array<i32>} : memref<8x8xi32, #tpu.memory_space<vmem>>, vector<1x8xi32>,
    %cst_52 = arith.constant dense<0.000000e+00> : vector<8x384xf32>
    %173 = tpu.matmul %170, %1, %cst_52 {dimension_numbers = #tpu.dot_dimension_numbers<[1], [0], [0], [1], [0, 0, 1, 1], [], []>} : vector<8x128xbf16>, vector<128x384xbf16>, vector<8x384xf32> -> vector<8x384xf32>
    %174 = arith.truncf %148 : vector<8x128xf32> to vector<8x128xbf16>
    %cst_53 = arith.constant dense<0.000000e+00> : vector<8x384xf32>
    %175 = tpu.matmul %174, %2, %cst_53 {dimension_numbers = #tpu.dot_dimension_numbers<[1], [0], [0], [1], [0, 0, 1, 1], [], []>} : vector<8x128xbf16>, vector<128x384xbf16>, vector<8x384xf32> -> vector<8x384xf32>
    %176 = vector.extract_strided_slice %173 {offsets = [0, 0], sizes = [8, 256], strides = [1, 1]} : vector<8x384xf32> to vector<8x256xf32>
    %177 = vector.extract_strided_slice %175 {offsets = [0, 0], sizes = [8, 256], strides = [1, 1]} : vector<8x384xf32> to vector<8x256xf32>
    %178 = arith.addf %176, %177 : vector<8x256xf32>
    %179 = vector.broadcast %4 : vector<1x256xf32> to vector<8x256xf32>
    %180 = arith.addf %178, %179 : vector<8x256xf32>
    %181 = arith.negf %180 : vector<8x256xf32>
    %182 = math.exp %181 : vector<8x256xf32>
    %cst_54 = arith.constant 1.000000e+00 : f32
    %183 = vector.broadcast %cst_54 : f32 to vector<8x256xf32>
    %184 = arith.addf %183, %182 : vector<8x256xf32>
    %185 = arith.divf %183, %184 : vector<8x256xf32>
    %186 = vector.extract_strided_slice %185 {offsets = [0, 0], sizes = [8, 128], strides = [1, 1]} : vector<8x256xf32> to vector<8x128xf32>
    %187 = vector.extract_strided_slice %185 {offsets = [0, 128], sizes = [8, 128], strides = [1, 1]} : vector<8x256xf32> to vector<8x128xf32>
    %188 = vector.extract_strided_slice %173 {offsets = [0, 256], sizes = [8, 128], strides = [1, 1]} : vector<8x384xf32> to vector<8x128xf32>
    %189 = vector.broadcast %5 : vector<1x128xf32> to vector<8x128xf32>
    %190 = arith.addf %188, %189 : vector<8x128xf32>
    %191 = vector.extract_strided_slice %175 {offsets = [0, 256], sizes = [8, 128], strides = [1, 1]} : vector<8x384xf32> to vector<8x128xf32>
    %192 = vector.broadcast %6 : vector<1x128xf32> to vector<8x128xf32>
    %193 = arith.addf %191, %192 : vector<8x128xf32>
    %194 = arith.mulf %186, %193 : vector<8x128xf32>
    %195 = arith.addf %190, %194 : vector<8x128xf32>
    %196 = math.tanh %195 : vector<8x128xf32>
    %cst_55 = arith.constant 1.000000e+00 : f32
    %197 = vector.broadcast %cst_55 : f32 to vector<8x128xf32>
    %198 = arith.subf %197, %187 : vector<8x128xf32>
    %199 = arith.mulf %198, %196 : vector<8x128xf32>
    %200 = arith.mulf %187, %148 : vector<8x128xf32>
    %201 = arith.addf %199, %200 : vector<8x128xf32>
    %202 = arith.truncf %201 : vector<8x128xf32> to vector<8x128xbf16>
    %cst_56 = arith.constant dense<0.000000e+00> : vector<8x128xf32>
    %203 = tpu.matmul %202, %3, %cst_56 {dimension_numbers = #tpu.dot_dimension_numbers<[1], [0], [0], [1], [0, 0, 1, 1], [], []>} : vector<8x128xbf16>, vector<128x128xbf16>, vector<8x128xf32> -> vector<8x128xf32>
    %204 = vector.broadcast %7 : vector<1x128xf32> to vector<8x128xf32>
    %205 = arith.addf %203, %204 : vector<8x128xf32>
    %cst_57 = arith.constant 1.000000e+00 : f32
    %206 = vector.broadcast %cst_57 : f32 to vector<8x128xf32>
    %207 = arith.mulf %205, %206 : vector<8x128xf32>
    %c3 = arith.constant 3 : index
    %c0_58 = arith.constant 0 : index
    %c0_59 = arith.constant 0 : index
    %208 = vector.load %arg0[%c3, %c0_58, %c0_59] : memref<8x8x128xf32, #tpu.memory_space<vmem>>, vector<1x8x128xf32>
    %209 = vector.shape_cast %208 : vector<1x8x128xf32> to vector<8x128xf32>
    %210 = arith.addf %207, %209 : vector<8x128xf32>
    %cst_60 = arith.constant dense<0xFF800000> : vector<8xf32>
    %211 = vector.multi_reduction <maximumf>, %210, %cst_60 [1] : vector<8x128xf32> to vector<8xf32>
    %212 = vector.shape_cast %211 : vector<8xf32> to vector<8x1xf32>
    %213 = vector.broadcast %212 : vector<8x1xf32> to vector<8x128xf32>
    %214 = arith.cmpf oeq, %210, %213 : vector<8x128xf32>
    %c128_i32_61 = arith.constant 128 : i32
    %215 = vector.broadcast %c128_i32_61 : i32 to vector<8x128xi32>
    %216 = arith.select %214, %0, %215 : vector<8x128xi1>, vector<8x128xi32>
    %cst_62 = arith.constant dense<2147483647> : vector<8xi32>
    %217 = vector.multi_reduction <minsi>, %216, %cst_62 [1] : vector<8x128xi32> to vector<8xi32>
    %218 = vector.shape_cast %217 : vector<8xi32> to vector<8x1xi32>
    %219 = vector.broadcast %218 : vector<8x1xi32> to vector<8x128xi32>
    %220 = arith.cmpi eq, %0, %219 : vector<8x128xi32>
    %221 = arith.extui %220 : vector<8x128xi1> to vector<8x128xi32>
    %222 = arith.sitofp %221 : vector<8x128xi32> to vector<8x128xf32>
    %223 = arith.truncf %222 : vector<8x128xf32> to vector<8x128xbf16>
    %224 = vector.shape_cast %217 : vector<8xi32> to vector<1x8xi32>
    %c3_63 = arith.constant 3 : index
    %c0_64 = arith.constant 0 : index
    %225 = vector.load %arg8[%c3_63, %c0_64] : memref<8x8xi32, #tpu.memory_space<vmem>>, vector<1x8xi32>
    tpu.vector_store %arg8[%c3_63, %c0_64], %224 {strides = array<i32>} : memref<8x8xi32, #tpu.memory_space<vmem>>, vector<1x8xi32>,
    %cst_65 = arith.constant dense<0.000000e+00> : vector<8x384xf32>
    %226 = tpu.matmul %223, %1, %cst_65 {dimension_numbers = #tpu.dot_dimension_numbers<[1], [0], [0], [1], [0, 0, 1, 1], [], []>} : vector<8x128xbf16>, vector<128x384xbf16>, vector<8x384xf32> -> vector<8x384xf32>
    %227 = arith.truncf %201 : vector<8x128xf32> to vector<8x128xbf16>
    %cst_66 = arith.constant dense<0.000000e+00> : vector<8x384xf32>
    %228 = tpu.matmul %227, %2, %cst_66 {dimension_numbers = #tpu.dot_dimension_numbers<[1], [0], [0], [1], [0, 0, 1, 1], [], []>} : vector<8x128xbf16>, vector<128x384xbf16>, vector<8x384xf32> -> vector<8x384xf32>
    %229 = vector.extract_strided_slice %226 {offsets = [0, 0], sizes = [8, 256], strides = [1, 1]} : vector<8x384xf32> to vector<8x256xf32>
    %230 = vector.extract_strided_slice %228 {offsets = [0, 0], sizes = [8, 256], strides = [1, 1]} : vector<8x384xf32> to vector<8x256xf32>
    %231 = arith.addf %229, %230 : vector<8x256xf32>
    %232 = vector.broadcast %4 : vector<1x256xf32> to vector<8x256xf32>
    %233 = arith.addf %231, %232 : vector<8x256xf32>
    %234 = arith.negf %233 : vector<8x256xf32>
    %235 = math.exp %234 : vector<8x256xf32>
    %cst_67 = arith.constant 1.000000e+00 : f32
    %236 = vector.broadcast %cst_67 : f32 to vector<8x256xf32>
    %237 = arith.addf %236, %235 : vector<8x256xf32>
    %238 = arith.divf %236, %237 : vector<8x256xf32>
    %239 = vector.extract_strided_slice %238 {offsets = [0, 0], sizes = [8, 128], strides = [1, 1]} : vector<8x256xf32> to vector<8x128xf32>
    %240 = vector.extract_strided_slice %238 {offsets = [0, 128], sizes = [8, 128], strides = [1, 1]} : vector<8x256xf32> to vector<8x128xf32>
    %241 = vector.extract_strided_slice %226 {offsets = [0, 256], sizes = [8, 128], strides = [1, 1]} : vector<8x384xf32> to vector<8x128xf32>
    %242 = vector.broadcast %5 : vector<1x128xf32> to vector<8x128xf32>
    %243 = arith.addf %241, %242 : vector<8x128xf32>
    %244 = vector.extract_strided_slice %228 {offsets = [0, 256], sizes = [8, 128], strides = [1, 1]} : vector<8x384xf32> to vector<8x128xf32>
    %245 = vector.broadcast %6 : vector<1x128xf32> to vector<8x128xf32>
    %246 = arith.addf %244, %245 : vector<8x128xf32>
    %247 = arith.mulf %239, %246 : vector<8x128xf32>
    %248 = arith.addf %243, %247 : vector<8x128xf32>
    %249 = math.tanh %248 : vector<8x128xf32>
    %cst_68 = arith.constant 1.000000e+00 : f32
    %250 = vector.broadcast %cst_68 : f32 to vector<8x128xf32>
    %251 = arith.subf %250, %240 : vector<8x128xf32>
    %252 = arith.mulf %251, %249 : vector<8x128xf32>
    %253 = arith.mulf %240, %201 : vector<8x128xf32>
    %254 = arith.addf %252, %253 : vector<8x128xf32>
    %255 = arith.truncf %254 : vector<8x128xf32> to vector<8x128xbf16>
    %cst_69 = arith.constant dense<0.000000e+00> : vector<8x128xf32>
    %256 = tpu.matmul %255, %3, %cst_69 {dimension_numbers = #tpu.dot_dimension_numbers<[1], [0], [0], [1], [0, 0, 1, 1], [], []>} : vector<8x128xbf16>, vector<128x128xbf16>, vector<8x128xf32> -> vector<8x128xf32>
    %257 = vector.broadcast %7 : vector<1x128xf32> to vector<8x128xf32>
    %258 = arith.addf %256, %257 : vector<8x128xf32>
    %cst_70 = arith.constant 1.000000e+00 : f32
    %259 = vector.broadcast %cst_70 : f32 to vector<8x128xf32>
    %260 = arith.mulf %258, %259 : vector<8x128xf32>
    %c4 = arith.constant 4 : index
    %c0_71 = arith.constant 0 : index
    %c0_72 = arith.constant 0 : index
    %261 = vector.load %arg0[%c4, %c0_71, %c0_72] : memref<8x8x128xf32, #tpu.memory_space<vmem>>, vector<1x8x128xf32>
    %262 = vector.shape_cast %261 : vector<1x8x128xf32> to vector<8x128xf32>
    %263 = arith.addf %260, %262 : vector<8x128xf32>
    %cst_73 = arith.constant dense<0xFF800000> : vector<8xf32>
    %264 = vector.multi_reduction <maximumf>, %263, %cst_73 [1] : vector<8x128xf32> to vector<8xf32>
    %265 = vector.shape_cast %264 : vector<8xf32> to vector<8x1xf32>
    %266 = vector.broadcast %265 : vector<8x1xf32> to vector<8x128xf32>
    %267 = arith.cmpf oeq, %263, %266 : vector<8x128xf32>
    %c128_i32_74 = arith.constant 128 : i32
    %268 = vector.broadcast %c128_i32_74 : i32 to vector<8x128xi32>
    %269 = arith.select %267, %0, %268 : vector<8x128xi1>, vector<8x128xi32>
    %cst_75 = arith.constant dense<2147483647> : vector<8xi32>
    %270 = vector.multi_reduction <minsi>, %269, %cst_75 [1] : vector<8x128xi32> to vector<8xi32>
    %271 = vector.shape_cast %270 : vector<8xi32> to vector<8x1xi32>
    %272 = vector.broadcast %271 : vector<8x1xi32> to vector<8x128xi32>
    %273 = arith.cmpi eq, %0, %272 : vector<8x128xi32>
    %274 = arith.extui %273 : vector<8x128xi1> to vector<8x128xi32>
    %275 = arith.sitofp %274 : vector<8x128xi32> to vector<8x128xf32>
    %276 = arith.truncf %275 : vector<8x128xf32> to vector<8x128xbf16>
    %277 = vector.shape_cast %270 : vector<8xi32> to vector<1x8xi32>
    %c4_76 = arith.constant 4 : index
    %c0_77 = arith.constant 0 : index
    %278 = vector.load %arg8[%c4_76, %c0_77] : memref<8x8xi32, #tpu.memory_space<vmem>>, vector<1x8xi32>
    tpu.vector_store %arg8[%c4_76, %c0_77], %277 {strides = array<i32>} : memref<8x8xi32, #tpu.memory_space<vmem>>, vector<1x8xi32>,
    %cst_78 = arith.constant dense<0.000000e+00> : vector<8x384xf32>
    %279 = tpu.matmul %276, %1, %cst_78 {dimension_numbers = #tpu.dot_dimension_numbers<[1], [0], [0], [1], [0, 0, 1, 1], [], []>} : vector<8x128xbf16>, vector<128x384xbf16>, vector<8x384xf32> -> vector<8x384xf32>
    %280 = arith.truncf %254 : vector<8x128xf32> to vector<8x128xbf16>
    %cst_79 = arith.constant dense<0.000000e+00> : vector<8x384xf32>
    %281 = tpu.matmul %280, %2, %cst_79 {dimension_numbers = #tpu.dot_dimension_numbers<[1], [0], [0], [1], [0, 0, 1, 1], [], []>} : vector<8x128xbf16>, vector<128x384xbf16>, vector<8x384xf32> -> vector<8x384xf32>
    %282 = vector.extract_strided_slice %279 {offsets = [0, 0], sizes = [8, 256], strides = [1, 1]} : vector<8x384xf32> to vector<8x256xf32>
    %283 = vector.extract_strided_slice %281 {offsets = [0, 0], sizes = [8, 256], strides = [1, 1]} : vector<8x384xf32> to vector<8x256xf32>
    %284 = arith.addf %282, %283 : vector<8x256xf32>
    %285 = vector.broadcast %4 : vector<1x256xf32> to vector<8x256xf32>
    %286 = arith.addf %284, %285 : vector<8x256xf32>
    %287 = arith.negf %286 : vector<8x256xf32>
    %288 = math.exp %287 : vector<8x256xf32>
    %cst_80 = arith.constant 1.000000e+00 : f32
    %289 = vector.broadcast %cst_80 : f32 to vector<8x256xf32>
    %290 = arith.addf %289, %288 : vector<8x256xf32>
    %291 = arith.divf %289, %290 : vector<8x256xf32>
    %292 = vector.extract_strided_slice %291 {offsets = [0, 0], sizes = [8, 128], strides = [1, 1]} : vector<8x256xf32> to vector<8x128xf32>
    %293 = vector.extract_strided_slice %291 {offsets = [0, 128], sizes = [8, 128], strides = [1, 1]} : vector<8x256xf32> to vector<8x128xf32>
    %294 = vector.extract_strided_slice %279 {offsets = [0, 256], sizes = [8, 128], strides = [1, 1]} : vector<8x384xf32> to vector<8x128xf32>
    %295 = vector.broadcast %5 : vector<1x128xf32> to vector<8x128xf32>
    %296 = arith.addf %294, %295 : vector<8x128xf32>
    %297 = vector.extract_strided_slice %281 {offsets = [0, 256], sizes = [8, 128], strides = [1, 1]} : vector<8x384xf32> to vector<8x128xf32>
    %298 = vector.broadcast %6 : vector<1x128xf32> to vector<8x128xf32>
    %299 = arith.addf %297, %298 : vector<8x128xf32>
    %300 = arith.mulf %292, %299 : vector<8x128xf32>
    %301 = arith.addf %296, %300 : vector<8x128xf32>
    %302 = math.tanh %301 : vector<8x128xf32>
    %cst_81 = arith.constant 1.000000e+00 : f32
    %303 = vector.broadcast %cst_81 : f32 to vector<8x128xf32>
    %304 = arith.subf %303, %293 : vector<8x128xf32>
    %305 = arith.mulf %304, %302 : vector<8x128xf32>
    %306 = arith.mulf %293, %254 : vector<8x128xf32>
    %307 = arith.addf %305, %306 : vector<8x128xf32>
    %308 = arith.truncf %307 : vector<8x128xf32> to vector<8x128xbf16>
    %cst_82 = arith.constant dense<0.000000e+00> : vector<8x128xf32>
    %309 = tpu.matmul %308, %3, %cst_82 {dimension_numbers = #tpu.dot_dimension_numbers<[1], [0], [0], [1], [0, 0, 1, 1], [], []>} : vector<8x128xbf16>, vector<128x128xbf16>, vector<8x128xf32> -> vector<8x128xf32>
    %310 = vector.broadcast %7 : vector<1x128xf32> to vector<8x128xf32>
    %311 = arith.addf %309, %310 : vector<8x128xf32>
    %cst_83 = arith.constant 1.000000e+00 : f32
    %312 = vector.broadcast %cst_83 : f32 to vector<8x128xf32>
    %313 = arith.mulf %311, %312 : vector<8x128xf32>
    %c5 = arith.constant 5 : index
    %c0_84 = arith.constant 0 : index
    %c0_85 = arith.constant 0 : index
    %314 = vector.load %arg0[%c5, %c0_84, %c0_85] : memref<8x8x128xf32, #tpu.memory_space<vmem>>, vector<1x8x128xf32>
    %315 = vector.shape_cast %314 : vector<1x8x128xf32> to vector<8x128xf32>
    %316 = arith.addf %313, %315 : vector<8x128xf32>
    %cst_86 = arith.constant dense<0xFF800000> : vector<8xf32>
    %317 = vector.multi_reduction <maximumf>, %316, %cst_86 [1] : vector<8x128xf32> to vector<8xf32>
    %318 = vector.shape_cast %317 : vector<8xf32> to vector<8x1xf32>
    %319 = vector.broadcast %318 : vector<8x1xf32> to vector<8x128xf32>
    %320 = arith.cmpf oeq, %316, %319 : vector<8x128xf32>
    %c128_i32_87 = arith.constant 128 : i32
    %321 = vector.broadcast %c128_i32_87 : i32 to vector<8x128xi32>
    %322 = arith.select %320, %0, %321 : vector<8x128xi1>, vector<8x128xi32>
    %cst_88 = arith.constant dense<2147483647> : vector<8xi32>
    %323 = vector.multi_reduction <minsi>, %322, %cst_88 [1] : vector<8x128xi32> to vector<8xi32>
    %324 = vector.shape_cast %323 : vector<8xi32> to vector<8x1xi32>
    %325 = vector.broadcast %324 : vector<8x1xi32> to vector<8x128xi32>
    %326 = arith.cmpi eq, %0, %325 : vector<8x128xi32>
    %327 = arith.extui %326 : vector<8x128xi1> to vector<8x128xi32>
    %328 = arith.sitofp %327 : vector<8x128xi32> to vector<8x128xf32>
    %329 = arith.truncf %328 : vector<8x128xf32> to vector<8x128xbf16>
    %330 = vector.shape_cast %323 : vector<8xi32> to vector<1x8xi32>
    %c5_89 = arith.constant 5 : index
    %c0_90 = arith.constant 0 : index
    %331 = vector.load %arg8[%c5_89, %c0_90] : memref<8x8xi32, #tpu.memory_space<vmem>>, vector<1x8xi32>
    tpu.vector_store %arg8[%c5_89, %c0_90], %330 {strides = array<i32>} : memref<8x8xi32, #tpu.memory_space<vmem>>, vector<1x8xi32>,
    %cst_91 = arith.constant dense<0.000000e+00> : vector<8x384xf32>
    %332 = tpu.matmul %329, %1, %cst_91 {dimension_numbers = #tpu.dot_dimension_numbers<[1], [0], [0], [1], [0, 0, 1, 1], [], []>} : vector<8x128xbf16>, vector<128x384xbf16>, vector<8x384xf32> -> vector<8x384xf32>
    %333 = arith.truncf %307 : vector<8x128xf32> to vector<8x128xbf16>
    %cst_92 = arith.constant dense<0.000000e+00> : vector<8x384xf32>
    %334 = tpu.matmul %333, %2, %cst_92 {dimension_numbers = #tpu.dot_dimension_numbers<[1], [0], [0], [1], [0, 0, 1, 1], [], []>} : vector<8x128xbf16>, vector<128x384xbf16>, vector<8x384xf32> -> vector<8x384xf32>
    %335 = vector.extract_strided_slice %332 {offsets = [0, 0], sizes = [8, 256], strides = [1, 1]} : vector<8x384xf32> to vector<8x256xf32>
    %336 = vector.extract_strided_slice %334 {offsets = [0, 0], sizes = [8, 256], strides = [1, 1]} : vector<8x384xf32> to vector<8x256xf32>
    %337 = arith.addf %335, %336 : vector<8x256xf32>
    %338 = vector.broadcast %4 : vector<1x256xf32> to vector<8x256xf32>
    %339 = arith.addf %337, %338 : vector<8x256xf32>
    %340 = arith.negf %339 : vector<8x256xf32>
    %341 = math.exp %340 : vector<8x256xf32>
    %cst_93 = arith.constant 1.000000e+00 : f32
    %342 = vector.broadcast %cst_93 : f32 to vector<8x256xf32>
    %343 = arith.addf %342, %341 : vector<8x256xf32>
    %344 = arith.divf %342, %343 : vector<8x256xf32>
    %345 = vector.extract_strided_slice %344 {offsets = [0, 0], sizes = [8, 128], strides = [1, 1]} : vector<8x256xf32> to vector<8x128xf32>
    %346 = vector.extract_strided_slice %344 {offsets = [0, 128], sizes = [8, 128], strides = [1, 1]} : vector<8x256xf32> to vector<8x128xf32>
    %347 = vector.extract_strided_slice %332 {offsets = [0, 256], sizes = [8, 128], strides = [1, 1]} : vector<8x384xf32> to vector<8x128xf32>
    %348 = vector.broadcast %5 : vector<1x128xf32> to vector<8x128xf32>
    %349 = arith.addf %347, %348 : vector<8x128xf32>
    %350 = vector.extract_strided_slice %334 {offsets = [0, 256], sizes = [8, 128], strides = [1, 1]} : vector<8x384xf32> to vector<8x128xf32>
    %351 = vector.broadcast %6 : vector<1x128xf32> to vector<8x128xf32>
    %352 = arith.addf %350, %351 : vector<8x128xf32>
    %353 = arith.mulf %345, %352 : vector<8x128xf32>
    %354 = arith.addf %349, %353 : vector<8x128xf32>
    %355 = math.tanh %354 : vector<8x128xf32>
    %cst_94 = arith.constant 1.000000e+00 : f32
    %356 = vector.broadcast %cst_94 : f32 to vector<8x128xf32>
    %357 = arith.subf %356, %346 : vector<8x128xf32>
    %358 = arith.mulf %357, %355 : vector<8x128xf32>
    %359 = arith.mulf %346, %307 : vector<8x128xf32>
    %360 = arith.addf %358, %359 : vector<8x128xf32>
    %361 = arith.truncf %360 : vector<8x128xf32> to vector<8x128xbf16>
    %cst_95 = arith.constant dense<0.000000e+00> : vector<8x128xf32>
    %362 = tpu.matmul %361, %3, %cst_95 {dimension_numbers = #tpu.dot_dimension_numbers<[1], [0], [0], [1], [0, 0, 1, 1], [], []>} : vector<8x128xbf16>, vector<128x128xbf16>, vector<8x128xf32> -> vector<8x128xf32>
    %363 = vector.broadcast %7 : vector<1x128xf32> to vector<8x128xf32>
    %364 = arith.addf %362, %363 : vector<8x128xf32>
    %cst_96 = arith.constant 1.000000e+00 : f32
    %365 = vector.broadcast %cst_96 : f32 to vector<8x128xf32>
    %366 = arith.mulf %364, %365 : vector<8x128xf32>
    %c6 = arith.constant 6 : index
    %c0_97 = arith.constant 0 : index
    %c0_98 = arith.constant 0 : index
    %367 = vector.load %arg0[%c6, %c0_97, %c0_98] : memref<8x8x128xf32, #tpu.memory_space<vmem>>, vector<1x8x128xf32>
    %368 = vector.shape_cast %367 : vector<1x8x128xf32> to vector<8x128xf32>
    %369 = arith.addf %366, %368 : vector<8x128xf32>
    %cst_99 = arith.constant dense<0xFF800000> : vector<8xf32>
    %370 = vector.multi_reduction <maximumf>, %369, %cst_99 [1] : vector<8x128xf32> to vector<8xf32>
    %371 = vector.shape_cast %370 : vector<8xf32> to vector<8x1xf32>
    %372 = vector.broadcast %371 : vector<8x1xf32> to vector<8x128xf32>
    %373 = arith.cmpf oeq, %369, %372 : vector<8x128xf32>
    %c128_i32_100 = arith.constant 128 : i32
    %374 = vector.broadcast %c128_i32_100 : i32 to vector<8x128xi32>
    %375 = arith.select %373, %0, %374 : vector<8x128xi1>, vector<8x128xi32>
    %cst_101 = arith.constant dense<2147483647> : vector<8xi32>
    %376 = vector.multi_reduction <minsi>, %375, %cst_101 [1] : vector<8x128xi32> to vector<8xi32>
    %377 = vector.shape_cast %376 : vector<8xi32> to vector<8x1xi32>
    %378 = vector.broadcast %377 : vector<8x1xi32> to vector<8x128xi32>
    %379 = arith.cmpi eq, %0, %378 : vector<8x128xi32>
    %380 = arith.extui %379 : vector<8x128xi1> to vector<8x128xi32>
    %381 = arith.sitofp %380 : vector<8x128xi32> to vector<8x128xf32>
    %382 = arith.truncf %381 : vector<8x128xf32> to vector<8x128xbf16>
    %383 = vector.shape_cast %376 : vector<8xi32> to vector<1x8xi32>
    %c6_102 = arith.constant 6 : index
    %c0_103 = arith.constant 0 : index
    %384 = vector.load %arg8[%c6_102, %c0_103] : memref<8x8xi32, #tpu.memory_space<vmem>>, vector<1x8xi32>
    tpu.vector_store %arg8[%c6_102, %c0_103], %383 {strides = array<i32>} : memref<8x8xi32, #tpu.memory_space<vmem>>, vector<1x8xi32>,
    %cst_104 = arith.constant dense<0.000000e+00> : vector<8x384xf32>
    %385 = tpu.matmul %382, %1, %cst_104 {dimension_numbers = #tpu.dot_dimension_numbers<[1], [0], [0], [1], [0, 0, 1, 1], [], []>} : vector<8x128xbf16>, vector<128x384xbf16>, vector<8x384xf32> -> vector<8x384xf32>
    %386 = arith.truncf %360 : vector<8x128xf32> to vector<8x128xbf16>
    %cst_105 = arith.constant dense<0.000000e+00> : vector<8x384xf32>
    %387 = tpu.matmul %386, %2, %cst_105 {dimension_numbers = #tpu.dot_dimension_numbers<[1], [0], [0], [1], [0, 0, 1, 1], [], []>} : vector<8x128xbf16>, vector<128x384xbf16>, vector<8x384xf32> -> vector<8x384xf32>
    %388 = vector.extract_strided_slice %385 {offsets = [0, 0], sizes = [8, 256], strides = [1, 1]} : vector<8x384xf32> to vector<8x256xf32>
    %389 = vector.extract_strided_slice %387 {offsets = [0, 0], sizes = [8, 256], strides = [1, 1]} : vector<8x384xf32> to vector<8x256xf32>
    %390 = arith.addf %388, %389 : vector<8x256xf32>
    %391 = vector.broadcast %4 : vector<1x256xf32> to vector<8x256xf32>
    %392 = arith.addf %390, %391 : vector<8x256xf32>
    %393 = arith.negf %392 : vector<8x256xf32>
    %394 = math.exp %393 : vector<8x256xf32>
    %cst_106 = arith.constant 1.000000e+00 : f32
    %395 = vector.broadcast %cst_106 : f32 to vector<8x256xf32>
    %396 = arith.addf %395, %394 : vector<8x256xf32>
    %397 = arith.divf %395, %396 : vector<8x256xf32>
    %398 = vector.extract_strided_slice %397 {offsets = [0, 0], sizes = [8, 128], strides = [1, 1]} : vector<8x256xf32> to vector<8x128xf32>
    %399 = vector.extract_strided_slice %397 {offsets = [0, 128], sizes = [8, 128], strides = [1, 1]} : vector<8x256xf32> to vector<8x128xf32>
    %400 = vector.extract_strided_slice %385 {offsets = [0, 256], sizes = [8, 128], strides = [1, 1]} : vector<8x384xf32> to vector<8x128xf32>
    %401 = vector.broadcast %5 : vector<1x128xf32> to vector<8x128xf32>
    %402 = arith.addf %400, %401 : vector<8x128xf32>
    %403 = vector.extract_strided_slice %387 {offsets = [0, 256], sizes = [8, 128], strides = [1, 1]} : vector<8x384xf32> to vector<8x128xf32>
    %404 = vector.broadcast %6 : vector<1x128xf32> to vector<8x128xf32>
    %405 = arith.addf %403, %404 : vector<8x128xf32>
    %406 = arith.mulf %398, %405 : vector<8x128xf32>
    %407 = arith.addf %402, %406 : vector<8x128xf32>
    %408 = math.tanh %407 : vector<8x128xf32>
    %cst_107 = arith.constant 1.000000e+00 : f32
    %409 = vector.broadcast %cst_107 : f32 to vector<8x128xf32>
    %410 = arith.subf %409, %399 : vector<8x128xf32>
    %411 = arith.mulf %410, %408 : vector<8x128xf32>
    %412 = arith.mulf %399, %360 : vector<8x128xf32>
    %413 = arith.addf %411, %412 : vector<8x128xf32>
    %414 = arith.truncf %413 : vector<8x128xf32> to vector<8x128xbf16>
    %cst_108 = arith.constant dense<0.000000e+00> : vector<8x128xf32>
    %415 = tpu.matmul %414, %3, %cst_108 {dimension_numbers = #tpu.dot_dimension_numbers<[1], [0], [0], [1], [0, 0, 1, 1], [], []>} : vector<8x128xbf16>, vector<128x128xbf16>, vector<8x128xf32> -> vector<8x128xf32>
    %416 = vector.broadcast %7 : vector<1x128xf32> to vector<8x128xf32>
    %417 = arith.addf %415, %416 : vector<8x128xf32>
    %cst_109 = arith.constant 1.000000e+00 : f32
    %418 = vector.broadcast %cst_109 : f32 to vector<8x128xf32>
    %419 = arith.mulf %417, %418 : vector<8x128xf32>
    %c7 = arith.constant 7 : index
    %c0_110 = arith.constant 0 : index
    %c0_111 = arith.constant 0 : index
    %420 = vector.load %arg0[%c7, %c0_110, %c0_111] : memref<8x8x128xf32, #tpu.memory_space<vmem>>, vector<1x8x128xf32>
    %421 = vector.shape_cast %420 : vector<1x8x128xf32> to vector<8x128xf32>
    %422 = arith.addf %419, %421 : vector<8x128xf32>
    %cst_112 = arith.constant dense<0xFF800000> : vector<8xf32>
    %423 = vector.multi_reduction <maximumf>, %422, %cst_112 [1] : vector<8x128xf32> to vector<8xf32>
    %424 = vector.shape_cast %423 : vector<8xf32> to vector<8x1xf32>
    %425 = vector.broadcast %424 : vector<8x1xf32> to vector<8x128xf32>
    %426 = arith.cmpf oeq, %422, %425 : vector<8x128xf32>
    %c128_i32_113 = arith.constant 128 : i32
    %427 = vector.broadcast %c128_i32_113 : i32 to vector<8x128xi32>
    %428 = arith.select %426, %0, %427 : vector<8x128xi1>, vector<8x128xi32>
    %cst_114 = arith.constant dense<2147483647> : vector<8xi32>
    %429 = vector.multi_reduction <minsi>, %428, %cst_114 [1] : vector<8x128xi32> to vector<8xi32>
    %430 = vector.shape_cast %429 : vector<8xi32> to vector<1x8xi32>
    %c7_115 = arith.constant 7 : index
    %c0_116 = arith.constant 0 : index
    %431 = vector.load %arg8[%c7_115, %c0_116] : memref<8x8xi32, #tpu.memory_space<vmem>>, vector<1x8xi32>
    tpu.vector_store %arg8[%c7_115, %c0_116], %430 {strides = array<i32>} : memref<8x8xi32, #tpu.memory_space<vmem>>, vector<1x8xi32>,
    return
  }
}

</mosaic_0001>

<llo_original>
// kernel: tpu_custom_call.1
$region0: #{tpu_custom_call.1}
  #allocation0 [shape = 'u32[]', space=smem, size = 0x4, offset = 0x4, fixed_abs, tag = 'smem constant byte address 0x4 - core index']
  #allocation1 [shape = 'u32[144,128]{1,0:T(1,128)}', space=vmem, size = 0x12000, scoped, tag = 'internal scratch']
  %s0 = inlined_call_operand.hbm [shape: f32[8,8,128], index: 0, kind: input, shape index: {}]
  %s1 = inlined_call_operand.hbm [shape: bf16[128,384], index: 1, kind: input, shape index: {}]
  %s2 = inlined_call_operand.hbm [shape: bf16[128,384], index: 2, kind: input, shape index: {}]
  %s3 = inlined_call_operand.vmem [shape: f32[1,256], index: 3, kind: input, shape index: {}]
  %s4 = inlined_call_operand.vmem [shape: f32[1,128], index: 4, kind: input, shape index: {}]
  %s5 = inlined_call_operand.vmem [shape: f32[1,128], index: 5, kind: input, shape index: {}]
  %s6 = inlined_call_operand.hbm [shape: bf16[128,128], index: 6, kind: input, shape index: {}]
  %s7 = inlined_call_operand.vmem [shape: f32[1,128], index: 7, kind: input, shape index: {}]
  %s8 = inlined_call_operand.hbm [shape: s32[8,8], index: 8, kind: output, shape index: {}]
  %s9 = sld [smem:[#allocation0]]
  $region58: #{tpu_custom_call.1} parent=0
    _
  %s11 = ssub.s32 1, %s9
  %s12 = scalar_select 0, %s11, %s9
  $region1: #{tpu_custom_call.1} parent=0
    #allocation2 [shape = 'u8[32768]{0}', space=vmem, size = 0x8000, scoped, tag = 'input window, operand 0, single buffered']
    #allocation3 [shape = 's32[1]{0}', space=sflag, size = 0x4, scoped, tag = 'scoped memory for tpu_custom_call.1']
    #allocation4 [shape = 's32[1]{0}', space=sflag, size = 0x4, scoped, tag = 'scoped memory for tpu_custom_call.1']
    #allocation5 [shape = 'u8[98304]{0}', space=vmem, size = 0x18000, scoped, tag = 'input window, operand 1, single buffered']
    #allocation6 [shape = 's32[1]{0}', space=sflag, size = 0x4, scoped, tag = 'scoped memory for tpu_custom_call.1']
    #allocation7 [shape = 'u8[98304]{0}', space=vmem, size = 0x18000, scoped, tag = 'input window, operand 2, single buffered']
    #allocation8 [shape = 'u8[32768]{0}', space=vmem, size = 0x8000, scoped, tag = 'input window, operand 6, single buffered']
    #allocation9 [shape = 's32[1]{0}', space=sflag, size = 0x4, scoped, tag = 'scoped memory for tpu_custom_call.1']
    #allocation10 [shape = 'u8[4096]{0}', space=vmem, size = 0x1000, scoped, tag = 'output window, operand 0, single buffered']
    %13 = vsyncpa [#allocation3], 0
    %14 = vsyncpa [#allocation6], 0
    %15 = vsyncpa [#allocation9], 0
    %16 = vsyncpa [#allocation4], 0
    // Predicated region
    $region2: #{tpu_custom_call.1} parent=1 // pred_check
      _
    $region3: #{tpu_custom_call.1} parent=1 // pred_check_branch
      %18 = sbr.rel (0) target = $region5
    $region4: #{tpu_custom_call.1} parent=1 // pred_region
      %s20 = ssub.s32 1024, 1024
      %21 = vsyncadd [#allocation3], %s20
      %s22 = sshll.u32 [#allocation2], 4
      %s23 = int_to_ptr.vmem [resolvable:$true] %s22
      %28 = dma.hbm_to_vmem [thread:$0]  %s0, 1024, %s23, [#allocation3], 128, 128, 8
    $region5: #{tpu_custom_call.1} parent=1 // pred_fallthru
      _
    // Predicated region
    $region6: #{tpu_custom_call.1} parent=1 // pred_check
      _
    $region7: #{tpu_custom_call.1} parent=1 // pred_check_branch
      %30 = sbr.rel (0) target = $region9
    $region8: #{tpu_custom_call.1} parent=1 // pred_region
      %s32 = ssub.s32 3072, 3072
      %33 = vsyncadd [#allocation6], %s32
      %s34 = sshll.u32 [#allocation5], 4
      %s35 = int_to_ptr.vmem [resolvable:$true] %s34
      %40 = dma.hbm_to_vmem [thread:$0]  %s1, 3072, %s35, [#allocation6], 192, 192, 12
    $region9: #{tpu_custom_call.1} parent=1 // pred_fallthru
      _
    // Predicated region
    $region10: #{tpu_custom_call.1} parent=1 // pred_check
      _
    $region11: #{tpu_custom_call.1} parent=1 // pred_check_branch
      %42 = sbr.rel (0) target = $region13
    $region12: #{tpu_custom_call.1} parent=1 // pred_region
      %s44 = ssub.s32 3072, 3072
      %45 = vsyncadd [#allocation6], %s44
      %s46 = sshll.u32 [#allocation7], 4
      %s47 = int_to_ptr.vmem [resolvable:$true] %s46
      %52 = dma.hbm_to_vmem [thread:$0]  %s2, 3072, %s47, [#allocation6], 192, 192, 12
    $region13: #{tpu_custom_call.1} parent=1 // pred_fallthru
      _
    // Predicated region
    $region14: #{tpu_custom_call.1} parent=1 // pred_check
      _
    $region15: #{tpu_custom_call.1} parent=1 // pred_check_branch
      %54 = sbr.rel (0) target = $region17
    $region16: #{tpu_custom_call.1} parent=1 // pred_region
      _
    $region17: #{tpu_custom_call.1} parent=1 // pred_fallthru
      _
    // Predicated region
    $region18: #{tpu_custom_call.1} parent=1 // pred_check
      _
    $region19: #{tpu_custom_call.1} parent=1 // pred_check_branch
      %56 = sbr.rel (0) target = $region21
    $region20: #{tpu_custom_call.1} parent=1 // pred_region
      _
    $region21: #{tpu_custom_call.1} parent=1 // pred_fallthru
      _
    // Predicated region
    $region22: #{tpu_custom_call.1} parent=1 // pred_check
      _
    $region23: #{tpu_custom_call.1} parent=1 // pred_check_branch
      %58 = sbr.rel (0) target = $region25
    $region24: #{tpu_custom_call.1} parent=1 // pred_region
      _
    $region25: #{tpu_custom_call.1} parent=1 // pred_fallthru
      _
    // Predicated region
    $region26: #{tpu_custom_call.1} parent=1 // pred_check
      _
    $region27: #{tpu_custom_call.1} parent=1 // pred_check_branch
      %60 = sbr.rel (0) target = $region29
    $region28: #{tpu_custom_call.1} parent=1 // pred_region
      %s62 = ssub.s32 1024, 1024
      %63 = vsyncadd [#allocation9], %s62
      %s64 = sshll.u32 [#allocation8], 4
      %s65 = int_to_ptr.vmem [resolvable:$true] %s64
      %70 = dma.hbm_to_vmem [thread:$0]  %s6, 1024, %s65, [#allocation9], 64, 64, 4
    $region29: #{tpu_custom_call.1} parent=1 // pred_fallthru
      _
    // Predicated region
    $region30: #{tpu_custom_call.1} parent=1 // pred_check
      _
    $region31: #{tpu_custom_call.1} parent=1 // pred_check_branch
      %72 = sbr.rel (0) target = $region33
    $region32: #{tpu_custom_call.1} parent=1 // pred_region
      _
    $region33: #{tpu_custom_call.1} parent=1 // pred_fallthru
      _
    // Predicated region
    $region34: #{tpu_custom_call.1} parent=1 // pred_check
      _
    $region35: #{tpu_custom_call.1} parent=1 // pred_check_branch
      %74 = sbr.rel (0) target = $region37
    $region36: #{tpu_custom_call.1} parent=1 // pred_region
      %75 = dma.done [#allocation3], 1024
    $region37: #{tpu_custom_call.1} parent=1 // pred_fallthru
      _
    // Predicated region
    $region38: #{tpu_custom_call.1} parent=1 // pred_check
      _
    $region39: #{tpu_custom_call.1} parent=1 // pred_check_branch
      %77 = sbr.rel (0) target = $region41
    $region40: #{tpu_custom_call.1} parent=1 // pred_region
      %78 = dma.done [#allocation6], 3072
    $region41: #{tpu_custom_call.1} parent=1 // pred_fallthru
      _
    // Predicated region
    $region42: #{tpu_custom_call.1} parent=1 // pred_check
      _
    $region43: #{tpu_custom_call.1} parent=1 // pred_check_branch
      %80 = sbr.rel (0) target = $region45
    $region44: #{tpu_custom_call.1} parent=1 // pred_region
      %81 = dma.done [#allocation6], 3072
    $region45: #{tpu_custom_call.1} parent=1 // pred_fallthru
      _
    // Predicated region
    $region46: #{tpu_custom_call.1} parent=1 // pred_check
      _
    $region47: #{tpu_custom_call.1} parent=1 // pred_check_branch
      %83 = sbr.rel (0) target = $region49
    $region48: #{tpu_custom_call.1} parent=1 // pred_region
      %84 = dma.done [#allocation9], 1024
    $region49: #{tpu_custom_call.1} parent=1 // pred_fallthru
      _
    %v86 = vlaneseq
    %v87 = vand.u32 %v86, 127
    %v88 = vld [vmem:[#allocation5] sm:$0xff]
    %v89 = vld [vmem:[#allocation5 + $0x8] sm:$0xf]
    %v90 = vld [vmem:[#allocation5 + $0xc] sm:$0xff]
    %v91 = vld [vmem:[#allocation5 + $0x14] sm:$0xf]
    %v92 = vld [vmem:[#allocation5 + $0x18] sm:$0xff]
    %v93 = vld [vmem:[#allocation5 + $0x20] sm:$0xf]
    %v94 = vld [vmem:[#allocation5 + $0x24] sm:$0xff]
    %v95 = vld [vmem:[#allocation5 + $0x2c] sm:$0xf]
    %v96 = vld [vmem:[#allocation5 + $0x30] sm:$0xff]
    %v97 = vld [vmem:[#allocation5 + $0x38] sm:$0xf]
    %v98 = vld [vmem:[#allocation5 + $0x3c] sm:$0xff]
    %v99 = vld [vmem:[#allocation5 + $0x44] sm:$0xf]
    %v100 = vld [vmem:[#allocation5 + $0x48] sm:$0xff]
    %v101 = vld [vmem:[#allocation5 + $0x50] sm:$0xf]
    %v102 = vld [vmem:[#allocation5 + $0x54] sm:$0xff]
    %v103 = vld [vmem:[#allocation5 + $0x5c] sm:$0xf]
    %v104 = vld [vmem:[#allocation5 + $0x60] sm:$0xff]
    %v105 = vld [vmem:[#allocation5 + $0x68] sm:$0xf]
    %v106 = vld [vmem:[#allocation5 + $0x6c] sm:$0xff]
    %v107 = vld [vmem:[#allocation5 + $0x74] sm:$0xf]
    %v108 = vld [vmem:[#allocation5 + $0x78] sm:$0xff]
    %v109 = vld [vmem:[#allocation5 + $0x80] sm:$0xf]
    %v110 = vld [vmem:[#allocation5 + $0x84] sm:$0xff]
    %v111 = vld [vmem:[#allocation5 + $0x8c] sm:$0xf]
    %v112 = vld [vmem:[#allocation5 + $0x90] sm:$0xff]
    %v113 = vld [vmem:[#allocation5 + $0x98] sm:$0xf]
    %v114 = vld [vmem:[#allocation5 + $0x9c] sm:$0xff]
    %v115 = vld [vmem:[#allocation5 + $0xa4] sm:$0xf]
    %v116 = vld [vmem:[#allocation5 + $0xa8] sm:$0xff]
    %v117 = vld [vmem:[#allocation5 + $0xb0] sm:$0xf]
    %v118 = vld [vmem:[#allocation5 + $0xb4] sm:$0xff]
    %v119 = vld [vmem:[#allocation5 + $0xbc] sm:$0xf]
    %v120 = vld [vmem:[#allocation7] sm:$0xff]
    %v121 = vld [vmem:[#allocation7 + $0x8] sm:$0xf]
    %v122 = vld [vmem:[#allocation7 + $0xc] sm:$0xff]
    %v123 = vld [vmem:[#allocation7 + $0x14] sm:$0xf]
    %v124 = vld [vmem:[#allocation7 + $0x18] sm:$0xff]
    %v125 = vld [vmem:[#allocation7 + $0x20] sm:$0xf]
    %v126 = vld [vmem:[#allocation7 + $0x24] sm:$0xff]
    %v127 = vld [vmem:[#allocation7 + $0x2c] sm:$0xf]
    %v128 = vld [vmem:[#allocation7 + $0x30] sm:$0xff]
    %v129 = vld [vmem:[#allocation7 + $0x38] sm:$0xf]
    %v130 = vld [vmem:[#allocation7 + $0x3c] sm:$0xff]
    %v131 = vld [vmem:[#allocation7 + $0x44] sm:$0xf]
    %v132 = vld [vmem:[#allocation7 + $0x48] sm:$0xff]
    %v133 = vld [vmem:[#allocation7 + $0x50] sm:$0xf]
    %v134 = vld [vmem:[#allocation7 + $0x54] sm:$0xff]
    %v135 = vld [vmem:[#allocation7 + $0x5c] sm:$0xf]
    %v136 = vld [vmem:[#allocation7 + $0x60] sm:$0xff]
    %v137 = vld [vmem:[#allocation7 + $0x68] sm:$0xf]
    %v138 = vld [vmem:[#allocation7 + $0x6c] sm:$0xff]
    %v139 = vld [vmem:[#allocation7 + $0x74] sm:$0xf]
    %v140 = vld [vmem:[#allocation7 + $0x78] sm:$0xff]
    %v141 = vld [vmem:[#allocation7 + $0x80] sm:$0xf]
    %v142 = vld [vmem:[#allocation7 + $0x84] sm:$0xff]
    %v143 = vld [vmem:[#allocation7 + $0x8c] sm:$0xf]
    %v144 = vld [vmem:[#allocation7 + $0x90] sm:$0xff]
    %v145 = vld [vmem:[#allocation7 + $0x98] sm:$0xf]
    %v146 = vld [vmem:[#allocation7 + $0x9c] sm:$0xff]
    %v147 = vld [vmem:[#allocation7 + $0xa4] sm:$0xf]
    %v148 = vld [vmem:[#allocation7 + $0xa8] sm:$0xff]
    %v149 = vld [vmem:[#allocation7 + $0xb0] sm:$0xf]
    %v150 = vld [vmem:[#allocation7 + $0xb4] sm:$0xff]
    %v151 = vld [vmem:[#allocation7 + $0xbc] sm:$0xf]
    %v152 = vld [vmem:[#allocation8] sm:$0xf]
    %v153 = vld [vmem:[#allocation8 + $0x4] sm:$0xf]
    %v154 = vld [vmem:[#allocation8 + $0x8] sm:$0xf]
    %v155 = vld [vmem:[#allocation8 + $0xc] sm:$0xf]
    %v156 = vld [vmem:[#allocation8 + $0x10] sm:$0xf]
    %v157 = vld [vmem:[#allocation8 + $0x14] sm:$0xf]
    %v158 = vld [vmem:[#allocation8 + $0x18] sm:$0xf]
    %v159 = vld [vmem:[#allocation8 + $0x1c] sm:$0xf]
    %v160 = vld [vmem:[#allocation8 + $0x20] sm:$0xf]
    %v161 = vld [vmem:[#allocation8 + $0x24] sm:$0xf]
    %v162 = vld [vmem:[#allocation8 + $0x28] sm:$0xf]
    %v163 = vld [vmem:[#allocation8 + $0x2c] sm:$0xf]
    %v164 = vld [vmem:[#allocation8 + $0x30] sm:$0xf]
    %v165 = vld [vmem:[#allocation8 + $0x34] sm:$0xf]
    %v166 = vld [vmem:[#allocation8 + $0x38] sm:$0xf]
    %v167 = vld [vmem:[#allocation8 + $0x3c] sm:$0xf]
    %v168 = vld [vmem:[%s3] sm:$0x3]
    %v169 = vld [vmem:[%s4] sm:$0x1]
    %v170 = vld [vmem:[%s5] sm:$0x1]
    %v171 = vld [vmem:[%s7] sm:$0x1]
    %vm172 = vcmp.eq.s32.totalorder %v87, 1
    %v173 = vsel %vm172, 1, 0
    %v174 = vcvt.s32.f32 %v173
    %v175 = vpack.c.bf16 %v174, %v174
    %v208 = vunpack.c.l.b16 %v88
    %v209 = vunpack.c.h.b16 %v88
    %v210 = vunpack.c.l.b16 %v89
    %v211 = vunpack.c.l.b16 %v90
    %v212 = vunpack.c.h.b16 %v90
    %v213 = vunpack.c.l.b16 %v91
    %v214 = vunpack.c.l.b16 %v92
    %v215 = vunpack.c.h.b16 %v92
    %v216 = vunpack.c.l.b16 %v93
    %v217 = vunpack.c.l.b16 %v94
    %v218 = vunpack.c.h.b16 %v94
    %v219 = vunpack.c.l.b16 %v95
    %v220 = vunpack.c.l.b16 %v96
    %v221 = vunpack.c.h.b16 %v96
    %v222 = vunpack.c.l.b16 %v97
    %v223 = vunpack.c.l.b16 %v98
    %v224 = vunpack.c.h.b16 %v98
    %v225 = vunpack.c.l.b16 %v99
    %v226 = vunpack.c.l.b16 %v100
    %v227 = vunpack.c.h.b16 %v100
    %v228 = vunpack.c.l.b16 %v101
    %v229 = vunpack.c.l.b16 %v102
    %v230 = vunpack.c.h.b16 %v102
    %v231 = vunpack.c.l.b16 %v103
    %v232 = vunpack.c.l.b16 %v104
    %v233 = vunpack.c.h.b16 %v104
    %v234 = vunpack.c.l.b16 %v105
    %v235 = vunpack.c.l.b16 %v106
    %v236 = vunpack.c.h.b16 %v106
    %v237 = vunpack.c.l.b16 %v107
    %v238 = vunpack.c.l.b16 %v108
    %v239 = vunpack.c.h.b16 %v108
    %v240 = vunpack.c.l.b16 %v109
    %v241 = vunpack.c.l.b16 %v110
    %v242 = vunpack.c.h.b16 %v110
    %v243 = vunpack.c.l.b16 %v111
    %v244 = vunpack.c.l.b16 %v112
    %v245 = vunpack.c.h.b16 %v112
    %v246 = vunpack.c.l.b16 %v113
    %v247 = vunpack.c.l.b16 %v114
    %v248 = vunpack.c.h.b16 %v114
    %v249 = vunpack.c.l.b16 %v115
    %v250 = vunpack.c.l.b16 %v116
    %v251 = vunpack.c.h.b16 %v116
    %v252 = vunpack.c.l.b16 %v117
    %v253 = vunpack.c.l.b16 %v118
    %v254 = vunpack.c.h.b16 %v118
    %v255 = vunpack.c.l.b16 %v119
    %v256 = vpack.c.b16 %v211, %v208
    %v257 = vpack.c.b16 %v212, %v209
    %v258 = vpack.c.b16 %v213, %v210
    %v259 = vpack.c.b16 %v217, %v214
    %v260 = vpack.c.b16 %v218, %v215
    %v261 = vpack.c.b16 %v219, %v216
    %v262 = vpack.c.b16 %v223, %v220
    %v263 = vpack.c.b16 %v224, %v221
    %v264 = vpack.c.b16 %v225, %v222
    %v265 = vpack.c.b16 %v229, %v226
    %v266 = vpack.c.b16 %v230, %v227
    %v267 = vpack.c.b16 %v231, %v228
    %v268 = vpack.c.b16 %v235, %v232
    %v269 = vpack.c.b16 %v236, %v233
    %v270 = vpack.c.b16 %v237, %v234
    %v271 = vpack.c.b16 %v241, %v238
    %v272 = vpack.c.b16 %v242, %v239
    %v273 = vpack.c.b16 %v243, %v240
    %v274 = vpack.c.b16 %v247, %v244
    %v275 = vpack.c.b16 %v248, %v245
    %v276 = vpack.c.b16 %v249, %v246
    %v277 = vpack.c.b16 %v253, %v250
    %v278 = vpack.c.b16 %v254, %v251
    %v279 = vpack.c.b16 %v255, %v252
    %304 = vmatprep.subr.bf16.mxu0 %v278
    %305 = vmatpush1.bf16.msra.mxu0 %v277
    %306 = vmatprep.subr.bf16.mxu0 %v275
    %307 = vmatpush1.bf16.msra.mxu0 %v274
    %308 = vmatprep.subr.bf16.mxu0 %v272
    %309 = vmatpush1.bf16.msra.mxu0 %v271
    %310 = vmatprep.subr.bf16.mxu0 %v269
    %311 = vmatpush1.bf16.msra.mxu0 %v268
    %312 = vmatprep.subr.bf16.mxu0 %v266
    %313 = vmatpush1.bf16.msra.mxu0 %v265
    %314 = vmatprep.subr.bf16.mxu0 %v263
    %315 = vmatpush1.bf16.msra.mxu0 %v262
    %316 = vmatprep.subr.bf16.mxu0 %v260
    %317 = vmatpush1.bf16.msra.mxu0 %v259
    %318 = vmatprep.subr.bf16.mxu0 %v257
    %319 = vmatpush1.bf16.msra.mxu0 %v256
    %320 = vmatprep.subr.bf16.mxu0 0
    %321 = vmatpush2.bf16.msra.mxu0 0
    %322 = vmatprep.subr.bf16.mxu0 0
    %323 = vmatpush2.bf16.msra.mxu0 0
    %324 = vmatprep.subr.bf16.mxu0 0
    %325 = vmatpush2.bf16.msra.mxu0 0
    %326 = vmatprep.subr.bf16.mxu0 0
    %327 = vmatpush2.bf16.msra.mxu0 0
    %328 = vmatprep.subr.bf16.mxu0 0
    %329 = vmatpush2.bf16.msra.mxu0 0
    %330 = vmatprep.subr.bf16.mxu0 0
    %331 = vmatpush2.bf16.msra.mxu0 0
    %332 = vmatprep.subr.bf16.mxu0 0
    %333 = vmatpush2.bf16.msra.mxu0 0
    %334 = vmatprep.subr.bf16.mxu0 0
    %335 = vmatpush2.bf16.msra.mxu0 0
    %336 = vmatprep.mubr.bf16.mxu0 0
    %337 = vmatmul.mubr.bf16.gmra.mxu0 %v175
    %v338 = vpop.f32.mrf.mxu0
    %v339 = vadd.f32 0.0, %v338
    %v340 = vpop.f32.mrf.mxu0
    %v341 = vadd.f32 0.0, %v340
    %v342 = vpop.f32.mrf.mxu0
    %v343 = vpop.f32.mrf.mxu0
    %344 = vdwg.mxu0
    %345 = vmatprep.subr.bf16.mxu0 0
    %346 = vmatpush1.bf16.msra.mxu0 %v279
    %347 = vmatprep.subr.bf16.mxu0 0
    %348 = vmatpush1.bf16.msra.mxu0 %v276
    %349 = vmatprep.subr.bf16.mxu0 0
    %350 = vmatpush1.bf16.msra.mxu0 %v273
    %351 = vmatprep.subr.bf16.mxu0 0
    %352 = vmatpush1.bf16.msra.mxu0 %v270
    %353 = vmatprep.subr.bf16.mxu0 0
    %354 = vmatpush1.bf16.msra.mxu0 %v267
    %355 = vmatprep.subr.bf16.mxu0 0
    %356 = vmatpush1.bf16.msra.mxu0 %v264
    %357 = vmatprep.subr.bf16.mxu0 0
    %358 = vmatpush1.bf16.msra.mxu0 %v261
    %359 = vmatprep.subr.bf16.mxu0 0
    %360 = vmatpush1.bf16.msra.mxu0 %v258
    %361 = vmatprep.subr.bf16.mxu0 0
    %362 = vmatpush2.bf16.msra.mxu0 0
    %363 = vmatprep.subr.bf16.mxu0 0
    %364 = vmatpush2.bf16.msra.mxu0 0
    %365 = vmatprep.subr.bf16.mxu0 0
    %366 = vmatpush2.bf16.msra.mxu0 0
    %367 = vmatprep.subr.bf16.mxu0 0
    %368 = vmatpush2.bf16.msra.mxu0 0
    %369 = vmatprep.subr.bf16.mxu0 0
    %370 = vmatpush2.bf16.msra.mxu0 0
    %371 = vmatprep.subr.bf16.mxu0 0
    %372 = vmatpush2.bf16.msra.mxu0 0
    %373 = vmatprep.subr.bf16.mxu0 0
    %374 = vmatpush2.bf16.msra.mxu0 0
    %375 = vmatprep.subr.bf16.mxu0 0
    %376 = vmatpush2.bf16.msra.mxu0 0
    %377 = vmatprep.mubr.bf16.mxu0 0
    %378 = vmatmul.mubr.bf16.gmra.mxu0 %v175
    %v379 = vpop.f32.mrf.mxu0
    %v380 = vadd.f32 0.0, %v379
    %v381 = vpop.f32.mrf.mxu0
    %v382 = vpop.f32.mrf.mxu0
    %v383 = vpop.f32.mrf.mxu0
    %384 = vdwg.mxu0
    %v417 = vunpack.c.l.b16 %v120
    %v418 = vunpack.c.h.b16 %v120
    %v419 = vunpack.c.l.b16 %v121
    %v420 = vunpack.c.l.b16 %v122
    %v421 = vunpack.c.h.b16 %v122
    %v422 = vunpack.c.l.b16 %v123
    %v423 = vunpack.c.l.b16 %v124
    %v424 = vunpack.c.h.b16 %v124
    %v425 = vunpack.c.l.b16 %v125
    %v426 = vunpack.c.l.b16 %v126
    %v427 = vunpack.c.h.b16 %v126
    %v428 = vunpack.c.l.b16 %v127
    %v429 = vunpack.c.l.b16 %v128
    %v430 = vunpack.c.h.b16 %v128
    %v431 = vunpack.c.l.b16 %v129
    %v432 = vunpack.c.l.b16 %v130
    %v433 = vunpack.c.h.b16 %v130
    %v434 = vunpack.c.l.b16 %v131
    %v435 = vunpack.c.l.b16 %v132
    %v436 = vunpack.c.h.b16 %v132
    %v437 = vunpack.c.l.b16 %v133
    %v438 = vunpack.c.l.b16 %v134
    %v439 = vunpack.c.h.b16 %v134
    %v440 = vunpack.c.l.b16 %v135
    %v441 = vunpack.c.l.b16 %v136
    %v442 = vunpack.c.h.b16 %v136
    %v443 = vunpack.c.l.b16 %v137
    %v444 = vunpack.c.l.b16 %v138
    %v445 = vunpack.c.h.b16 %v138
    %v446 = vunpack.c.l.b16 %v139
    %v447 = vunpack.c.l.b16 %v140
    %v448 = vunpack.c.h.b16 %v140
    %v449 = vunpack.c.l.b16 %v141
    %v450 = vunpack.c.l.b16 %v142
    %v451 = vunpack.c.h.b16 %v142
    %v452 = vunpack.c.l.b16 %v143
    %v453 = vunpack.c.l.b16 %v144
    %v454 = vunpack.c.h.b16 %v144
    %v455 = vunpack.c.l.b16 %v145
    %v456 = vunpack.c.l.b16 %v146
    %v457 = vunpack.c.h.b16 %v146
    %v458 = vunpack.c.l.b16 %v147
    %v459 = vunpack.c.l.b16 %v148
    %v460 = vunpack.c.h.b16 %v148
    %v461 = vunpack.c.l.b16 %v149
    %v462 = vunpack.c.l.b16 %v150
    %v463 = vunpack.c.h.b16 %v150
    %v464 = vunpack.c.l.b16 %v151
    %v465 = vpack.c.b16 %v420, %v417
    %v466 = vpack.c.b16 %v421, %v418
    %v467 = vpack.c.b16 %v422, %v419
    %v468 = vpack.c.b16 %v426, %v423
    %v469 = vpack.c.b16 %v427, %v424
    %v470 = vpack.c.b16 %v428, %v425
    %v471 = vpack.c.b16 %v432, %v429
    %v472 = vpack.c.b16 %v433, %v430
    %v473 = vpack.c.b16 %v434, %v431
    %v474 = vpack.c.b16 %v438, %v435
    %v475 = vpack.c.b16 %v439, %v436
    %v476 = vpack.c.b16 %v440, %v437
    %v477 = vpack.c.b16 %v444, %v441
    %v478 = vpack.c.b16 %v445, %v442
    %v479 = vpack.c.b16 %v446, %v443
    %v480 = vpack.c.b16 %v450, %v447
    %v481 = vpack.c.b16 %v451, %v448
    %v482 = vpack.c.b16 %v452, %v449
    %v483 = vpack.c.b16 %v456, %v453
    %v484 = vpack.c.b16 %v457, %v454
    %v485 = vpack.c.b16 %v458, %v455
    %v486 = vpack.c.b16 %v462, %v459
    %v487 = vpack.c.b16 %v463, %v460
    %v488 = vpack.c.b16 %v464, %v461
    %513 = vmatprep.subr.bf16.mxu0 %v487
    %514 = vmatpush1.bf16.msra.mxu0 %v486
    %515 = vmatprep.subr.bf16.mxu0 %v484
    %516 = vmatpush1.bf16.msra.mxu0 %v483
    %517 = vmatprep.subr.bf16.mxu0 %v481
    %518 = vmatpush1.bf16.msra.mxu0 %v480
    %519 = vmatprep.subr.bf16.mxu0 %v478
    %520 = vmatpush1.bf16.msra.mxu0 %v477
    %521 = vmatprep.subr.bf16.mxu0 %v475
    %522 = vmatpush1.bf16.msra.mxu0 %v474
    %523 = vmatprep.subr.bf16.mxu0 %v472
    %524 = vmatpush1.bf16.msra.mxu0 %v471
    %525 = vmatprep.subr.bf16.mxu0 %v469
    %526 = vmatpush1.bf16.msra.mxu0 %v468
    %527 = vmatprep.subr.bf16.mxu0 %v466
    %528 = vmatpush1.bf16.msra.mxu0 %v465
    %529 = vmatprep.subr.bf16.mxu0 0
    %530 = vmatpush2.bf16.msra.mxu0 0
    %531 = vmatprep.subr.bf16.mxu0 0
    %532 = vmatpush2.bf16.msra.mxu0 0
    %533 = vmatprep.subr.bf16.mxu0 0
    %534 = vmatpush2.bf16.msra.mxu0 0
    %535 = vmatprep.subr.bf16.mxu0 0
    %536 = vmatpush2.bf16.msra.mxu0 0
    %537 = vmatprep.subr.bf16.mxu0 0
    %538 = vmatpush2.bf16.msra.mxu0 0
    %539 = vmatprep.subr.bf16.mxu0 0
    %540 = vmatpush2.bf16.msra.mxu0 0
    %541 = vmatprep.subr.bf16.mxu0 0
    %542 = vmatpush2.bf16.msra.mxu0 0
    %543 = vmatprep.subr.bf16.mxu0 0
    %544 = vmatpush2.bf16.msra.mxu0 0
    %545 = vmatprep.mubr.bf16.mxu0 0
    %546 = vmatmul.mubr.bf16.gmra.mxu0 0
    %v547 = vpop.f32.mrf.mxu0
    %v548 = vadd.f32 0.0, %v547
    %v549 = vpop.f32.mrf.mxu0
    %v550 = vadd.f32 0.0, %v549
    %v551 = vpop.f32.mrf.mxu0
    %v552 = vpop.f32.mrf.mxu0
    %553 = vdwg.mxu0
    %554 = vmatprep.subr.bf16.mxu0 0
    %555 = vmatpush1.bf16.msra.mxu0 %v488
    %556 = vmatprep.subr.bf16.mxu0 0
    %557 = vmatpush1.bf16.msra.mxu0 %v485
    %558 = vmatprep.subr.bf16.mxu0 0
    %559 = vmatpush1.bf16.msra.mxu0 %v482
    %560 = vmatprep.subr.bf16.mxu0 0
    %561 = vmatpush1.bf16.msra.mxu0 %v479
    %562 = vmatprep.subr.bf16.mxu0 0
    %563 = vmatpush1.bf16.msra.mxu0 %v476
    %564 = vmatprep.subr.bf16.mxu0 0
    %565 = vmatpush1.bf16.msra.mxu0 %v473
    %566 = vmatprep.subr.bf16.mxu0 0
    %567 = vmatpush1.bf16.msra.mxu0 %v470
    %568 = vmatprep.subr.bf16.mxu0 0
    %569 = vmatpush1.bf16.msra.mxu0 %v467
    %570 = vmatprep.subr.bf16.mxu0 0
    %571 = vmatpush2.bf16.msra.mxu0 0
    %572 = vmatprep.subr.bf16.mxu0 0
    %573 = vmatpush2.bf16.msra.mxu0 0
    %574 = vmatprep.subr.bf16.mxu0 0
    %575 = vmatpush2.bf16.msra.mxu0 0
    %576 = vmatprep.subr.bf16.mxu0 0
    %577 = vmatpush2.bf16.msra.mxu0 0
    %578 = vmatprep.subr.bf16.mxu0 0
    %579 = vmatpush2.bf16.msra.mxu0 0
    %580 = vmatprep.subr.bf16.mxu0 0
    %581 = vmatpush2.bf16.msra.mxu0 0
    %582 = vmatprep.subr.bf16.mxu0 0
    %583 = vmatpush2.bf16.msra.mxu0 0
    %584 = vmatprep.subr.bf16.mxu0 0
    %585 = vmatpush2.bf16.msra.mxu0 0
    %586 = vmatprep.mubr.bf16.mxu0 0
    %587 = vmatmul.mubr.bf16.gmra.mxu0 0
    %v588 = vpop.f32.mrf.mxu0
    %v589 = vadd.f32 0.0, %v588
    %v590 = vpop.f32.mrf.mxu0
    %v591 = vpop.f32.mrf.mxu0
    %v592 = vpop.f32.mrf.mxu0
    %593 = vdwg.mxu0
    %v594 = vadd.f32 %v339, %v548
    %v595 = vadd.f32 %v341, %v550
    %v597 = vlaneseq
    %v598 = vshrl.u32 %v597, 7
    %v599 = vsub.s32 0, %v598
    %v600 = vrot.slane %v168, %v599
    %v601 = vlaneseq
    %v602 = vshrl.u32 %v601, 7
    %v603 = vsub.s32 1, %v602
    %v604 = vrot.slane %v168, %v603
    %v607 = vadd.f32 %v594, %v600
    %v608 = vadd.f32 %v595, %v604
    %v609 = vxor.u32 %v607, 2147483648
    %v610 = vxor.u32 %v608, 2147483648
    %v611 = vmul.f32 %v609, 1.442695
    %v612 = vpow.pop %v611
    %v613 = vmul.f32 %v610, 1.442695
    %v614 = vpow.pop %v613
    %v615 = vadd.f32 %v612, 1.0
    %v616 = vadd.f32 %v614, 1.0
    %v617 = vrcp.pop %v615
    %v618 = vmul.f32 1.0, %v617
    %v619 = vrcp.pop %v616
    %v620 = vmul.f32 1.0, %v619
    %v622 = vlaneseq
    %v623 = vshrl.u32 %v622, 7
    %v624 = vsub.s32 0, %v623
    %v625 = vrot.slane %v169, %v624
    %v627 = vadd.f32 %v380, %v625
    %v629 = vlaneseq
    %v630 = vshrl.u32 %v629, 7
    %v631 = vsub.s32 0, %v630
    %v632 = vrot.slane %v170, %v631
    %v634 = vadd.f32 %v589, %v632
    %v635 = vmul.f32 %v618, %v634
    %v636 = vadd.f32 %v627, %v635
    %v637 = vtanh.pop %v636
    %v638 = vsub.f32 1.0, %v620
    %v639 = vmul.f32 %v638, %v637
    %v640 = vmul.f32 %v620, 0.0
    %v641 = vadd.f32 %v639, %v640
    %v642 = vpack.c.bf16 %v641, %v641
    %v644 = vlaneseq
    %v645 = vshrl.u32 %v644, 7
    %v646 = vsub.s32 0, %v645
    %v647 = vrot.slane %v171, %v646
    %v665 = vunpack.c.l.b16 %v152
    %v666 = vunpack.c.l.b16 %v153
    %v667 = vunpack.c.l.b16 %v154
    %v668 = vunpack.c.l.b16 %v155
    %v669 = vunpack.c.l.b16 %v156
    %v670 = vunpack.c.l.b16 %v157
    %v671 = vunpack.c.l.b16 %v158
    %v672 = vunpack.c.l.b16 %v159
    %v673 = vunpack.c.l.b16 %v160
    %v674 = vunpack.c.l.b16 %v161
    %v675 = vunpack.c.l.b16 %v162
    %v676 = vunpack.c.l.b16 %v163
    %v677 = vunpack.c.l.b16 %v164
    %v678 = vunpack.c.l.b16 %v165
    %v679 = vunpack.c.l.b16 %v166
    %v680 = vunpack.c.l.b16 %v167
    %v681 = vpack.c.b16 %v666, %v665
    %v682 = vpack.c.b16 %v668, %v667
    %v683 = vpack.c.b16 %v670, %v669
    %v684 = vpack.c.b16 %v672, %v671
    %v685 = vpack.c.b16 %v674, %v673
    %v686 = vpack.c.b16 %v676, %v675
    %v687 = vpack.c.b16 %v678, %v677
    %v688 = vpack.c.b16 %v680, %v679
    %697 = vmatprep.subr.bf16.mxu0 0
    %698 = vmatpush1.bf16.msra.mxu0 %v688
    %699 = vmatprep.subr.bf16.mxu0 0
    %700 = vmatpush1.bf16.msra.mxu0 %v687
    %701 = vmatprep.subr.bf16.mxu0 0
    %702 = vmatpush1.bf16.msra.mxu0 %v686
    %703 = vmatprep.subr.bf16.mxu0 0
    %704 = vmatpush1.bf16.msra.mxu0 %v685
    %705 = vmatprep.subr.bf16.mxu0 0
    %706 = vmatpush1.bf16.msra.mxu0 %v684
    %707 = vmatprep.subr.bf16.mxu0 0
    %708 = vmatpush1.bf16.msra.mxu0 %v683
    %709 = vmatprep.subr.bf16.mxu0 0
    %710 = vmatpush1.bf16.msra.mxu0 %v682
    %711 = vmatprep.subr.bf16.mxu0 0
    %712 = vmatpush1.bf16.msra.mxu0 %v681
    %713 = vmatprep.subr.bf16.mxu0 0
    %714 = vmatpush2.bf16.msra.mxu0 0
    %715 = vmatprep.subr.bf16.mxu0 0
    %716 = vmatpush2.bf16.msra.mxu0 0
    %717 = vmatprep.subr.bf16.mxu0 0
    %718 = vmatpush2.bf16.msra.mxu0 0
    %719 = vmatprep.subr.bf16.mxu0 0
    %720 = vmatpush2.bf16.msra.mxu0 0
    %721 = vmatprep.subr.bf16.mxu0 0
    %722 = vmatpush2.bf16.msra.mxu0 0
    %723 = vmatprep.subr.bf16.mxu0 0
    %724 = vmatpush2.bf16.msra.mxu0 0
    %725 = vmatprep.subr.bf16.mxu0 0
    %726 = vmatpush2.bf16.msra.mxu0 0
    %727 = vmatprep.subr.bf16.mxu0 0
    %728 = vmatpush2.bf16.msra.mxu0 0
    %729 = vmatprep.mubr.bf16.mxu0 0
    %730 = vmatmul.mubr.bf16.gmra.mxu0 %v642
    %v731 = vpop.f32.mrf.mxu0
    %v732 = vadd.f32 %v647, %v731
    %v733 = vpop.f32.mrf.mxu0
    %v734 = vpop.f32.mrf.mxu0
    %v735 = vpop.f32.mrf.mxu0
    %736 = vdwg.mxu0
    %v737 = vld [vmem:[#allocation2] sm:$0xff]
    %v738 = vadd.f32 %v732, %v737
    %739 = vmax.xlane.f32.xlu0 %v738
    %v740 = vpop.xlane.xlu0 %739
    %vm741 = vcmp.eq.f32.partialorder %v738, %v740
    %v742 = vsel %vm741, %v87, 128
    %v743 = vand.u32 %v742, 65535
    %v744 = vshra.s32 %v742, 16
    %v745 = vcvt.s32.f32 %v743
    %v746 = vcvt.s32.f32 %v744
    %747 = vmin.xlane.f32.xlu0 %v746
    %v748 = vpop.xlane.xlu0 %747
    %vm749 = vcmp.eq.f32.partialorder %v746, %v748
    %v750 = vsel %vm749, %v745, inf
    %751 = vmin.xlane.f32.xlu0 %v750
    %v752 = vpop.xlane.xlu0 %751
    %v753 = vcvt.f32.s32 %v752
    %v754 = vcvt.f32.s32 %v748
    %v755 = vshll.u32 %v754, 16
    %v756 = vadd.s32 %v755, %v753
    %vm757 = vcmp.eq.s32.totalorder %v87, %v756
    %v758 = vsel %vm757, 1, 0
    %v759 = vcvt.s32.f32 %v758
    %v760 = vpack.c.bf16 %v759, %v759
    %v761 = vlaneseq
    %v762 = vshrl.u32 %v761, 7
    %v763 = vsub.s32 %v87, %v762
    %v764 = vrot.slane %v756, %v763
    %vm765 = vcmask 57344
    %766 = vst.msk [vmem:[#allocation10] sm:$0x1] %vm765, %v764
    %767 = vmatprep.subr.bf16.mxu0 %v278
    %768 = vmatpush1.bf16.msra.mxu0 %v277
    %769 = vmatprep.subr.bf16.mxu0 %v275
    %770 = vmatpush1.bf16.msra.mxu0 %v274
    %771 = vmatprep.subr.bf16.mxu0 %v272
    %772 = vmatpush1.bf16.msra.mxu0 %v271
    %773 = vmatprep.subr.bf16.mxu0 %v269
    %774 = vmatpush1.bf16.msra.mxu0 %v268
    %775 = vmatprep.subr.bf16.mxu0 %v266
    %776 = vmatpush1.bf16.msra.mxu0 %v265
    %777 = vmatprep.subr.bf16.mxu0 %v263
    %778 = vmatpush1.bf16.msra.mxu0 %v262
    %779 = vmatprep.subr.bf16.mxu0 %v260
    %780 = vmatpush1.bf16.msra.mxu0 %v259
    %781 = vmatprep.subr.bf16.mxu0 %v257
    %782 = vmatpush1.bf16.msra.mxu0 %v256
    %783 = vmatprep.subr.bf16.mxu0 0
    %784 = vmatpush2.bf16.msra.mxu0 0
    %785 = vmatprep.subr.bf16.mxu0 0
    %786 = vmatpush2.bf16.msra.mxu0 0
    %787 = vmatprep.subr.bf16.mxu0 0
    %788 = vmatpush2.bf16.msra.mxu0 0
    %789 = vmatprep.subr.bf16.mxu0 0
    %790 = vmatpush2.bf16.msra.mxu0 0
    %791 = vmatprep.subr.bf16.mxu0 0
    %792 = vmatpush2.bf16.msra.mxu0 0
    %793 = vmatprep.subr.bf16.mxu0 0
    %794 = vmatpush2.bf16.msra.mxu0 0
    %795 = vmatprep.subr.bf16.mxu0 0
    %796 = vmatpush2.bf16.msra.mxu0 0
    %797 = vmatprep.subr.bf16.mxu0 0
    %798 = vmatpush2.bf16.msra.mxu0 0
    %799 = vmatprep.mubr.bf16.mxu0 0
    %800 = vmatmul.mubr.bf16.gmra.mxu0 %v760
    %v801 = vpop.f32.mrf.mxu0
    %v802 = vadd.f32 0.0, %v801
    %v803 = vpop.f32.mrf.mxu0
    %v804 = vadd.f32 0.0, %v803
    %v805 = vpop.f32.mrf.mxu0
    %v806 = vpop.f32.mrf.mxu0
    %807 = vdwg.mxu0
    %808 = vmatprep.subr.bf16.mxu0 0
    %809 = vmatpush1.bf16.msra.mxu0 %v279
    %810 = vmatprep.subr.bf16.mxu0 0
    %811 = vmatpush1.bf16.msra.mxu0 %v276
    %812 = vmatprep.subr.bf16.mxu0 0
    %813 = vmatpush1.bf16.msra.mxu0 %v273
    %814 = vmatprep.subr.bf16.mxu0 0
    %815 = vmatpush1.bf16.msra.mxu0 %v270
    %816 = vmatprep.subr.bf16.mxu0 0
    %817 = vmatpush1.bf16.msra.mxu0 %v267
    %818 = vmatprep.subr.bf16.mxu0 0
    %819 = vmatpush1.bf16.msra.mxu0 %v264
    %820 = vmatprep.subr.bf16.mxu0 0
    %821 = vmatpush1.bf16.msra.mxu0 %v261
    %822 = vmatprep.subr.bf16.mxu0 0
    %823 = vmatpush1.bf16.msra.mxu0 %v258
    %824 = vmatprep.subr.bf16.mxu0 0
    %825 = vmatpush2.bf16.msra.mxu0 0
    %826 = vmatprep.subr.bf16.mxu0 0
    %827 = vmatpush2.bf16.msra.mxu0 0
    %828 = vmatprep.subr.bf16.mxu0 0
    %829 = vmatpush2.bf16.msra.mxu0 0
    %830 = vmatprep.subr.bf16.mxu0 0
    %831 = vmatpush2.bf16.msra.mxu0 0
    %832 = vmatprep.subr.bf16.mxu0 0
    %833 = vmatpush2.bf16.msra.mxu0 0
    %834 = vmatprep.subr.bf16.mxu0 0
    %835 = vmatpush2.bf16.msra.mxu0 0
    %836 = vmatprep.subr.bf16.mxu0 0
    %837 = vmatpush2.bf16.msra.mxu0 0
    %838 = vmatprep.subr.bf16.mxu0 0
    %839 = vmatpush2.bf16.msra.mxu0 0
    %840 = vmatprep.mubr.bf16.mxu0 0
    %841 = vmatmul.mubr.bf16.gmra.mxu0 %v760
    %v842 = vpop.f32.mrf.mxu0
    %v843 = vadd.f32 0.0, %v842
    %v844 = vpop.f32.mrf.mxu0
    %v845 = vpop.f32.mrf.mxu0
    %v846 = vpop.f32.mrf.mxu0
    %847 = vdwg.mxu0
    %848 = vmatprep.subr.bf16.mxu0 %v487
    %849 = vmatpush1.bf16.msra.mxu0 %v486
    %850 = vmatprep.subr.bf16.mxu0 %v484
    %851 = vmatpush1.bf16.msra.mxu0 %v483
    %852 = vmatprep.subr.bf16.mxu0 %v481
    %853 = vmatpush1.bf16.msra.mxu0 %v480
    %854 = vmatprep.subr.bf16.mxu0 %v478
    %855 = vmatpush1.bf16.msra.mxu0 %v477
    %856 = vmatprep.subr.bf16.mxu0 %v475
    %857 = vmatpush1.bf16.msra.mxu0 %v474
    %858 = vmatprep.subr.bf16.mxu0 %v472
    %859 = vmatpush1.bf16.msra.mxu0 %v471
    %860 = vmatprep.subr.bf16.mxu0 %v469
    %861 = vmatpush1.bf16.msra.mxu0 %v468
    %862 = vmatprep.subr.bf16.mxu0 %v466
    %863 = vmatpush1.bf16.msra.mxu0 %v465
    %864 = vmatprep.subr.bf16.mxu0 0
    %865 = vmatpush2.bf16.msra.mxu0 0
    %866 = vmatprep.subr.bf16.mxu0 0
    %867 = vmatpush2.bf16.msra.mxu0 0
    %868 = vmatprep.subr.bf16.mxu0 0
    %869 = vmatpush2.bf16.msra.mxu0 0
    %870 = vmatprep.subr.bf16.mxu0 0
    %871 = vmatpush2.bf16.msra.mxu0 0
    %872 = vmatprep.subr.bf16.mxu0 0
    %873 = vmatpush2.bf16.msra.mxu0 0
    %874 = vmatprep.subr.bf16.mxu0 0
    %875 = vmatpush2.bf16.msra.mxu0 0
    %876 = vmatprep.subr.bf16.mxu0 0
    %877 = vmatpush2.bf16.msra.mxu0 0
    %878 = vmatprep.subr.bf16.mxu0 0
    %879 = vmatpush2.bf16.msra.mxu0 0
    %880 = vmatprep.mubr.bf16.mxu0 0
    %881 = vmatmul.mubr.bf16.gmra.mxu0 %v642
    %v882 = vpop.f32.mrf.mxu0
    %v883 = vadd.f32 0.0, %v882
    %v884 = vpop.f32.mrf.mxu0
    %v885 = vadd.f32 0.0, %v884
    %v886 = vpop.f32.mrf.mxu0
    %v887 = vpop.f32.mrf.mxu0
    %888 = vdwg.mxu0
    %889 = vmatprep.subr.bf16.mxu0 0
    %890 = vmatpush1.bf16.msra.mxu0 %v488
    %891 = vmatprep.subr.bf16.mxu0 0
    %892 = vmatpush1.bf16.msra.mxu0 %v485
    %893 = vmatprep.subr.bf16.mxu0 0
    %894 = vmatpush1.bf16.msra.mxu0 %v482
    %895 = vmatprep.subr.bf16.mxu0 0
    %896 = vmatpush1.bf16.msra.mxu0 %v479
    %897 = vmatprep.subr.bf16.mxu0 0
    %898 = vmatpush1.bf16.msra.mxu0 %v476
    %899 = vmatprep.subr.bf16.mxu0 0
    %900 = vmatpush1.bf16.msra.mxu0 %v473
    %901 = vmatprep.subr.bf16.mxu0 0
    %902 = vmatpush1.bf16.msra.mxu0 %v470
    %903 = vmatprep.subr.bf16.mxu0 0
    %904 = vmatpush1.bf16.msra.mxu0 %v467
    %905 = vmatprep.subr.bf16.mxu0 0
    %906 = vmatpush2.bf16.msra.mxu0 0
    %907 = vmatprep.subr.bf16.mxu0 0
    %908 = vmatpush2.bf16.msra.mxu0 0
    %909 = vmatprep.subr.bf16.mxu0 0
    %910 = vmatpush2.bf16.msra.mxu0 0
    %911 = vmatprep.subr.bf16.mxu0 0
    %912 = vmatpush2.bf16.msra.mxu0 0
    %913 = vmatprep.subr.bf16.mxu0 0
    %914 = vmatpush2.bf16.msra.mxu0 0
    %915 = vmatprep.subr.bf16.mxu0 0
    %916 = vmatpush2.bf16.msra.mxu0 0
    %917 = vmatprep.subr.bf16.mxu0 0
    %918 = vmatpush2.bf16.msra.mxu0 0
    %919 = vmatprep.subr.bf16.mxu0 0
    %920 = vmatpush2.bf16.msra.mxu0 0
    %921 = vmatprep.mubr.bf16.mxu0 0
    %922 = vmatmul.mubr.bf16.gmra.mxu0 %v642
    %v923 = vpop.f32.mrf.mxu0
    %v924 = vadd.f32 0.0, %v923
    %v925 = vpop.f32.mrf.mxu0
    %v926 = vpop.f32.mrf.mxu0
    %v927 = vpop.f32.mrf.mxu0
    %928 = vdwg.mxu0
    %v929 = vadd.f32 %v802, %v883
    %v930 = vadd.f32 %v804, %v885
    %v931 = vadd.f32 %v929, %v600
    %v932 = vadd.f32 %v930, %v604
    %v933 = vxor.u32 %v931, 2147483648
    %v934 = vxor.u32 %v932, 2147483648
    %v935 = vmul.f32 %v933, 1.442695
    %v936 = vpow.pop %v935
    %v937 = vmul.f32 %v934, 1.442695
    %v938 = vpow.pop %v937
    %v939 = vadd.f32 %v936, 1.0
    %v940 = vadd.f32 %v938, 1.0
    %v941 = vrcp.pop %v939
    %v942 = vmul.f32 1.0, %v941
    %v943 = vrcp.pop %v940
    %v944 = vmul.f32 1.0, %v943
    %v945 = vadd.f32 %v843, %v625
    %v946 = vadd.f32 %v924, %v632
    %v947 = vmul.f32 %v942, %v946
    %v948 = vadd.f32 %v945, %v947
    %v949 = vtanh.pop %v948
    %v950 = vsub.f32 1.0, %v944
    %v951 = vmul.f32 %v950, %v949
    %v952 = vmul.f32 %v944, %v641
    %v953 = vadd.f32 %v951, %v952
    %v954 = vpack.c.bf16 %v953, %v953
    %955 = vmatprep.subr.bf16.mxu0 0
    %956 = vmatpush1.bf16.msra.mxu0 %v688
    %957 = vmatprep.subr.bf16.mxu0 0
    %958 = vmatpush1.bf16.msra.mxu0 %v687
    %959 = vmatprep.subr.bf16.mxu0 0
    %960 = vmatpush1.bf16.msra.mxu0 %v686
    %961 = vmatprep.subr.bf16.mxu0 0
    %962 = vmatpush1.bf16.msra.mxu0 %v685
    %963 = vmatprep.subr.bf16.mxu0 0
    %964 = vmatpush1.bf16.msra.mxu0 %v684
    %965 = vmatprep.subr.bf16.mxu0 0
    %966 = vmatpush1.bf16.msra.mxu0 %v683
    %967 = vmatprep.subr.bf16.mxu0 0
    %968 = vmatpush1.bf16.msra.mxu0 %v682
    %969 = vmatprep.subr.bf16.mxu0 0
    %970 = vmatpush1.bf16.msra.mxu0 %v681
    %971 = vmatprep.subr.bf16.mxu0 0
    %972 = vmatpush2.bf16.msra.mxu0 0
    %973 = vmatprep.subr.bf16.mxu0 0
    %974 = vmatpush2.bf16.msra.mxu0 0
    %975 = vmatprep.subr.bf16.mxu0 0
    %976 = vmatpush2.bf16.msra.mxu0 0
    %977 = vmatprep.subr.bf16.mxu0 0
    %978 = vmatpush2.bf16.msra.mxu0 0
    %979 = vmatprep.subr.bf16.mxu0 0
    %980 = vmatpush2.bf16.msra.mxu0 0
    %981 = vmatprep.subr.bf16.mxu0 0
    %982 = vmatpush2.bf16.msra.mxu0 0
    %983 = vmatprep.subr.bf16.mxu0 0
    %984 = vmatpush2.bf16.msra.mxu0 0
    %985 = vmatprep.subr.bf16.mxu0 0
    %986 = vmatpush2.bf16.msra.mxu0 0
    %987 = vmatprep.mubr.bf16.mxu0 0
    %988 = vmatmul.mubr.bf16.gmra.mxu0 %v954
    %v989 = vpop.f32.mrf.mxu0
    %v990 = vadd.f32 %v647, %v989
    %v991 = vpop.f32.mrf.mxu0
    %v992 = vpop.f32.mrf.mxu0
    %v993 = vpop.f32.mrf.mxu0
    %994 = vdwg.mxu0
    %s995 = scalar_lea.vmem [#allocation2], 8
    %v996 = vld [vmem:[%s995] sm:$0xff]
    %v997 = vadd.f32 %v990, %v996
    %998 = vmax.xlane.f32.xlu0 %v997
    %v999 = vpop.xlane.xlu0 %998
    %vm1000 = vcmp.eq.f32.partialorder %v997, %v999
    %v1001 = vsel %vm1000, %v87, 128
    %v1002 = vand.u32 %v1001, 65535
    %v1003 = vshra.s32 %v1001, 16
    %v1004 = vcvt.s32.f32 %v1002
    %v1005 = vcvt.s32.f32 %v1003
    %1006 = vmin.xlane.f32.xlu0 %v1005
    %v1007 = vpop.xlane.xlu0 %1006
    %vm1008 = vcmp.eq.f32.partialorder %v1005, %v1007
    %v1009 = vsel %vm1008, %v1004, inf
    %1010 = vmin.xlane.f32.xlu0 %v1009
    %v1011 = vpop.xlane.xlu0 %1010
    %v1012 = vcvt.f32.s32 %v1011
    %v1013 = vcvt.f32.s32 %v1007
    %v1014 = vshll.u32 %v1013, 16
    %v1015 = vadd.s32 %v1014, %v1012
    %vm1016 = vcmp.eq.s32.totalorder %v87, %v1015
    %v1017 = vsel %vm1016, 1, 0
    %v1018 = vcvt.s32.f32 %v1017
    %v1019 = vpack.c.bf16 %v1018, %v1018
    %v1020 = vlaneseq
    %v1021 = vshrl.u32 %v1020, 7
    %v1022 = vsub.s32 %v87, %v1021
    %v1023 = vrot.slane %v1015, %v1022
    %1024 = vst.msk [vmem:[#allocation10 + $0x1] sm:$0x1] %vm765, %v1023
    %1025 = vmatprep.subr.bf16.mxu0 %v278
    %1026 = vmatpush1.bf16.msra.mxu0 %v277
    %1027 = vmatprep.subr.bf16.mxu0 %v275
    %1028 = vmatpush1.bf16.msra.mxu0 %v274
    %1029 = vmatprep.subr.bf16.mxu0 %v272
    %1030 = vmatpush1.bf16.msra.mxu0 %v271
    %1031 = vmatprep.subr.bf16.mxu0 %v269
    %1032 = vmatpush1.bf16.msra.mxu0 %v268
    %1033 = vmatprep.subr.bf16.mxu0 %v266
    %1034 = vmatpush1.bf16.msra.mxu0 %v265
    %1035 = vmatprep.subr.bf16.mxu0 %v263
    %1036 = vmatpush1.bf16.msra.mxu0 %v262
    %1037 = vmatprep.subr.bf16.mxu0 %v260
    %1038 = vmatpush1.bf16.msra.mxu0 %v259
    %1039 = vmatprep.subr.bf16.mxu0 %v257
    %1040 = vmatpush1.bf16.msra.mxu0 %v256
    %1041 = vmatprep.subr.bf16.mxu0 0
    %1042 = vmatpush2.bf16.msra.mxu0 0
    %1043 = vmatprep.subr.bf16.mxu0 0
    %1044 = vmatpush2.bf16.msra.mxu0 0
    %1045 = vmatprep.subr.bf16.mxu0 0
    %1046 = vmatpush2.bf16.msra.mxu0 0
    %1047 = vmatprep.subr.bf16.mxu0 0
    %1048 = vmatpush2.bf16.msra.mxu0 0
    %1049 = vmatprep.subr.bf16.mxu0 0
    %1050 = vmatpush2.bf16.msra.mxu0 0
    %1051 = vmatprep.subr.bf16.mxu0 0
    %1052 = vmatpush2.bf16.msra.mxu0 0
    %1053 = vmatprep.subr.bf16.mxu0 0
    %1054 = vmatpush2.bf16.msra.mxu0 0
    %1055 = vmatprep.subr.bf16.mxu0 0
    %1056 = vmatpush2.bf16.msra.mxu0 0
    %1057 = vmatprep.mubr.bf16.mxu0 0
    %1058 = vmatmul.mubr.bf16.gmra.mxu0 %v1019
    %v1059 = vpop.f32.mrf.mxu0
    %v1060 = vadd.f32 0.0, %v1059
    %v1061 = vpop.f32.mrf.mxu0
    %v1062 = vadd.f32 0.0, %v1061
    %v1063 = vpop.f32.mrf.mxu0
    %v1064 = vpop.f32.mrf.mxu0
    %1065 = vdwg.mxu0
    %1066 = vmatprep.subr.bf16.mxu0 0
    %1067 = vmatpush1.bf16.msra.mxu0 %v279
    %1068 = vmatprep.subr.bf16.mxu0 0
    %1069 = vmatpush1.bf16.msra.mxu0 %v276
    %1070 = vmatprep.subr.bf16.mxu0 0
    %1071 = vmatpush1.bf16.msra.mxu0 %v273
    %1072 = vmatprep.subr.bf16.mxu0 0
    %1073 = vmatpush1.bf16.msra.mxu0 %v270
    %1074 = vmatprep.subr.bf16.mxu0 0
    %1075 = vmatpush1.bf16.msra.mxu0 %v267
    %1076 = vmatprep.subr.bf16.mxu0 0
    %1077 = vmatpush1.bf16.msra.mxu0 %v264
    %1078 = vmatprep.subr.bf16.mxu0 0
    %1079 = vmatpush1.bf16.msra.mxu0 %v261
    %1080 = vmatprep.subr.bf16.mxu0 0
    %1081 = vmatpush1.bf16.msra.mxu0 %v258
    %1082 = vmatprep.subr.bf16.mxu0 0
    %1083 = vmatpush2.bf16.msra.mxu0 0
    %1084 = vmatprep.subr.bf16.mxu0 0
    %1085 = vmatpush2.bf16.msra.mxu0 0
    %1086 = vmatprep.subr.bf16.mxu0 0
    %1087 = vmatpush2.bf16.msra.mxu0 0
    %1088 = vmatprep.subr.bf16.mxu0 0
    %1089 = vmatpush2.bf16.msra.mxu0 0
    %1090 = vmatprep.subr.bf16.mxu0 0
    %1091 = vmatpush2.bf16.msra.mxu0 0
    %1092 = vmatprep.subr.bf16.mxu0 0
    %1093 = vmatpush2.bf16.msra.mxu0 0
    %1094 = vmatprep.subr.bf16.mxu0 0
    %1095 = vmatpush2.bf16.msra.mxu0 0
    %1096 = vmatprep.subr.bf16.mxu0 0
    %1097 = vmatpush2.bf16.msra.mxu0 0
    %1098 = vmatprep.mubr.bf16.mxu0 0
    %1099 = vmatmul.mubr.bf16.gmra.mxu0 %v1019
    %v1100 = vpop.f32.mrf.mxu0
    %v1101 = vadd.f32 0.0, %v1100
    %v1102 = vpop.f32.mrf.mxu0
    %v1103 = vpop.f32.mrf.mxu0
    %v1104 = vpop.f32.mrf.mxu0
    %1105 = vdwg.mxu0
    %1106 = vmatprep.subr.bf16.mxu0 %v487
    %1107 = vmatpush1.bf16.msra.mxu0 %v486
    %1108 = vmatprep.subr.bf16.mxu0 %v484
    %1109 = vmatpush1.bf16.msra.mxu0 %v483
    %1110 = vmatprep.subr.bf16.mxu0 %v481
    %1111 = vmatpush1.bf16.msra.mxu0 %v480
    %1112 = vmatprep.subr.bf16.mxu0 %v478
    %1113 = vmatpush1.bf16.msra.mxu0 %v477
    %1114 = vmatprep.subr.bf16.mxu0 %v475
    %1115 = vmatpush1.bf16.msra.mxu0 %v474
    %1116 = vmatprep.subr.bf16.mxu0 %v472
    %1117 = vmatpush1.bf16.msra.mxu0 %v471
    %1118 = vmatprep.subr.bf16.mxu0 %v469
    %1119 = vmatpush1.bf16.msra.mxu0 %v468
    %1120 = vmatprep.subr.bf16.mxu0 %v466
    %1121 = vmatpush1.bf16.msra.mxu0 %v465
    %1122 = vmatprep.subr.bf16.mxu0 0
    %1123 = vmatpush2.bf16.msra.mxu0 0
    %1124 = vmatprep.subr.bf16.mxu0 0
    %1125 = vmatpush2.bf16.msra.mxu0 0
    %1126 = vmatprep.subr.bf16.mxu0 0
    %1127 = vmatpush2.bf16.msra.mxu0 0
    %1128 = vmatprep.subr.bf16.mxu0 0
    %1129 = vmatpush2.bf16.msra.mxu0 0
    %1130 = vmatprep.subr.bf16.mxu0 0
    %1131 = vmatpush2.bf16.msra.mxu0 0
    %1132 = vmatprep.subr.bf16.mxu0 0
    %1133 = vmatpush2.bf16.msra.mxu0 0
    %1134 = vmatprep.subr.bf16.mxu0 0
    %1135 = vmatpush2.bf16.msra.mxu0 0
    %1136 = vmatprep.subr.bf16.mxu0 0
    %1137 = vmatpush2.bf16.msra.mxu0 0
    %1138 = vmatprep.mubr.bf16.mxu0 0
    %1139 = vmatmul.mubr.bf16.gmra.mxu0 %v954
    %v1140 = vpop.f32.mrf.mxu0
    %v1141 = vadd.f32 0.0, %v1140
    %v1142 = vpop.f32.mrf.mxu0
    %v1143 = vadd.f32 0.0, %v1142
    %v1144 = vpop.f32.mrf.mxu0
    %v1145 = vpop.f32.mrf.mxu0
    %1146 = vdwg.mxu0
    %1147 = vmatprep.subr.bf16.mxu0 0
    %1148 = vmatpush1.bf16.msra.mxu0 %v488
    %1149 = vmatprep.subr.bf16.mxu0 0
    %1150 = vmatpush1.bf16.msra.mxu0 %v485
    %1151 = vmatprep.subr.bf16.mxu0 0
    %1152 = vmatpush1.bf16.msra.mxu0 %v482
    %1153 = vmatprep.subr.bf16.mxu0 0
    %1154 = vmatpush1.bf16.msra.mxu0 %v479
    %1155 = vmatprep.subr.bf16.mxu0 0
    %1156 = vmatpush1.bf16.msra.mxu0 %v476
    %1157 = vmatprep.subr.bf16.mxu0 0
    %1158 = vmatpush1.bf16.msra.mxu0 %v473
    %1159 = vmatprep.subr.bf16.mxu0 0
    %1160 = vmatpush1.bf16.msra.mxu0 %v470
    %1161 = vmatprep.subr.bf16.mxu0 0
    %1162 = vmatpush1.bf16.msra.mxu0 %v467
    %1163 = vmatprep.subr.bf16.mxu0 0
    %1164 = vmatpush2.bf16.msra.mxu0 0
    %1165 = vmatprep.subr.bf16.mxu0 0
    %1166 = vmatpush2.bf16.msra.mxu0 0
    %1167 = vmatprep.subr.bf16.mxu0 0
    %1168 = vmatpush2.bf16.msra.mxu0 0
    %1169 = vmatprep.subr.bf16.mxu0 0
    %1170 = vmatpush2.bf16.msra.mxu0 0
    %1171 = vmatprep.subr.bf16.mxu0 0
    %1172 = vmatpush2.bf16.msra.mxu0 0
    %1173 = vmatprep.subr.bf16.mxu0 0
    %1174 = vmatpush2.bf16.msra.mxu0 0
    %1175 = vmatprep.subr.bf16.mxu0 0
    %1176 = vmatpush2.bf16.msra.mxu0 0
    %1177 = vmatprep.subr.bf16.mxu0 0
    %1178 = vmatpush2.bf16.msra.mxu0 0
    %1179 = vmatprep.mubr.bf16.mxu0 0
    %1180 = vmatmul.mubr.bf16.gmra.mxu0 %v954
    %v1181 = vpop.f32.mrf.mxu0
    %v1182 = vadd.f32 0.0, %v1181
    %v1183 = vpop.f32.mrf.mxu0
    %v1184 = vpop.f32.mrf.mxu0
    %v1185 = vpop.f32.mrf.mxu0
    %1186 = vdwg.mxu0
    %v1187 = vadd.f32 %v1060, %v1141
    %v1188 = vadd.f32 %v1062, %v1143
    %v1189 = vadd.f32 %v1187, %v600
    %v1190 = vadd.f32 %v1188, %v604
    %v1191 = vxor.u32 %v1189, 2147483648
    %v1192 = vxor.u32 %v1190, 2147483648
    %v1193 = vmul.f32 %v1191, 1.442695
    %v1194 = vpow.pop %v1193
    %v1195 = vmul.f32 %v1192, 1.442695
    %v1196 = vpow.pop %v1195
    %v1197 = vadd.f32 %v1194, 1.0
    %v1198 = vadd.f32 %v1196, 1.0
    %v1199 = vrcp.pop %v1197
    %v1200 = vmul.f32 1.0, %v1199
    %v1201 = vrcp.pop %v1198
    %v1202 = vmul.f32 1.0, %v1201
    %v1203 = vadd.f32 %v1101, %v625
    %v1204 = vadd.f32 %v1182, %v632
    %v1205 = vmul.f32 %v1200, %v1204
    %v1206 = vadd.f32 %v1203, %v1205
    %v1207 = vtanh.pop %v1206
    %v1208 = vsub.f32 1.0, %v1202
    %v1209 = vmul.f32 %v1208, %v1207
    %v1210 = vmul.f32 %v1202, %v953
    %v1211 = vadd.f32 %v1209, %v1210
    %v1212 = vpack.c.bf16 %v1211, %v1211
    %1213 = vmatprep.subr.bf16.mxu0 0
    %1214 = vmatpush1.bf16.msra.mxu0 %v688
    %1215 = vmatprep.subr.bf16.mxu0 0
    %1216 = vmatpush1.bf16.msra.mxu0 %v687
    %1217 = vmatprep.subr.bf16.mxu0 0
    %1218 = vmatpush1.bf16.msra.mxu0 %v686
    %1219 = vmatprep.subr.bf16.mxu0 0
    %1220 = vmatpush1.bf16.msra.mxu0 %v685
    %1221 = vmatprep.subr.bf16.mxu0 0
    %1222 = vmatpush1.bf16.msra.mxu0 %v684
    %1223 = vmatprep.subr.bf16.mxu0 0
    %1224 = vmatpush1.bf16.msra.mxu0 %v683
    %1225 = vmatprep.subr.bf16.mxu0 0
    %1226 = vmatpush1.bf16.msra.mxu0 %v682
    %1227 = vmatprep.subr.bf16.mxu0 0
    %1228 = vmatpush1.bf16.msra.mxu0 %v681
    %1229 = vmatprep.subr.bf16.mxu0 0
    %1230 = vmatpush2.bf16.msra.mxu0 0
    %1231 = vmatprep.subr.bf16.mxu0 0
    %1232 = vmatpush2.bf16.msra.mxu0 0
    %1233 = vmatprep.subr.bf16.mxu0 0
    %1234 = vmatpush2.bf16.msra.mxu0 0
    %1235 = vmatprep.subr.bf16.mxu0 0
    %1236 = vmatpush2.bf16.msra.mxu0 0
    %1237 = vmatprep.subr.bf16.mxu0 0
    %1238 = vmatpush2.bf16.msra.mxu0 0
    %1239 = vmatprep.subr.bf16.mxu0 0
    %1240 = vmatpush2.bf16.msra.mxu0 0
    %1241 = vmatprep.subr.bf16.mxu0 0
    %1242 = vmatpush2.bf16.msra.mxu0 0
    %1243 = vmatprep.subr.bf16.mxu0 0
    %1244 = vmatpush2.bf16.msra.mxu0 0
    %1245 = vmatprep.mubr.bf16.mxu0 0
    %1246 = vmatmul.mubr.bf16.gmra.mxu0 %v1212
    %v1247 = vpop.f32.mrf.mxu0
    %v1248 = vadd.f32 %v647, %v1247
    %v1249 = vpop.f32.mrf.mxu0
    %v1250 = vpop.f32.mrf.mxu0
    %v1251 = vpop.f32.mrf.mxu0
    %1252 = vdwg.mxu0
    %s1253 = scalar_lea.vmem [#allocation2], 16
    %v1254 = vld [vmem:[%s1253] sm:$0xff]
    %v1255 = vadd.f32 %v1248, %v1254
    %1256 = vmax.xlane.f32.xlu0 %v1255
    %v1257 = vpop.xlane.xlu0 %1256
    %vm1258 = vcmp.eq.f32.partialorder %v1255, %v1257
    %v1259 = vsel %vm1258, %v87, 128
    %v1260 = vand.u32 %v1259, 65535
    %v1261 = vshra.s32 %v1259, 16
    %v1262 = vcvt.s32.f32 %v1260
    %v1263 = vcvt.s32.f32 %v1261
    %1264 = vmin.xlane.f32.xlu0 %v1263
    %v1265 = vpop.xlane.xlu0 %1264
    %vm1266 = vcmp.eq.f32.partialorder %v1263, %v1265
    %v1267 = vsel %vm1266, %v1262, inf
    %1268 = vmin.xlane.f32.xlu0 %v1267
    %v1269 = vpop.xlane.xlu0 %1268
    %v1270 = vcvt.f32.s32 %v1269
    %v1271 = vcvt.f32.s32 %v1265
    %v1272 = vshll.u32 %v1271, 16
    %v1273 = vadd.s32 %v1272, %v1270
    %vm1274 = vcmp.eq.s32.totalorder %v87, %v1273
    %v1275 = vsel %vm1274, 1, 0
    %v1276 = vcvt.s32.f32 %v1275
    %v1277 = vpack.c.bf16 %v1276, %v1276
    %v1278 = vlaneseq
    %v1279 = vshrl.u32 %v1278, 7
    %v1280 = vsub.s32 %v87, %v1279
    %v1281 = vrot.slane %v1273, %v1280
    %1282 = vst.msk [vmem:[#allocation10 + $0x2] sm:$0x1] %vm765, %v1281
    %1283 = vmatprep.subr.bf16.mxu0 %v278
    %1284 = vmatpush1.bf16.msra.mxu0 %v277
    %1285 = vmatprep.subr.bf16.mxu0 %v275
    %1286 = vmatpush1.bf16.msra.mxu0 %v274
    %1287 = vmatprep.subr.bf16.mxu0 %v272
    %1288 = vmatpush1.bf16.msra.mxu0 %v271
    %1289 = vmatprep.subr.bf16.mxu0 %v269
    %1290 = vmatpush1.bf16.msra.mxu0 %v268
    %1291 = vmatprep.subr.bf16.mxu0 %v266
    %1292 = vmatpush1.bf16.msra.mxu0 %v265
    %1293 = vmatprep.subr.bf16.mxu0 %v263
    %1294 = vmatpush1.bf16.msra.mxu0 %v262
    %1295 = vmatprep.subr.bf16.mxu0 %v260
    %1296 = vmatpush1.bf16.msra.mxu0 %v259
    %1297 = vmatprep.subr.bf16.mxu0 %v257
    %1298 = vmatpush1.bf16.msra.mxu0 %v256
    %1299 = vmatprep.subr.bf16.mxu0 0
    %1300 = vmatpush2.bf16.msra.mxu0 0
    %1301 = vmatprep.subr.bf16.mxu0 0
    %1302 = vmatpush2.bf16.msra.mxu0 0
    %1303 = vmatprep.subr.bf16.mxu0 0
    %1304 = vmatpush2.bf16.msra.mxu0 0
    %1305 = vmatprep.subr.bf16.mxu0 0
    %1306 = vmatpush2.bf16.msra.mxu0 0
    %1307 = vmatprep.subr.bf16.mxu0 0
    %1308 = vmatpush2.bf16.msra.mxu0 0
    %1309 = vmatprep.subr.bf16.mxu0 0
    %1310 = vmatpush2.bf16.msra.mxu0 0
    %1311 = vmatprep.subr.bf16.mxu0 0
    %1312 = vmatpush2.bf16.msra.mxu0 0
    %1313 = vmatprep.subr.bf16.mxu0 0
    %1314 = vmatpush2.bf16.msra.mxu0 0
    %1315 = vmatprep.mubr.bf16.mxu0 0
    %1316 = vmatmul.mubr.bf16.gmra.mxu0 %v1277
    %v1317 = vpop.f32.mrf.mxu0
    %v1318 = vadd.f32 0.0, %v1317
    %v1319 = vpop.f32.mrf.mxu0
    %v1320 = vadd.f32 0.0, %v1319
    %v1321 = vpop.f32.mrf.mxu0
    %v1322 = vpop.f32.mrf.mxu0
    %1323 = vdwg.mxu0
    %1324 = vmatprep.subr.bf16.mxu0 0
    %1325 = vmatpush1.bf16.msra.mxu0 %v279
    %1326 = vmatprep.subr.bf16.mxu0 0
    %1327 = vmatpush1.bf16.msra.mxu0 %v276
    %1328 = vmatprep.subr.bf16.mxu0 0
    %1329 = vmatpush1.bf16.msra.mxu0 %v273
    %1330 = vmatprep.subr.bf16.mxu0 0
    %1331 = vmatpush1.bf16.msra.mxu0 %v270
    %1332 = vmatprep.subr.bf16.mxu0 0
    %1333 = vmatpush1.bf16.msra.mxu0 %v267
    %1334 = vmatprep.subr.bf16.mxu0 0
    %1335 = vmatpush1.bf16.msra.mxu0 %v264
    %1336 = vmatprep.subr.bf16.mxu0 0
    %1337 = vmatpush1.bf16.msra.mxu0 %v261
    %1338 = vmatprep.subr.bf16.mxu0 0
    %1339 = vmatpush1.bf16.msra.mxu0 %v258
    %1340 = vmatprep.subr.bf16.mxu0 0
    %1341 = vmatpush2.bf16.msra.mxu0 0
    %1342 = vmatprep.subr.bf16.mxu0 0
    %1343 = vmatpush2.bf16.msra.mxu0 0
    %1344 = vmatprep.subr.bf16.mxu0 0
    %1345 = vmatpush2.bf16.msra.mxu0 0
    %1346 = vmatprep.subr.bf16.mxu0 0
    %1347 = vmatpush2.bf16.msra.mxu0 0
    %1348 = vmatprep.subr.bf16.mxu0 0
    %1349 = vmatpush2.bf16.msra.mxu0 0
    %1350 = vmatprep.subr.bf16.mxu0 0
    %1351 = vmatpush2.bf16.msra.mxu0 0
    %1352 = vmatprep.subr.bf16.mxu0 0
    %1353 = vmatpush2.bf16.msra.mxu0 0
    %1354 = vmatprep.subr.bf16.mxu0 0
    %1355 = vmatpush2.bf16.msra.mxu0 0
    %1356 = vmatprep.mubr.bf16.mxu0 0
    %1357 = vmatmul.mubr.bf16.gmra.mxu0 %v1277
    %v1358 = vpop.f32.mrf.mxu0
    %v1359 = vadd.f32 0.0, %v1358
    %v1360 = vpop.f32.mrf.mxu0
    %v1361 = vpop.f32.mrf.mxu0
    %v1362 = vpop.f32.mrf.mxu0
    %1363 = vdwg.mxu0
    %1364 = vmatprep.subr.bf16.mxu0 %v487
    %1365 = vmatpush1.bf16.msra.mxu0 %v486
    %1366 = vmatprep.subr.bf16.mxu0 %v484
    %1367 = vmatpush1.bf16.msra.mxu0 %v483
    %1368 = vmatprep.subr.bf16.mxu0 %v481
    %1369 = vmatpush1.bf16.msra.mxu0 %v480
    %1370 = vmatprep.subr.bf16.mxu0 %v478
    %1371 = vmatpush1.bf16.msra.mxu0 %v477
    %1372 = vmatprep.subr.bf16.mxu0 %v475
    %1373 = vmatpush1.bf16.msra.mxu0 %v474
    %1374 = vmatprep.subr.bf16.mxu0 %v472
    %1375 = vmatpush1.bf16.msra.mxu0 %v471
    %1376 = vmatprep.subr.bf16.mxu0 %v469
    %1377 = vmatpush1.bf16.msra.mxu0 %v468
    %1378 = vmatprep.subr.bf16.mxu0 %v466
    %1379 = vmatpush1.bf16.msra.mxu0 %v465
    %1380 = vmatprep.subr.bf16.mxu0 0
    %1381 = vmatpush2.bf16.msra.mxu0 0
    %1382 = vmatprep.subr.bf16.mxu0 0
    %1383 = vmatpush2.bf16.msra.mxu0 0
    %1384 = vmatprep.subr.bf16.mxu0 0
    %1385 = vmatpush2.bf16.msra.mxu0 0
    %1386 = vmatprep.subr.bf16.mxu0 0
    %1387 = vmatpush2.bf16.msra.mxu0 0
    %1388 = vmatprep.subr.bf16.mxu0 0
    %1389 = vmatpush2.bf16.msra.mxu0 0
    %1390 = vmatprep.subr.bf16.mxu0 0
    %1391 = vmatpush2.bf16.msra.mxu0 0
    %1392 = vmatprep.subr.bf16.mxu0 0
    %1393 = vmatpush2.bf16.msra.mxu0 0
    %1394 = vmatprep.subr.bf16.mxu0 0
    %1395 = vmatpush2.bf16.msra.mxu0 0
    %1396 = vmatprep.mubr.bf16.mxu0 0
    %1397 = vmatmul.mubr.bf16.gmra.mxu0 %v1212
    %v1398 = vpop.f32.mrf.mxu0
    %v1399 = vadd.f32 0.0, %v1398
    %v1400 = vpop.f32.mrf.mxu0
    %v1401 = vadd.f32 0.0, %v1400
    %v1402 = vpop.f32.mrf.mxu0
    %v1403 = vpop.f32.mrf.mxu0
    %1404 = vdwg.mxu0
    %1405 = vmatprep.subr.bf16.mxu0 0
    %1406 = vmatpush1.bf16.msra.mxu0 %v488
    %1407 = vmatprep.subr.bf16.mxu0 0
    %1408 = vmatpush1.bf16.msra.mxu0 %v485
    %1409 = vmatprep.subr.bf16.mxu0 0
    %1410 = vmatpush1.bf16.msra.mxu0 %v482
    %1411 = vmatprep.subr.bf16.mxu0 0
    %1412 = vmatpush1.bf16.msra.mxu0 %v479
    %1413 = vmatprep.subr.bf16.mxu0 0
    %1414 = vmatpush1.bf16.msra.mxu0 %v476
    %1415 = vmatprep.subr.bf16.mxu0 0
    %1416 = vmatpush1.bf16.msra.mxu0 %v473
    %1417 = vmatprep.subr.bf16.mxu0 0
    %1418 = vmatpush1.bf16.msra.mxu0 %v470
    %1419 = vmatprep.subr.bf16.mxu0 0
    %1420 = vmatpush1.bf16.msra.mxu0 %v467
    %1421 = vmatprep.subr.bf16.mxu0 0
    %1422 = vmatpush2.bf16.msra.mxu0 0
    %1423 = vmatprep.subr.bf16.mxu0 0
    %1424 = vmatpush2.bf16.msra.mxu0 0
    %1425 = vmatprep.subr.bf16.mxu0 0
    %1426 = vmatpush2.bf16.msra.mxu0 0
    %1427 = vmatprep.subr.bf16.mxu0 0
    %1428 = vmatpush2.bf16.msra.mxu0 0
    %1429 = vmatprep.subr.bf16.mxu0 0
    %1430 = vmatpush2.bf16.msra.mxu0 0
    %1431 = vmatprep.subr.bf16.mxu0 0
    %1432 = vmatpush2.bf16.msra.mxu0 0
    %1433 = vmatprep.subr.bf16.mxu0 0
    %1434 = vmatpush2.bf16.msra.mxu0 0
    %1435 = vmatprep.subr.bf16.mxu0 0
    %1436 = vmatpush2.bf16.msra.mxu0 0
    %1437 = vmatprep.mubr.bf16.mxu0 0
    %1438 = vmatmul.mubr.bf16.gmra.mxu0 %v1212
    %v1439 = vpop.f32.mrf.mxu0
    %v1440 = vadd.f32 0.0, %v1439
    %v1441 = vpop.f32.mrf.mxu0
    %v1442 = vpop.f32.mrf.mxu0
    %v1443 = vpop.f32.mrf.mxu0
    %1444 = vdwg.mxu0
    %v1445 = vadd.f32 %v1318, %v1399
    %v1446 = vadd.f32 %v1320, %v1401
    %v1447 = vadd.f32 %v1445, %v600
    %v1448 = vadd.f32 %v1446, %v604
    %v1449 = vxor.u32 %v1447, 2147483648
    %v1450 = vxor.u32 %v1448, 2147483648
    %v1451 = vmul.f32 %v1449, 1.442695
    %v1452 = vpow.pop %v1451
    %v1453 = vmul.f32 %v1450, 1.442695
    %v1454 = vpow.pop %v1453
    %v1455 = vadd.f32 %v1452, 1.0
    %v1456 = vadd.f32 %v1454, 1.0
    %v1457 = vrcp.pop %v1455
    %v1458 = vmul.f32 1.0, %v1457
    %v1459 = vrcp.pop %v1456
    %v1460 = vmul.f32 1.0, %v1459
    %v1461 = vadd.f32 %v1359, %v625
    %v1462 = vadd.f32 %v1440, %v632
    %v1463 = vmul.f32 %v1458, %v1462
    %v1464 = vadd.f32 %v1461, %v1463
    %v1465 = vtanh.pop %v1464
    %v1466 = vsub.f32 1.0, %v1460
    %v1467 = vmul.f32 %v1466, %v1465
    %v1468 = vmul.f32 %v1460, %v1211
    %v1469 = vadd.f32 %v1467, %v1468
    %v1470 = vpack.c.bf16 %v1469, %v1469
    %1471 = vmatprep.subr.bf16.mxu0 0
    %1472 = vmatpush1.bf16.msra.mxu0 %v688
    %1473 = vmatprep.subr.bf16.mxu0 0
    %1474 = vmatpush1.bf16.msra.mxu0 %v687
    %1475 = vmatprep.subr.bf16.mxu0 0
    %1476 = vmatpush1.bf16.msra.mxu0 %v686
    %1477 = vmatprep.subr.bf16.mxu0 0
    %1478 = vmatpush1.bf16.msra.mxu0 %v685
    %1479 = vmatprep.subr.bf16.mxu0 0
    %1480 = vmatpush1.bf16.msra.mxu0 %v684
    %1481 = vmatprep.subr.bf16.mxu0 0
    %1482 = vmatpush1.bf16.msra.mxu0 %v683
    %1483 = vmatprep.subr.bf16.mxu0 0
    %1484 = vmatpush1.bf16.msra.mxu0 %v682
    %1485 = vmatprep.subr.bf16.mxu0 0
    %1486 = vmatpush1.bf16.msra.mxu0 %v681
    %1487 = vmatprep.subr.bf16.mxu0 0
    %1488 = vmatpush2.bf16.msra.mxu0 0
    %1489 = vmatprep.subr.bf16.mxu0 0
    %1490 = vmatpush2.bf16.msra.mxu0 0
    %1491 = vmatprep.subr.bf16.mxu0 0
    %1492 = vmatpush2.bf16.msra.mxu0 0
    %1493 = vmatprep.subr.bf16.mxu0 0
    %1494 = vmatpush2.bf16.msra.mxu0 0
    %1495 = vmatprep.subr.bf16.mxu0 0
    %1496 = vmatpush2.bf16.msra.mxu0 0
    %1497 = vmatprep.subr.bf16.mxu0 0
    %1498 = vmatpush2.bf16.msra.mxu0 0
    %1499 = vmatprep.subr.bf16.mxu0 0
    %1500 = vmatpush2.bf16.msra.mxu0 0
    %1501 = vmatprep.subr.bf16.mxu0 0
    %1502 = vmatpush2.bf16.msra.mxu0 0
    %1503 = vmatprep.mubr.bf16.mxu0 0
    %1504 = vmatmul.mubr.bf16.gmra.mxu0 %v1470
    %v1505 = vpop.f32.mrf.mxu0
    %v1506 = vadd.f32 %v647, %v1505
    %v1507 = vpop.f32.mrf.mxu0
    %v1508 = vpop.f32.mrf.mxu0
    %v1509 = vpop.f32.mrf.mxu0
    %1510 = vdwg.mxu0
    %s1511 = scalar_lea.vmem [#allocation2], 24
    %v1512 = vld [vmem:[%s1511] sm:$0xff]
    %v1513 = vadd.f32 %v1506, %v1512
    %1514 = vmax.xlane.f32.xlu0 %v1513
    %v1515 = vpop.xlane.xlu0 %1514
    %vm1516 = vcmp.eq.f32.partialorder %v1513, %v1515
    %v1517 = vsel %vm1516, %v87, 128
    %v1518 = vand.u32 %v1517, 65535
    %v1519 = vshra.s32 %v1517, 16
    %v1520 = vcvt.s32.f32 %v1518
    %v1521 = vcvt.s32.f32 %v1519
    %1522 = vmin.xlane.f32.xlu0 %v1521
    %v1523 = vpop.xlane.xlu0 %1522
    %vm1524 = vcmp.eq.f32.partialorder %v1521, %v1523
    %v1525 = vsel %vm1524, %v1520, inf
    %1526 = vmin.xlane.f32.xlu0 %v1525
    %v1527 = vpop.xlane.xlu0 %1526
    %v1528 = vcvt.f32.s32 %v1527
    %v1529 = vcvt.f32.s32 %v1523
    %v1530 = vshll.u32 %v1529, 16
    %v1531 = vadd.s32 %v1530, %v1528
    %vm1532 = vcmp.eq.s32.totalorder %v87, %v1531
    %v1533 = vsel %vm1532, 1, 0
    %v1534 = vcvt.s32.f32 %v1533
    %v1535 = vpack.c.bf16 %v1534, %v1534
    %v1536 = vlaneseq
    %v1537 = vshrl.u32 %v1536, 7
    %v1538 = vsub.s32 %v87, %v1537
    %v1539 = vrot.slane %v1531, %v1538
    %1540 = vst.msk [vmem:[#allocation10 + $0x3] sm:$0x1] %vm765, %v1539
    %1541 = vmatprep.subr.bf16.mxu0 %v278
    %1542 = vmatpush1.bf16.msra.mxu0 %v277
    %1543 = vmatprep.subr.bf16.mxu0 %v275
    %1544 = vmatpush1.bf16.msra.mxu0 %v274
    %1545 = vmatprep.subr.bf16.mxu0 %v272
    %1546 = vmatpush1.bf16.msra.mxu0 %v271
    %1547 = vmatprep.subr.bf16.mxu0 %v269
    %1548 = vmatpush1.bf16.msra.mxu0 %v268
    %1549 = vmatprep.subr.bf16.mxu0 %v266
    %1550 = vmatpush1.bf16.msra.mxu0 %v265
    %1551 = vmatprep.subr.bf16.mxu0 %v263
    %1552 = vmatpush1.bf16.msra.mxu0 %v262
    %1553 = vmatprep.subr.bf16.mxu0 %v260
    %1554 = vmatpush1.bf16.msra.mxu0 %v259
    %1555 = vmatprep.subr.bf16.mxu0 %v257
    %1556 = vmatpush1.bf16.msra.mxu0 %v256
    %1557 = vmatprep.subr.bf16.mxu0 0
    %1558 = vmatpush2.bf16.msra.mxu0 0
    %1559 = vmatprep.subr.bf16.mxu0 0
    %1560 = vmatpush2.bf16.msra.mxu0 0
    %1561 = vmatprep.subr.bf16.mxu0 0
    %1562 = vmatpush2.bf16.msra.mxu0 0
    %1563 = vmatprep.subr.bf16.mxu0 0
    %1564 = vmatpush2.bf16.msra.mxu0 0
    %1565 = vmatprep.subr.bf16.mxu0 0
    %1566 = vmatpush2.bf16.msra.mxu0 0
    %1567 = vmatprep.subr.bf16.mxu0 0
    %1568 = vmatpush2.bf16.msra.mxu0 0
    %1569 = vmatprep.subr.bf16.mxu0 0
    %1570 = vmatpush2.bf16.msra.mxu0 0
    %1571 = vmatprep.subr.bf16.mxu0 0
    %1572 = vmatpush2.bf16.msra.mxu0 0
    %1573 = vmatprep.mubr.bf16.mxu0 0
    %1574 = vmatmul.mubr.bf16.gmra.mxu0 %v1535
    %v1575 = vpop.f32.mrf.mxu0
    %v1576 = vadd.f32 0.0, %v1575
    %v1577 = vpop.f32.mrf.mxu0
    %v1578 = vadd.f32 0.0, %v1577
    %v1579 = vpop.f32.mrf.mxu0
    %v1580 = vpop.f32.mrf.mxu0
    %1581 = vdwg.mxu0
    %1582 = vmatprep.subr.bf16.mxu0 0
    %1583 = vmatpush1.bf16.msra.mxu0 %v279
    %1584 = vmatprep.subr.bf16.mxu0 0
    %1585 = vmatpush1.bf16.msra.mxu0 %v276
    %1586 = vmatprep.subr.bf16.mxu0 0
    %1587 = vmatpush1.bf16.msra.mxu0 %v273
    %1588 = vmatprep.subr.bf16.mxu0 0
    %1589 = vmatpush1.bf16.msra.mxu0 %v270
    %1590 = vmatprep.subr.bf16.mxu0 0
    %1591 = vmatpush1.bf16.msra.mxu0 %v267
    %1592 = vmatprep.subr.bf16.mxu0 0
    %1593 = vmatpush1.bf16.msra.mxu0 %v264
    %1594 = vmatprep.subr.bf16.mxu0 0
    %1595 = vmatpush1.bf16.msra.mxu0 %v261
    %1596 = vmatprep.subr.bf16.mxu0 0
    %1597 = vmatpush1.bf16.msra.mxu0 %v258
    %1598 = vmatprep.subr.bf16.mxu0 0
    %1599 = vmatpush2.bf16.msra.mxu0 0
    %1600 = vmatprep.subr.bf16.mxu0 0
    %1601 = vmatpush2.bf16.msra.mxu0 0
    %1602 = vmatprep.subr.bf16.mxu0 0
    %1603 = vmatpush2.bf16.msra.mxu0 0
    %1604 = vmatprep.subr.bf16.mxu0 0
    %1605 = vmatpush2.bf16.msra.mxu0 0
    %1606 = vmatprep.subr.bf16.mxu0 0
    %1607 = vmatpush2.bf16.msra.mxu0 0
    %1608 = vmatprep.subr.bf16.mxu0 0
    %1609 = vmatpush2.bf16.msra.mxu0 0
    %1610 = vmatprep.subr.bf16.mxu0 0
    %1611 = vmatpush2.bf16.msra.mxu0 0
    %1612 = vmatprep.subr.bf16.mxu0 0
    %1613 = vmatpush2.bf16.msra.mxu0 0
    %1614 = vmatprep.mubr.bf16.mxu0 0
    %1615 = vmatmul.mubr.bf16.gmra.mxu0 %v1535
    %v1616 = vpop.f32.mrf.mxu0
    %v1617 = vadd.f32 0.0, %v1616
    %v1618 = vpop.f32.mrf.mxu0
    %v1619 = vpop.f32.mrf.mxu0
    %v1620 = vpop.f32.mrf.mxu0
    %1621 = vdwg.mxu0
    %1622 = vmatprep.subr.bf16.mxu0 %v487
    %1623 = vmatpush1.bf16.msra.mxu0 %v486
    %1624 = vmatprep.subr.bf16.mxu0 %v484
    %1625 = vmatpush1.bf16.msra.mxu0 %v483
    %1626 = vmatprep.subr.bf16.mxu0 %v481
    %1627 = vmatpush1.bf16.msra.mxu0 %v480
    %1628 = vmatprep.subr.bf16.mxu0 %v478
    %1629 = vmatpush1.bf16.msra.mxu0 %v477
    %1630 = vmatprep.subr.bf16.mxu0 %v475
    %1631 = vmatpush1.bf16.msra.mxu0 %v474
    %1632 = vmatprep.subr.bf16.mxu0 %v472
    %1633 = vmatpush1.bf16.msra.mxu0 %v471
    %1634 = vmatprep.subr.bf16.mxu0 %v469
    %1635 = vmatpush1.bf16.msra.mxu0 %v468
    %1636 = vmatprep.subr.bf16.mxu0 %v466
    %1637 = vmatpush1.bf16.msra.mxu0 %v465
    %1638 = vmatprep.subr.bf16.mxu0 0
    %1639 = vmatpush2.bf16.msra.mxu0 0
    %1640 = vmatprep.subr.bf16.mxu0 0
    %1641 = vmatpush2.bf16.msra.mxu0 0
    %1642 = vmatprep.subr.bf16.mxu0 0
    %1643 = vmatpush2.bf16.msra.mxu0 0
    %1644 = vmatprep.subr.bf16.mxu0 0
    %1645 = vmatpush2.bf16.msra.mxu0 0
    %1646 = vmatprep.subr.bf16.mxu0 0
    %1647 = vmatpush2.bf16.msra.mxu0 0
    %1648 = vmatprep.subr.bf16.mxu0 0
    %1649 = vmatpush2.bf16.msra.mxu0 0
    %1650 = vmatprep.subr.bf16.mxu0 0
    %1651 = vmatpush2.bf16.msra.mxu0 0
    %1652 = vmatprep.subr.bf16.mxu0 0
    %1653 = vmatpush2.bf16.msra.mxu0 0
    %1654 = vmatprep.mubr.bf16.mxu0 0
    %1655 = vmatmul.mubr.bf16.gmra.mxu0 %v1470
    %v1656 = vpop.f32.mrf.mxu0
    %v1657 = vadd.f32 0.0, %v1656
    %v1658 = vpop.f32.mrf.mxu0
    %v1659 = vadd.f32 0.0, %v1658
    %v1660 = vpop.f32.mrf.mxu0
    %v1661 = vpop.f32.mrf.mxu0
    %1662 = vdwg.mxu0
    %1663 = vmatprep.subr.bf16.mxu0 0
    %1664 = vmatpush1.bf16.msra.mxu0 %v488
    %1665 = vmatprep.subr.bf16.mxu0 0
    %1666 = vmatpush1.bf16.msra.mxu0 %v485
    %1667 = vmatprep.subr.bf16.mxu0 0
    %1668 = vmatpush1.bf16.msra.mxu0 %v482
    %1669 = vmatprep.subr.bf16.mxu0 0
    %1670 = vmatpush1.bf16.msra.mxu0 %v479
    %1671 = vmatprep.subr.bf16.mxu0 0
    %1672 = vmatpush1.bf16.msra.mxu0 %v476
    %1673 = vmatprep.subr.bf16.mxu0 0
    %1674 = vmatpush1.bf16.msra.mxu0 %v473
    %1675 = vmatprep.subr.bf16.mxu0 0
    %1676 = vmatpush1.bf16.msra.mxu0 %v470
    %1677 = vmatprep.subr.bf16.mxu0 0
    %1678 = vmatpush1.bf16.msra.mxu0 %v467
    %1679 = vmatprep.subr.bf16.mxu0 0
    %1680 = vmatpush2.bf16.msra.mxu0 0
    %1681 = vmatprep.subr.bf16.mxu0 0
    %1682 = vmatpush2.bf16.msra.mxu0 0
    %1683 = vmatprep.subr.bf16.mxu0 0
    %1684 = vmatpush2.bf16.msra.mxu0 0
    %1685 = vmatprep.subr.bf16.mxu0 0
    %1686 = vmatpush2.bf16.msra.mxu0 0
    %1687 = vmatprep.subr.bf16.mxu0 0
    %1688 = vmatpush2.bf16.msra.mxu0 0
    %1689 = vmatprep.subr.bf16.mxu0 0
    %1690 = vmatpush2.bf16.msra.mxu0 0
    %1691 = vmatprep.subr.bf16.mxu0 0
    %1692 = vmatpush2.bf16.msra.mxu0 0
    %1693 = vmatprep.subr.bf16.mxu0 0
    %1694 = vmatpush2.bf16.msra.mxu0 0
    %1695 = vmatprep.mubr.bf16.mxu0 0
    %1696 = vmatmul.mubr.bf16.gmra.mxu0 %v1470
    %v1697 = vpop.f32.mrf.mxu0
    %v1698 = vadd.f32 0.0, %v1697
    %v1699 = vpop.f32.mrf.mxu0
    %v1700 = vpop.f32.mrf.mxu0
    %v1701 = vpop.f32.mrf.mxu0
    %1702 = vdwg.mxu0
    %v1703 = vadd.f32 %v1576, %v1657
    %v1704 = vadd.f32 %v1578, %v1659
    %v1705 = vadd.f32 %v1703, %v600
    %v1706 = vadd.f32 %v1704, %v604
    %v1707 = vxor.u32 %v1705, 2147483648
    %v1708 = vxor.u32 %v1706, 2147483648
    %v1709 = vmul.f32 %v1707, 1.442695
    %v1710 = vpow.pop %v1709
    %v1711 = vmul.f32 %v1708, 1.442695
    %v1712 = vpow.pop %v1711
    %v1713 = vadd.f32 %v1710, 1.0
    %v1714 = vadd.f32 %v1712, 1.0
    %v1715 = vrcp.pop %v1713
    %v1716 = vmul.f32 1.0, %v1715
    %v1717 = vrcp.pop %v1714
    %v1718 = vmul.f32 1.0, %v1717
    %v1719 = vadd.f32 %v1617, %v625
    %v1720 = vadd.f32 %v1698, %v632
    %v1721 = vmul.f32 %v1716, %v1720
    %v1722 = vadd.f32 %v1719, %v1721
    %v1723 = vtanh.pop %v1722
    %v1724 = vsub.f32 1.0, %v1718
    %v1725 = vmul.f32 %v1724, %v1723
    %v1726 = vmul.f32 %v1718, %v1469
    %v1727 = vadd.f32 %v1725, %v1726
    %v1728 = vpack.c.bf16 %v1727, %v1727
    %1729 = vmatprep.subr.bf16.mxu0 0
    %1730 = vmatpush1.bf16.msra.mxu0 %v688
    %1731 = vmatprep.subr.bf16.mxu0 0
    %1732 = vmatpush1.bf16.msra.mxu0 %v687
    %1733 = vmatprep.subr.bf16.mxu0 0
    %1734 = vmatpush1.bf16.msra.mxu0 %v686
    %1735 = vmatprep.subr.bf16.mxu0 0
    %1736 = vmatpush1.bf16.msra.mxu0 %v685
    %1737 = vmatprep.subr.bf16.mxu0 0
    %1738 = vmatpush1.bf16.msra.mxu0 %v684
    %1739 = vmatprep.subr.bf16.mxu0 0
    %1740 = vmatpush1.bf16.msra.mxu0 %v683
    %1741 = vmatprep.subr.bf16.mxu0 0
    %1742 = vmatpush1.bf16.msra.mxu0 %v682
    %1743 = vmatprep.subr.bf16.mxu0 0
    %1744 = vmatpush1.bf16.msra.mxu0 %v681
    %1745 = vmatprep.subr.bf16.mxu0 0
    %1746 = vmatpush2.bf16.msra.mxu0 0
    %1747 = vmatprep.subr.bf16.mxu0 0
    %1748 = vmatpush2.bf16.msra.mxu0 0
    %1749 = vmatprep.subr.bf16.mxu0 0
    %1750 = vmatpush2.bf16.msra.mxu0 0
    %1751 = vmatprep.subr.bf16.mxu0 0
    %1752 = vmatpush2.bf16.msra.mxu0 0
    %1753 = vmatprep.subr.bf16.mxu0 0
    %1754 = vmatpush2.bf16.msra.mxu0 0
    %1755 = vmatprep.subr.bf16.mxu0 0
    %1756 = vmatpush2.bf16.msra.mxu0 0
    %1757 = vmatprep.subr.bf16.mxu0 0
    %1758 = vmatpush2.bf16.msra.mxu0 0
    %1759 = vmatprep.subr.bf16.mxu0 0
    %1760 = vmatpush2.bf16.msra.mxu0 0
    %1761 = vmatprep.mubr.bf16.mxu0 0
    %1762 = vmatmul.mubr.bf16.gmra.mxu0 %v1728
    %v1763 = vpop.f32.mrf.mxu0
    %v1764 = vadd.f32 %v647, %v1763
    %v1765 = vpop.f32.mrf.mxu0
    %v1766 = vpop.f32.mrf.mxu0
    %v1767 = vpop.f32.mrf.mxu0
    %1768 = vdwg.mxu0
    %s1769 = scalar_lea.vmem [#allocation2], 32
    %v1770 = vld [vmem:[%s1769] sm:$0xff]
    %v1771 = vadd.f32 %v1764, %v1770
    %1772 = vmax.xlane.f32.xlu0 %v1771
    %v1773 = vpop.xlane.xlu0 %1772
    %vm1774 = vcmp.eq.f32.partialorder %v1771, %v1773
    %v1775 = vsel %vm1774, %v87, 128
    %v1776 = vand.u32 %v1775, 65535
    %v1777 = vshra.s32 %v1775, 16
    %v1778 = vcvt.s32.f32 %v1776
    %v1779 = vcvt.s32.f32 %v1777
    %1780 = vmin.xlane.f32.xlu0 %v1779
    %v1781 = vpop.xlane.xlu0 %1780
    %vm1782 = vcmp.eq.f32.partialorder %v1779, %v1781
    %v1783 = vsel %vm1782, %v1778, inf
    %1784 = vmin.xlane.f32.xlu0 %v1783
    %v1785 = vpop.xlane.xlu0 %1784
    %v1786 = vcvt.f32.s32 %v1785
    %v1787 = vcvt.f32.s32 %v1781
    %v1788 = vshll.u32 %v1787, 16
    %v1789 = vadd.s32 %v1788, %v1786
    %vm1790 = vcmp.eq.s32.totalorder %v87, %v1789
    %v1791 = vsel %vm1790, 1, 0
    %v1792 = vcvt.s32.f32 %v1791
    %v1793 = vpack.c.bf16 %v1792, %v1792
    %v1794 = vlaneseq
    %v1795 = vshrl.u32 %v1794, 7
    %v1796 = vsub.s32 %v87, %v1795
    %v1797 = vrot.slane %v1789, %v1796
    %1798 = vst.msk [vmem:[#allocation10 + $0x4] sm:$0x1] %vm765, %v1797
    %1799 = vmatprep.subr.bf16.mxu0 %v278
    %1800 = vmatpush1.bf16.msra.mxu0 %v277
    %1801 = vmatprep.subr.bf16.mxu0 %v275
    %1802 = vmatpush1.bf16.msra.mxu0 %v274
    %1803 = vmatprep.subr.bf16.mxu0 %v272
    %1804 = vmatpush1.bf16.msra.mxu0 %v271
    %1805 = vmatprep.subr.bf16.mxu0 %v269
    %1806 = vmatpush1.bf16.msra.mxu0 %v268
    %1807 = vmatprep.subr.bf16.mxu0 %v266
    %1808 = vmatpush1.bf16.msra.mxu0 %v265
    %1809 = vmatprep.subr.bf16.mxu0 %v263
    %1810 = vmatpush1.bf16.msra.mxu0 %v262
    %1811 = vmatprep.subr.bf16.mxu0 %v260
    %1812 = vmatpush1.bf16.msra.mxu0 %v259
    %1813 = vmatprep.subr.bf16.mxu0 %v257
    %1814 = vmatpush1.bf16.msra.mxu0 %v256
    %1815 = vmatprep.subr.bf16.mxu0 0
    %1816 = vmatpush2.bf16.msra.mxu0 0
    %1817 = vmatprep.subr.bf16.mxu0 0
    %1818 = vmatpush2.bf16.msra.mxu0 0
    %1819 = vmatprep.subr.bf16.mxu0 0
    %1820 = vmatpush2.bf16.msra.mxu0 0
    %1821 = vmatprep.subr.bf16.mxu0 0
    %1822 = vmatpush2.bf16.msra.mxu0 0
    %1823 = vmatprep.subr.bf16.mxu0 0
    %1824 = vmatpush2.bf16.msra.mxu0 0
    %1825 = vmatprep.subr.bf16.mxu0 0
    %1826 = vmatpush2.bf16.msra.mxu0 0
    %1827 = vmatprep.subr.bf16.mxu0 0
    %1828 = vmatpush2.bf16.msra.mxu0 0
    %1829 = vmatprep.subr.bf16.mxu0 0
    %1830 = vmatpush2.bf16.msra.mxu0 0
    %1831 = vmatprep.mubr.bf16.mxu0 0
    %1832 = vmatmul.mubr.bf16.gmra.mxu0 %v1793
    %v1833 = vpop.f32.mrf.mxu0
    %v1834 = vadd.f32 0.0, %v1833
    %v1835 = vpop.f32.mrf.mxu0
    %v1836 = vadd.f32 0.0, %v1835
    %v1837 = vpop.f32.mrf.mxu0
    %v1838 = vpop.f32.mrf.mxu0
    %1839 = vdwg.mxu0
    %1840 = vmatprep.subr.bf16.mxu0 0
    %1841 = vmatpush1.bf16.msra.mxu0 %v279
    %1842 = vmatprep.subr.bf16.mxu0 0
    %1843 = vmatpush1.bf16.msra.mxu0 %v276
    %1844 = vmatprep.subr.bf16.mxu0 0
    %1845 = vmatpush1.bf16.msra.mxu0 %v273
    %1846 = vmatprep.subr.bf16.mxu0 0
    %1847 = vmatpush1.bf16.msra.mxu0 %v270
    %1848 = vmatprep.subr.bf16.mxu0 0
    %1849 = vmatpush1.bf16.msra.mxu0 %v267
    %1850 = vmatprep.subr.bf16.mxu0 0
    %1851 = vmatpush1.bf16.msra.mxu0 %v264
    %1852 = vmatprep.subr.bf16.mxu0 0
    %1853 = vmatpush1.bf16.msra.mxu0 %v261
    %1854 = vmatprep.subr.bf16.mxu0 0
    %1855 = vmatpush1.bf16.msra.mxu0 %v258
    %1856 = vmatprep.subr.bf16.mxu0 0
    %1857 = vmatpush2.bf16.msra.mxu0 0
    %1858 = vmatprep.subr.bf16.mxu0 0
    %1859 = vmatpush2.bf16.msra.mxu0 0
    %1860 = vmatprep.subr.bf16.mxu0 0
    %1861 = vmatpush2.bf16.msra.mxu0 0
    %1862 = vmatprep.subr.bf16.mxu0 0
    %1863 = vmatpush2.bf16.msra.mxu0 0
    %1864 = vmatprep.subr.bf16.mxu0 0
    %1865 = vmatpush2.bf16.msra.mxu0 0
    %1866 = vmatprep.subr.bf16.mxu0 0
    %1867 = vmatpush2.bf16.msra.mxu0 0
    %1868 = vmatprep.subr.bf16.mxu0 0
    %1869 = vmatpush2.bf16.msra.mxu0 0
    %1870 = vmatprep.subr.bf16.mxu0 0
    %1871 = vmatpush2.bf16.msra.mxu0 0
    %1872 = vmatprep.mubr.bf16.mxu0 0
    %1873 = vmatmul.mubr.bf16.gmra.mxu0 %v1793
    %v1874 = vpop.f32.mrf.mxu0
    %v1875 = vadd.f32 0.0, %v1874
    %v1876 = vpop.f32.mrf.mxu0
    %v1877 = vpop.f32.mrf.mxu0
    %v1878 = vpop.f32.mrf.mxu0
    %1879 = vdwg.mxu0
    %1880 = vmatprep.subr.bf16.mxu0 %v487
    %1881 = vmatpush1.bf16.msra.mxu0 %v486
    %1882 = vmatprep.subr.bf16.mxu0 %v484
    %1883 = vmatpush1.bf16.msra.mxu0 %v483
    %1884 = vmatprep.subr.bf16.mxu0 %v481
    %1885 = vmatpush1.bf16.msra.mxu0 %v480
    %1886 = vmatprep.subr.bf16.mxu0 %v478
    %1887 = vmatpush1.bf16.msra.mxu0 %v477
    %1888 = vmatprep.subr.bf16.mxu0 %v475
    %1889 = vmatpush1.bf16.msra.mxu0 %v474
    %1890 = vmatprep.subr.bf16.mxu0 %v472
    %1891 = vmatpush1.bf16.msra.mxu0 %v471
    %1892 = vmatprep.subr.bf16.mxu0 %v469
    %1893 = vmatpush1.bf16.msra.mxu0 %v468
    %1894 = vmatprep.subr.bf16.mxu0 %v466
    %1895 = vmatpush1.bf16.msra.mxu0 %v465
    %1896 = vmatprep.subr.bf16.mxu0 0
    %1897 = vmatpush2.bf16.msra.mxu0 0
    %1898 = vmatprep.subr.bf16.mxu0 0
    %1899 = vmatpush2.bf16.msra.mxu0 0
    %1900 = vmatprep.subr.bf16.mxu0 0
    %1901 = vmatpush2.bf16.msra.mxu0 0
    %1902 = vmatprep.subr.bf16.mxu0 0
    %1903 = vmatpush2.bf16.msra.mxu0 0
    %1904 = vmatprep.subr.bf16.mxu0 0
    %1905 = vmatpush2.bf16.msra.mxu0 0
    %1906 = vmatprep.subr.bf16.mxu0 0
    %1907 = vmatpush2.bf16.msra.mxu0 0
    %1908 = vmatprep.subr.bf16.mxu0 0
    %1909 = vmatpush2.bf16.msra.mxu0 0
    %1910 = vmatprep.subr.bf16.mxu0 0
    %1911 = vmatpush2.bf16.msra.mxu0 0
    %1912 = vmatprep.mubr.bf16.mxu0 0
    %1913 = vmatmul.mubr.bf16.gmra.mxu0 %v1728
    %v1914 = vpop.f32.mrf.mxu0
    %v1915 = vadd.f32 0.0, %v1914
    %v1916 = vpop.f32.mrf.mxu0
    %v1917 = vadd.f32 0.0, %v1916
    %v1918 = vpop.f32.mrf.mxu0
    %v1919 = vpop.f32.mrf.mxu0
    %1920 = vdwg.mxu0
    %1921 = vmatprep.subr.bf16.mxu0 0
    %1922 = vmatpush1.bf16.msra.mxu0 %v488
    %1923 = vmatprep.subr.bf16.mxu0 0
    %1924 = vmatpush1.bf16.msra.mxu0 %v485
    %1925 = vmatprep.subr.bf16.mxu0 0
    %1926 = vmatpush1.bf16.msra.mxu0 %v482
    %1927 = vmatprep.subr.bf16.mxu0 0
    %1928 = vmatpush1.bf16.msra.mxu0 %v479
    %1929 = vmatprep.subr.bf16.mxu0 0
    %1930 = vmatpush1.bf16.msra.mxu0 %v476
    %1931 = vmatprep.subr.bf16.mxu0 0
    %1932 = vmatpush1.bf16.msra.mxu0 %v473
    %1933 = vmatprep.subr.bf16.mxu0 0
    %1934 = vmatpush1.bf16.msra.mxu0 %v470
    %1935 = vmatprep.subr.bf16.mxu0 0
    %1936 = vmatpush1.bf16.msra.mxu0 %v467
    %1937 = vmatprep.subr.bf16.mxu0 0
    %1938 = vmatpush2.bf16.msra.mxu0 0
    %1939 = vmatprep.subr.bf16.mxu0 0
    %1940 = vmatpush2.bf16.msra.mxu0 0
    %1941 = vmatprep.subr.bf16.mxu0 0
    %1942 = vmatpush2.bf16.msra.mxu0 0
    %1943 = vmatprep.subr.bf16.mxu0 0
    %1944 = vmatpush2.bf16.msra.mxu0 0
    %1945 = vmatprep.subr.bf16.mxu0 0
    %1946 = vmatpush2.bf16.msra.mxu0 0
    %1947 = vmatprep.subr.bf16.mxu0 0
    %1948 = vmatpush2.bf16.msra.mxu0 0
    %1949 = vmatprep.subr.bf16.mxu0 0
    %1950 = vmatpush2.bf16.msra.mxu0 0
    %1951 = vmatprep.subr.bf16.mxu0 0
    %1952 = vmatpush2.bf16.msra.mxu0 0
    %1953 = vmatprep.mubr.bf16.mxu0 0
    %1954 = vmatmul.mubr.bf16.gmra.mxu0 %v1728
    %v1955 = vpop.f32.mrf.mxu0
    %v1956 = vadd.f32 0.0, %v1955
    %v1957 = vpop.f32.mrf.mxu0
    %v1958 = vpop.f32.mrf.mxu0
    %v1959 = vpop.f32.mrf.mxu0
    %1960 = vdwg.mxu0
    %v1961 = vadd.f32 %v1834, %v1915
    %v1962 = vadd.f32 %v1836, %v1917
    %v1963 = vadd.f32 %v1961, %v600
    %v1964 = vadd.f32 %v1962, %v604
    %v1965 = vxor.u32 %v1963, 2147483648
    %v1966 = vxor.u32 %v1964, 2147483648
    %v1967 = vmul.f32 %v1965, 1.442695
    %v1968 = vpow.pop %v1967
    %v1969 = vmul.f32 %v1966, 1.442695
    %v1970 = vpow.pop %v1969
    %v1971 = vadd.f32 %v1968, 1.0
    %v1972 = vadd.f32 %v1970, 1.0
    %v1973 = vrcp.pop %v1971
    %v1974 = vmul.f32 1.0, %v1973
    %v1975 = vrcp.pop %v1972
    %v1976 = vmul.f32 1.0, %v1975
    %v1977 = vadd.f32 %v1875, %v625
    %v1978 = vadd.f32 %v1956, %v632
    %v1979 = vmul.f32 %v1974, %v1978
    %v1980 = vadd.f32 %v1977, %v1979
    %v1981 = vtanh.pop %v1980
    %v1982 = vsub.f32 1.0, %v1976
    %v1983 = vmul.f32 %v1982, %v1981
    %v1984 = vmul.f32 %v1976, %v1727
    %v1985 = vadd.f32 %v1983, %v1984
    %v1986 = vpack.c.bf16 %v1985, %v1985
    %1987 = vmatprep.subr.bf16.mxu0 0
    %1988 = vmatpush1.bf16.msra.mxu0 %v688
    %1989 = vmatprep.subr.bf16.mxu0 0
    %1990 = vmatpush1.bf16.msra.mxu0 %v687
    %1991 = vmatprep.subr.bf16.mxu0 0
    %1992 = vmatpush1.bf16.msra.mxu0 %v686
    %1993 = vmatprep.subr.bf16.mxu0 0
    %1994 = vmatpush1.bf16.msra.mxu0 %v685
    %1995 = vmatprep.subr.bf16.mxu0 0
    %1996 = vmatpush1.bf16.msra.mxu0 %v684
    %1997 = vmatprep.subr.bf16.mxu0 0
    %1998 = vmatpush1.bf16.msra.mxu0 %v683
    %1999 = vmatprep.subr.bf16.mxu0 0
    %2000 = vmatpush1.bf16.msra.mxu0 %v682
    %2001 = vmatprep.subr.bf16.mxu0 0
    %2002 = vmatpush1.bf16.msra.mxu0 %v681
    %2003 = vmatprep.subr.bf16.mxu0 0
    %2004 = vmatpush2.bf16.msra.mxu0 0
    %2005 = vmatprep.subr.bf16.mxu0 0
    %2006 = vmatpush2.bf16.msra.mxu0 0
    %2007 = vmatprep.subr.bf16.mxu0 0
    %2008 = vmatpush2.bf16.msra.mxu0 0
    %2009 = vmatprep.subr.bf16.mxu0 0
    %2010 = vmatpush2.bf16.msra.mxu0 0
    %2011 = vmatprep.subr.bf16.mxu0 0
    %2012 = vmatpush2.bf16.msra.mxu0 0
    %2013 = vmatprep.subr.bf16.mxu0 0
    %2014 = vmatpush2.bf16.msra.mxu0 0
    %2015 = vmatprep.subr.bf16.mxu0 0
    %2016 = vmatpush2.bf16.msra.mxu0 0
    %2017 = vmatprep.subr.bf16.mxu0 0
    %2018 = vmatpush2.bf16.msra.mxu0 0
    %2019 = vmatprep.mubr.bf16.mxu0 0
    %2020 = vmatmul.mubr.bf16.gmra.mxu0 %v1986
    %v2021 = vpop.f32.mrf.mxu0
    %v2022 = vadd.f32 %v647, %v2021
    %v2023 = vpop.f32.mrf.mxu0
    %v2024 = vpop.f32.mrf.mxu0
    %v2025 = vpop.f32.mrf.mxu0
    %2026 = vdwg.mxu0
    %s2027 = scalar_lea.vmem [#allocation2], 40
    %v2028 = vld [vmem:[%s2027] sm:$0xff]
    %v2029 = vadd.f32 %v2022, %v2028
    %2030 = vmax.xlane.f32.xlu0 %v2029
    %v2031 = vpop.xlane.xlu0 %2030
    %vm2032 = vcmp.eq.f32.partialorder %v2029, %v2031
    %v2033 = vsel %vm2032, %v87, 128
    %v2034 = vand.u32 %v2033, 65535
    %v2035 = vshra.s32 %v2033, 16
    %v2036 = vcvt.s32.f32 %v2034
    %v2037 = vcvt.s32.f32 %v2035
    %2038 = vmin.xlane.f32.xlu0 %v2037
    %v2039 = vpop.xlane.xlu0 %2038
    %vm2040 = vcmp.eq.f32.partialorder %v2037, %v2039
    %v2041 = vsel %vm2040, %v2036, inf
    %2042 = vmin.xlane.f32.xlu0 %v2041
    %v2043 = vpop.xlane.xlu0 %2042
    %v2044 = vcvt.f32.s32 %v2043
    %v2045 = vcvt.f32.s32 %v2039
    %v2046 = vshll.u32 %v2045, 16
    %v2047 = vadd.s32 %v2046, %v2044
    %vm2048 = vcmp.eq.s32.totalorder %v87, %v2047
    %v2049 = vsel %vm2048, 1, 0
    %v2050 = vcvt.s32.f32 %v2049
    %v2051 = vpack.c.bf16 %v2050, %v2050
    %v2052 = vlaneseq
    %v2053 = vshrl.u32 %v2052, 7
    %v2054 = vsub.s32 %v87, %v2053
    %v2055 = vrot.slane %v2047, %v2054
    %2056 = vst.msk [vmem:[#allocation10 + $0x5] sm:$0x1] %vm765, %v2055
    %2057 = vmatprep.subr.bf16.mxu0 %v278
    %2058 = vmatpush1.bf16.msra.mxu0 %v277
    %2059 = vmatprep.subr.bf16.mxu0 %v275
    %2060 = vmatpush1.bf16.msra.mxu0 %v274
    %2061 = vmatprep.subr.bf16.mxu0 %v272
    %2062 = vmatpush1.bf16.msra.mxu0 %v271
    %2063 = vmatprep.subr.bf16.mxu0 %v269
    %2064 = vmatpush1.bf16.msra.mxu0 %v268
    %2065 = vmatprep.subr.bf16.mxu0 %v266
    %2066 = vmatpush1.bf16.msra.mxu0 %v265
    %2067 = vmatprep.subr.bf16.mxu0 %v263
    %2068 = vmatpush1.bf16.msra.mxu0 %v262
    %2069 = vmatprep.subr.bf16.mxu0 %v260
    %2070 = vmatpush1.bf16.msra.mxu0 %v259
    %2071 = vmatprep.subr.bf16.mxu0 %v257
    %2072 = vmatpush1.bf16.msra.mxu0 %v256
    %2073 = vmatprep.subr.bf16.mxu0 0
    %2074 = vmatpush2.bf16.msra.mxu0 0
    %2075 = vmatprep.subr.bf16.mxu0 0
    %2076 = vmatpush2.bf16.msra.mxu0 0
    %2077 = vmatprep.subr.bf16.mxu0 0
    %2078 = vmatpush2.bf16.msra.mxu0 0
    %2079 = vmatprep.subr.bf16.mxu0 0
    %2080 = vmatpush2.bf16.msra.mxu0 0
    %2081 = vmatprep.subr.bf16.mxu0 0
    %2082 = vmatpush2.bf16.msra.mxu0 0
    %2083 = vmatprep.subr.bf16.mxu0 0
    %2084 = vmatpush2.bf16.msra.mxu0 0
    %2085 = vmatprep.subr.bf16.mxu0 0
    %2086 = vmatpush2.bf16.msra.mxu0 0
    %2087 = vmatprep.subr.bf16.mxu0 0
    %2088 = vmatpush2.bf16.msra.mxu0 0
    %2089 = vmatprep.mubr.bf16.mxu0 0
    %2090 = vmatmul.mubr.bf16.gmra.mxu0 %v2051
    %v2091 = vpop.f32.mrf.mxu0
    %v2092 = vadd.f32 0.0, %v2091
    %v2093 = vpop.f32.mrf.mxu0
    %v2094 = vadd.f32 0.0, %v2093
    %v2095 = vpop.f32.mrf.mxu0
    %v2096 = vpop.f32.mrf.mxu0
    %2097 = vdwg.mxu0
    %2098 = vmatprep.subr.bf16.mxu0 0
    %2099 = vmatpush1.bf16.msra.mxu0 %v279
    %2100 = vmatprep.subr.bf16.mxu0 0
    %2101 = vmatpush1.bf16.msra.mxu0 %v276
    %2102 = vmatprep.subr.bf16.mxu0 0
    %2103 = vmatpush1.bf16.msra.mxu0 %v273
    %2104 = vmatprep.subr.bf16.mxu0 0
    %2105 = vmatpush1.bf16.msra.mxu0 %v270
    %2106 = vmatprep.subr.bf16.mxu0 0
    %2107 = vmatpush1.bf16.msra.mxu0 %v267
    %2108 = vmatprep.subr.bf16.mxu0 0
    %2109 = vmatpush1.bf16.msra.mxu0 %v264
    %2110 = vmatprep.subr.bf16.mxu0 0
    %2111 = vmatpush1.bf16.msra.mxu0 %v261
    %2112 = vmatprep.subr.bf16.mxu0 0
    %2113 = vmatpush1.bf16.msra.mxu0 %v258
    %2114 = vmatprep.subr.bf16.mxu0 0
    %2115 = vmatpush2.bf16.msra.mxu0 0
    %2116 = vmatprep.subr.bf16.mxu0 0
    %2117 = vmatpush2.bf16.msra.mxu0 0
    %2118 = vmatprep.subr.bf16.mxu0 0
    %2119 = vmatpush2.bf16.msra.mxu0 0
    %2120 = vmatprep.subr.bf16.mxu0 0
    %2121 = vmatpush2.bf16.msra.mxu0 0
    %2122 = vmatprep.subr.bf16.mxu0 0
    %2123 = vmatpush2.bf16.msra.mxu0 0
    %2124 = vmatprep.subr.bf16.mxu0 0
    %2125 = vmatpush2.bf16.msra.mxu0 0
    %2126 = vmatprep.subr.bf16.mxu0 0
    %2127 = vmatpush2.bf16.msra.mxu0 0
    %2128 = vmatprep.subr.bf16.mxu0 0
    %2129 = vmatpush2.bf16.msra.mxu0 0
    %2130 = vmatprep.mubr.bf16.mxu0 0
    %2131 = vmatmul.mubr.bf16.gmra.mxu0 %v2051
    %v2132 = vpop.f32.mrf.mxu0
    %v2133 = vadd.f32 0.0, %v2132
    %v2134 = vpop.f32.mrf.mxu0
    %v2135 = vpop.f32.mrf.mxu0
    %v2136 = vpop.f32.mrf.mxu0
    %2137 = vdwg.mxu0
    %2138 = vmatprep.subr.bf16.mxu0 %v487
    %2139 = vmatpush1.bf16.msra.mxu0 %v486
    %2140 = vmatprep.subr.bf16.mxu0 %v484
    %2141 = vmatpush1.bf16.msra.mxu0 %v483
    %2142 = vmatprep.subr.bf16.mxu0 %v481
    %2143 = vmatpush1.bf16.msra.mxu0 %v480
    %2144 = vmatprep.subr.bf16.mxu0 %v478
    %2145 = vmatpush1.bf16.msra.mxu0 %v477
    %2146 = vmatprep.subr.bf16.mxu0 %v475
    %2147 = vmatpush1.bf16.msra.mxu0 %v474
    %2148 = vmatprep.subr.bf16.mxu0 %v472
    %2149 = vmatpush1.bf16.msra.mxu0 %v471
    %2150 = vmatprep.subr.bf16.mxu0 %v469
    %2151 = vmatpush1.bf16.msra.mxu0 %v468
    %2152 = vmatprep.subr.bf16.mxu0 %v466
    %2153 = vmatpush1.bf16.msra.mxu0 %v465
    %2154 = vmatprep.subr.bf16.mxu0 0
    %2155 = vmatpush2.bf16.msra.mxu0 0
    %2156 = vmatprep.subr.bf16.mxu0 0
    %2157 = vmatpush2.bf16.msra.mxu0 0
    %2158 = vmatprep.subr.bf16.mxu0 0
    %2159 = vmatpush2.bf16.msra.mxu0 0
    %2160 = vmatprep.subr.bf16.mxu0 0
    %2161 = vmatpush2.bf16.msra.mxu0 0
    %2162 = vmatprep.subr.bf16.mxu0 0
    %2163 = vmatpush2.bf16.msra.mxu0 0
    %2164 = vmatprep.subr.bf16.mxu0 0
    %2165 = vmatpush2.bf16.msra.mxu0 0
    %2166 = vmatprep.subr.bf16.mxu0 0
    %2167 = vmatpush2.bf16.msra.mxu0 0
    %2168 = vmatprep.subr.bf16.mxu0 0
    %2169 = vmatpush2.bf16.msra.mxu0 0
    %2170 = vmatprep.mubr.bf16.mxu0 0
    %2171 = vmatmul.mubr.bf16.gmra.mxu0 %v1986
    %v2172 = vpop.f32.mrf.mxu0
    %v2173 = vadd.f32 0.0, %v2172
    %v2174 = vpop.f32.mrf.mxu0
    %v2175 = vadd.f32 0.0, %v2174
    %v2176 = vpop.f32.mrf.mxu0
    %v2177 = vpop.f32.mrf.mxu0
    %2178 = vdwg.mxu0
    %2179 = vmatprep.subr.bf16.mxu0 0
    %2180 = vmatpush1.bf16.msra.mxu0 %v488
    %2181 = vmatprep.subr.bf16.mxu0 0
    %2182 = vmatpush1.bf16.msra.mxu0 %v485
    %2183 = vmatprep.subr.bf16.mxu0 0
    %2184 = vmatpush1.bf16.msra.mxu0 %v482
    %2185 = vmatprep.subr.bf16.mxu0 0
    %2186 = vmatpush1.bf16.msra.mxu0 %v479
    %2187 = vmatprep.subr.bf16.mxu0 0
    %2188 = vmatpush1.bf16.msra.mxu0 %v476
    %2189 = vmatprep.subr.bf16.mxu0 0
    %2190 = vmatpush1.bf16.msra.mxu0 %v473
    %2191 = vmatprep.subr.bf16.mxu0 0
    %2192 = vmatpush1.bf16.msra.mxu0 %v470
    %2193 = vmatprep.subr.bf16.mxu0 0
    %2194 = vmatpush1.bf16.msra.mxu0 %v467
    %2195 = vmatprep.subr.bf16.mxu0 0
    %2196 = vmatpush2.bf16.msra.mxu0 0
    %2197 = vmatprep.subr.bf16.mxu0 0
    %2198 = vmatpush2.bf16.msra.mxu0 0
    %2199 = vmatprep.subr.bf16.mxu0 0
    %2200 = vmatpush2.bf16.msra.mxu0 0
    %2201 = vmatprep.subr.bf16.mxu0 0
    %2202 = vmatpush2.bf16.msra.mxu0 0
    %2203 = vmatprep.subr.bf16.mxu0 0
    %2204 = vmatpush2.bf16.msra.mxu0 0
    %2205 = vmatprep.subr.bf16.mxu0 0
    %2206 = vmatpush2.bf16.msra.mxu0 0
    %2207 = vmatprep.subr.bf16.mxu0 0
    %2208 = vmatpush2.bf16.msra.mxu0 0
    %2209 = vmatprep.subr.bf16.mxu0 0
    %2210 = vmatpush2.bf16.msra.mxu0 0
    %2211 = vmatprep.mubr.bf16.mxu0 0
    %2212 = vmatmul.mubr.bf16.gmra.mxu0 %v1986
    %v2213 = vpop.f32.mrf.mxu0
    %v2214 = vadd.f32 0.0, %v2213
    %v2215 = vpop.f32.mrf.mxu0
    %v2216 = vpop.f32.mrf.mxu0
    %v2217 = vpop.f32.mrf.mxu0
    %2218 = vdwg.mxu0
    %v2219 = vadd.f32 %v2092, %v2173
    %v2220 = vadd.f32 %v2094, %v2175
    %v2221 = vadd.f32 %v2219, %v600
    %v2222 = vadd.f32 %v2220, %v604
    %v2223 = vxor.u32 %v2221, 2147483648
    %v2224 = vxor.u32 %v2222, 2147483648
    %v2225 = vmul.f32 %v2223, 1.442695
    %v2226 = vpow.pop %v2225
    %v2227 = vmul.f32 %v2224, 1.442695
    %v2228 = vpow.pop %v2227
    %v2229 = vadd.f32 %v2226, 1.0
    %v2230 = vadd.f32 %v2228, 1.0
    %v2231 = vrcp.pop %v2229
    %v2232 = vmul.f32 1.0, %v2231
    %v2233 = vrcp.pop %v2230
    %v2234 = vmul.f32 1.0, %v2233
    %v2235 = vadd.f32 %v2133, %v625
    %v2236 = vadd.f32 %v2214, %v632
    %v2237 = vmul.f32 %v2232, %v2236
    %v2238 = vadd.f32 %v2235, %v2237
    %v2239 = vtanh.pop %v2238
    %v2240 = vsub.f32 1.0, %v2234
    %v2241 = vmul.f32 %v2240, %v2239
    %v2242 = vmul.f32 %v2234, %v1985
    %v2243 = vadd.f32 %v2241, %v2242
    %v2244 = vpack.c.bf16 %v2243, %v2243
    %2245 = vmatprep.subr.bf16.mxu0 0
    %2246 = vmatpush1.bf16.msra.mxu0 %v688
    %2247 = vmatprep.subr.bf16.mxu0 0
    %2248 = vmatpush1.bf16.msra.mxu0 %v687
    %2249 = vmatprep.subr.bf16.mxu0 0
    %2250 = vmatpush1.bf16.msra.mxu0 %v686
    %2251 = vmatprep.subr.bf16.mxu0 0
    %2252 = vmatpush1.bf16.msra.mxu0 %v685
    %2253 = vmatprep.subr.bf16.mxu0 0
    %2254 = vmatpush1.bf16.msra.mxu0 %v684
    %2255 = vmatprep.subr.bf16.mxu0 0
    %2256 = vmatpush1.bf16.msra.mxu0 %v683
    %2257 = vmatprep.subr.bf16.mxu0 0
    %2258 = vmatpush1.bf16.msra.mxu0 %v682
    %2259 = vmatprep.subr.bf16.mxu0 0
    %2260 = vmatpush1.bf16.msra.mxu0 %v681
    %2261 = vmatprep.subr.bf16.mxu0 0
    %2262 = vmatpush2.bf16.msra.mxu0 0
    %2263 = vmatprep.subr.bf16.mxu0 0
    %2264 = vmatpush2.bf16.msra.mxu0 0
    %2265 = vmatprep.subr.bf16.mxu0 0
    %2266 = vmatpush2.bf16.msra.mxu0 0
    %2267 = vmatprep.subr.bf16.mxu0 0
    %2268 = vmatpush2.bf16.msra.mxu0 0
    %2269 = vmatprep.subr.bf16.mxu0 0
    %2270 = vmatpush2.bf16.msra.mxu0 0
    %2271 = vmatprep.subr.bf16.mxu0 0
    %2272 = vmatpush2.bf16.msra.mxu0 0
    %2273 = vmatprep.subr.bf16.mxu0 0
    %2274 = vmatpush2.bf16.msra.mxu0 0
    %2275 = vmatprep.subr.bf16.mxu0 0
    %2276 = vmatpush2.bf16.msra.mxu0 0
    %2277 = vmatprep.mubr.bf16.mxu0 0
    %2278 = vmatmul.mubr.bf16.gmra.mxu0 %v2244
    %v2279 = vpop.f32.mrf.mxu0
    %v2280 = vadd.f32 %v647, %v2279
    %v2281 = vpop.f32.mrf.mxu0
    %v2282 = vpop.f32.mrf.mxu0
    %v2283 = vpop.f32.mrf.mxu0
    %2284 = vdwg.mxu0
    %s2285 = scalar_lea.vmem [#allocation2], 48
    %v2286 = vld [vmem:[%s2285] sm:$0xff]
    %v2287 = vadd.f32 %v2280, %v2286
    %2288 = vmax.xlane.f32.xlu0 %v2287
    %v2289 = vpop.xlane.xlu0 %2288
    %vm2290 = vcmp.eq.f32.partialorder %v2287, %v2289
    %v2291 = vsel %vm2290, %v87, 128
    %v2292 = vand.u32 %v2291, 65535
    %v2293 = vshra.s32 %v2291, 16
    %v2294 = vcvt.s32.f32 %v2292
    %v2295 = vcvt.s32.f32 %v2293
    %2296 = vmin.xlane.f32.xlu0 %v2295
    %v2297 = vpop.xlane.xlu0 %2296
    %vm2298 = vcmp.eq.f32.partialorder %v2295, %v2297
    %v2299 = vsel %vm2298, %v2294, inf
    %2300 = vmin.xlane.f32.xlu0 %v2299
    %v2301 = vpop.xlane.xlu0 %2300
    %v2302 = vcvt.f32.s32 %v2301
    %v2303 = vcvt.f32.s32 %v2297
    %v2304 = vshll.u32 %v2303, 16
    %v2305 = vadd.s32 %v2304, %v2302
    %vm2306 = vcmp.eq.s32.totalorder %v87, %v2305
    %v2307 = vsel %vm2306, 1, 0
    %v2308 = vcvt.s32.f32 %v2307
    %v2309 = vpack.c.bf16 %v2308, %v2308
    %v2310 = vlaneseq
    %v2311 = vshrl.u32 %v2310, 7
    %v2312 = vsub.s32 %v87, %v2311
    %v2313 = vrot.slane %v2305, %v2312
    %2314 = vst.msk [vmem:[#allocation10 + $0x6] sm:$0x1] %vm765, %v2313
    %2315 = vmatprep.subr.bf16.mxu0 %v278
    %2316 = vmatpush1.bf16.msra.mxu0 %v277
    %2317 = vmatprep.subr.bf16.mxu0 %v275
    %2318 = vmatpush1.bf16.msra.mxu0 %v274
    %2319 = vmatprep.subr.bf16.mxu0 %v272
    %2320 = vmatpush1.bf16.msra.mxu0 %v271
    %2321 = vmatprep.subr.bf16.mxu0 %v269
    %2322 = vmatpush1.bf16.msra.mxu0 %v268
    %2323 = vmatprep.subr.bf16.mxu0 %v266
    %2324 = vmatpush1.bf16.msra.mxu0 %v265
    %2325 = vmatprep.subr.bf16.mxu0 %v263
    %2326 = vmatpush1.bf16.msra.mxu0 %v262
    %2327 = vmatprep.subr.bf16.mxu0 %v260
    %2328 = vmatpush1.bf16.msra.mxu0 %v259
    %2329 = vmatprep.subr.bf16.mxu0 %v257
    %2330 = vmatpush1.bf16.msra.mxu0 %v256
    %2331 = vmatprep.subr.bf16.mxu0 0
    %2332 = vmatpush2.bf16.msra.mxu0 0
    %2333 = vmatprep.subr.bf16.mxu0 0
    %2334 = vmatpush2.bf16.msra.mxu0 0
    %2335 = vmatprep.subr.bf16.mxu0 0
    %2336 = vmatpush2.bf16.msra.mxu0 0
    %2337 = vmatprep.subr.bf16.mxu0 0
    %2338 = vmatpush2.bf16.msra.mxu0 0
    %2339 = vmatprep.subr.bf16.mxu0 0
    %2340 = vmatpush2.bf16.msra.mxu0 0
    %2341 = vmatprep.subr.bf16.mxu0 0
    %2342 = vmatpush2.bf16.msra.mxu0 0
    %2343 = vmatprep.subr.bf16.mxu0 0
    %2344 = vmatpush2.bf16.msra.mxu0 0
    %2345 = vmatprep.subr.bf16.mxu0 0
    %2346 = vmatpush2.bf16.msra.mxu0 0
    %2347 = vmatprep.mubr.bf16.mxu0 0
    %2348 = vmatmul.mubr.bf16.gmra.mxu0 %v2309
    %v2349 = vpop.f32.mrf.mxu0
    %v2350 = vadd.f32 0.0, %v2349
    %v2351 = vpop.f32.mrf.mxu0
    %v2352 = vadd.f32 0.0, %v2351
    %v2353 = vpop.f32.mrf.mxu0
    %v2354 = vpop.f32.mrf.mxu0
    %2355 = vdwg.mxu0
    %2356 = vmatprep.subr.bf16.mxu0 0
    %2357 = vmatpush1.bf16.msra.mxu0 %v279
    %2358 = vmatprep.subr.bf16.mxu0 0
    %2359 = vmatpush1.bf16.msra.mxu0 %v276
    %2360 = vmatprep.subr.bf16.mxu0 0
    %2361 = vmatpush1.bf16.msra.mxu0 %v273
    %2362 = vmatprep.subr.bf16.mxu0 0
    %2363 = vmatpush1.bf16.msra.mxu0 %v270
    %2364 = vmatprep.subr.bf16.mxu0 0
    %2365 = vmatpush1.bf16.msra.mxu0 %v267
    %2366 = vmatprep.subr.bf16.mxu0 0
    %2367 = vmatpush1.bf16.msra.mxu0 %v264
    %2368 = vmatprep.subr.bf16.mxu0 0
    %2369 = vmatpush1.bf16.msra.mxu0 %v261
    %2370 = vmatprep.subr.bf16.mxu0 0
    %2371 = vmatpush1.bf16.msra.mxu0 %v258
    %2372 = vmatprep.subr.bf16.mxu0 0
    %2373 = vmatpush2.bf16.msra.mxu0 0
    %2374 = vmatprep.subr.bf16.mxu0 0
    %2375 = vmatpush2.bf16.msra.mxu0 0
    %2376 = vmatprep.subr.bf16.mxu0 0
    %2377 = vmatpush2.bf16.msra.mxu0 0
    %2378 = vmatprep.subr.bf16.mxu0 0
    %2379 = vmatpush2.bf16.msra.mxu0 0
    %2380 = vmatprep.subr.bf16.mxu0 0
    %2381 = vmatpush2.bf16.msra.mxu0 0
    %2382 = vmatprep.subr.bf16.mxu0 0
    %2383 = vmatpush2.bf16.msra.mxu0 0
    %2384 = vmatprep.subr.bf16.mxu0 0
    %2385 = vmatpush2.bf16.msra.mxu0 0
    %2386 = vmatprep.subr.bf16.mxu0 0
    %2387 = vmatpush2.bf16.msra.mxu0 0
    %2388 = vmatprep.mubr.bf16.mxu0 0
    %2389 = vmatmul.mubr.bf16.gmra.mxu0 %v2309
    %v2390 = vpop.f32.mrf.mxu0
    %v2391 = vadd.f32 0.0, %v2390
    %v2392 = vpop.f32.mrf.mxu0
    %v2393 = vpop.f32.mrf.mxu0
    %v2394 = vpop.f32.mrf.mxu0
    %2395 = vdwg.mxu0
    %2396 = vmatprep.subr.bf16.mxu0 %v487
    %2397 = vmatpush1.bf16.msra.mxu0 %v486
    %2398 = vmatprep.subr.bf16.mxu0 %v484
    %2399 = vmatpush1.bf16.msra.mxu0 %v483
    %2400 = vmatprep.subr.bf16.mxu0 %v481
    %2401 = vmatpush1.bf16.msra.mxu0 %v480
    %2402 = vmatprep.subr.bf16.mxu0 %v478
    %2403 = vmatpush1.bf16.msra.mxu0 %v477
    %2404 = vmatprep.subr.bf16.mxu0 %v475
    %2405 = vmatpush1.bf16.msra.mxu0 %v474
    %2406 = vmatprep.subr.bf16.mxu0 %v472
    %2407 = vmatpush1.bf16.msra.mxu0 %v471
    %2408 = vmatprep.subr.bf16.mxu0 %v469
    %2409 = vmatpush1.bf16.msra.mxu0 %v468
    %2410 = vmatprep.subr.bf16.mxu0 %v466
    %2411 = vmatpush1.bf16.msra.mxu0 %v465
    %2412 = vmatprep.subr.bf16.mxu0 0
    %2413 = vmatpush2.bf16.msra.mxu0 0
    %2414 = vmatprep.subr.bf16.mxu0 0
    %2415 = vmatpush2.bf16.msra.mxu0 0
    %2416 = vmatprep.subr.bf16.mxu0 0
    %2417 = vmatpush2.bf16.msra.mxu0 0
    %2418 = vmatprep.subr.bf16.mxu0 0
    %2419 = vmatpush2.bf16.msra.mxu0 0
    %2420 = vmatprep.subr.bf16.mxu0 0
    %2421 = vmatpush2.bf16.msra.mxu0 0
    %2422 = vmatprep.subr.bf16.mxu0 0
    %2423 = vmatpush2.bf16.msra.mxu0 0
    %2424 = vmatprep.subr.bf16.mxu0 0
    %2425 = vmatpush2.bf16.msra.mxu0 0
    %2426 = vmatprep.subr.bf16.mxu0 0
    %2427 = vmatpush2.bf16.msra.mxu0 0
    %2428 = vmatprep.mubr.bf16.mxu0 0
    %2429 = vmatmul.mubr.bf16.gmra.mxu0 %v2244
    %v2430 = vpop.f32.mrf.mxu0
    %v2431 = vadd.f32 0.0, %v2430
    %v2432 = vpop.f32.mrf.mxu0
    %v2433 = vadd.f32 0.0, %v2432
    %v2434 = vpop.f32.mrf.mxu0
    %v2435 = vpop.f32.mrf.mxu0
    %2436 = vdwg.mxu0
    %2437 = vmatprep.subr.bf16.mxu0 0
    %2438 = vmatpush1.bf16.msra.mxu0 %v488
    %2439 = vmatprep.subr.bf16.mxu0 0
    %2440 = vmatpush1.bf16.msra.mxu0 %v485
    %2441 = vmatprep.subr.bf16.mxu0 0
    %2442 = vmatpush1.bf16.msra.mxu0 %v482
    %2443 = vmatprep.subr.bf16.mxu0 0
    %2444 = vmatpush1.bf16.msra.mxu0 %v479
    %2445 = vmatprep.subr.bf16.mxu0 0
    %2446 = vmatpush1.bf16.msra.mxu0 %v476
    %2447 = vmatprep.subr.bf16.mxu0 0
    %2448 = vmatpush1.bf16.msra.mxu0 %v473
    %2449 = vmatprep.subr.bf16.mxu0 0
    %2450 = vmatpush1.bf16.msra.mxu0 %v470
    %2451 = vmatprep.subr.bf16.mxu0 0
    %2452 = vmatpush1.bf16.msra.mxu0 %v467
    %2453 = vmatprep.subr.bf16.mxu0 0
    %2454 = vmatpush2.bf16.msra.mxu0 0
    %2455 = vmatprep.subr.bf16.mxu0 0
    %2456 = vmatpush2.bf16.msra.mxu0 0
    %2457 = vmatprep.subr.bf16.mxu0 0
    %2458 = vmatpush2.bf16.msra.mxu0 0
    %2459 = vmatprep.subr.bf16.mxu0 0
    %2460 = vmatpush2.bf16.msra.mxu0 0
    %2461 = vmatprep.subr.bf16.mxu0 0
    %2462 = vmatpush2.bf16.msra.mxu0 0
    %2463 = vmatprep.subr.bf16.mxu0 0
    %2464 = vmatpush2.bf16.msra.mxu0 0
    %2465 = vmatprep.subr.bf16.mxu0 0
    %2466 = vmatpush2.bf16.msra.mxu0 0
    %2467 = vmatprep.subr.bf16.mxu0 0
    %2468 = vmatpush2.bf16.msra.mxu0 0
    %2469 = vmatprep.mubr.bf16.mxu0 0
    %2470 = vmatmul.mubr.bf16.gmra.mxu0 %v2244
    %v2471 = vpop.f32.mrf.mxu0
    %v2472 = vadd.f32 0.0, %v2471
    %v2473 = vpop.f32.mrf.mxu0
    %v2474 = vpop.f32.mrf.mxu0
    %v2475 = vpop.f32.mrf.mxu0
    %2476 = vdwg.mxu0
    %v2477 = vadd.f32 %v2350, %v2431
    %v2478 = vadd.f32 %v2352, %v2433
    %v2479 = vadd.f32 %v2477, %v600
    %v2480 = vadd.f32 %v2478, %v604
    %v2481 = vxor.u32 %v2479, 2147483648
    %v2482 = vxor.u32 %v2480, 2147483648
    %v2483 = vmul.f32 %v2481, 1.442695
    %v2484 = vpow.pop %v2483
    %v2485 = vmul.f32 %v2482, 1.442695
    %v2486 = vpow.pop %v2485
    %v2487 = vadd.f32 %v2484, 1.0
    %v2488 = vadd.f32 %v2486, 1.0
    %v2489 = vrcp.pop %v2487
    %v2490 = vmul.f32 1.0, %v2489
    %v2491 = vrcp.pop %v2488
    %v2492 = vmul.f32 1.0, %v2491
    %v2493 = vadd.f32 %v2391, %v625
    %v2494 = vadd.f32 %v2472, %v632
    %v2495 = vmul.f32 %v2490, %v2494
    %v2496 = vadd.f32 %v2493, %v2495
    %v2497 = vtanh.pop %v2496
    %v2498 = vsub.f32 1.0, %v2492
    %v2499 = vmul.f32 %v2498, %v2497
    %v2500 = vmul.f32 %v2492, %v2243
    %v2501 = vadd.f32 %v2499, %v2500
    %v2502 = vpack.c.bf16 %v2501, %v2501
    %2503 = vmatprep.subr.bf16.mxu0 0
    %2504 = vmatpush1.bf16.msra.mxu0 %v688
    %2505 = vmatprep.subr.bf16.mxu0 0
    %2506 = vmatpush1.bf16.msra.mxu0 %v687
    %2507 = vmatprep.subr.bf16.mxu0 0
    %2508 = vmatpush1.bf16.msra.mxu0 %v686
    %2509 = vmatprep.subr.bf16.mxu0 0
    %2510 = vmatpush1.bf16.msra.mxu0 %v685
    %2511 = vmatprep.subr.bf16.mxu0 0
    %2512 = vmatpush1.bf16.msra.mxu0 %v684
    %2513 = vmatprep.subr.bf16.mxu0 0
    %2514 = vmatpush1.bf16.msra.mxu0 %v683
    %2515 = vmatprep.subr.bf16.mxu0 0
    %2516 = vmatpush1.bf16.msra.mxu0 %v682
    %2517 = vmatprep.subr.bf16.mxu0 0
    %2518 = vmatpush1.bf16.msra.mxu0 %v681
    %2519 = vmatprep.subr.bf16.mxu0 0
    %2520 = vmatpush2.bf16.msra.mxu0 0
    %2521 = vmatprep.subr.bf16.mxu0 0
    %2522 = vmatpush2.bf16.msra.mxu0 0
    %2523 = vmatprep.subr.bf16.mxu0 0
    %2524 = vmatpush2.bf16.msra.mxu0 0
    %2525 = vmatprep.subr.bf16.mxu0 0
    %2526 = vmatpush2.bf16.msra.mxu0 0
    %2527 = vmatprep.subr.bf16.mxu0 0
    %2528 = vmatpush2.bf16.msra.mxu0 0
    %2529 = vmatprep.subr.bf16.mxu0 0
    %2530 = vmatpush2.bf16.msra.mxu0 0
    %2531 = vmatprep.subr.bf16.mxu0 0
    %2532 = vmatpush2.bf16.msra.mxu0 0
    %2533 = vmatprep.subr.bf16.mxu0 0
    %2534 = vmatpush2.bf16.msra.mxu0 0
    %2535 = vmatprep.mubr.bf16.mxu0 0
    %2536 = vmatmul.mubr.bf16.gmra.mxu0 %v2502
    %v2537 = vpop.f32.mrf.mxu0
    %v2538 = vadd.f32 %v647, %v2537
    %v2539 = vpop.f32.mrf.mxu0
    %v2540 = vpop.f32.mrf.mxu0
    %v2541 = vpop.f32.mrf.mxu0
    %2542 = vdwg.mxu0
    %s2543 = scalar_lea.vmem [#allocation2], 56
    %v2544 = vld [vmem:[%s2543] sm:$0xff]
    %v2545 = vadd.f32 %v2538, %v2544
    %2546 = vmax.xlane.f32.xlu0 %v2545
    %v2547 = vpop.xlane.xlu0 %2546
    %vm2548 = vcmp.eq.f32.partialorder %v2545, %v2547
    %v2549 = vsel %vm2548, %v87, 128
    %v2550 = vand.u32 %v2549, 65535
    %v2551 = vshra.s32 %v2549, 16
    %v2552 = vcvt.s32.f32 %v2550
    %v2553 = vcvt.s32.f32 %v2551
    %2554 = vmin.xlane.f32.xlu0 %v2553
    %v2555 = vpop.xlane.xlu0 %2554
    %vm2556 = vcmp.eq.f32.partialorder %v2553, %v2555
    %v2557 = vsel %vm2556, %v2552, inf
    %2558 = vmin.xlane.f32.xlu0 %v2557
    %v2559 = vpop.xlane.xlu0 %2558
    %v2560 = vcvt.f32.s32 %v2559
    %v2561 = vcvt.f32.s32 %v2555
    %v2562 = vshll.u32 %v2561, 16
    %v2563 = vadd.s32 %v2562, %v2560
    %v2564 = vlaneseq
    %v2565 = vshrl.u32 %v2564, 7
    %v2566 = vsub.s32 %v87, %v2565
    %v2567 = vrot.slane %v2563, %v2566
    %2568 = vst.msk [vmem:[#allocation10 + $0x7] sm:$0x1] %vm765, %v2567
    // Predicated region
    $region50: #{tpu_custom_call.1} parent=1 // pred_check
      _
    $region51: #{tpu_custom_call.1} parent=1 // pred_check_branch
      %2570 = sbr.rel (0) target = $region53
    $region52: #{tpu_custom_call.1} parent=1 // pred_region
      %s2572 = ssub.s32 128, 128
      %2573 = vsyncadd [#allocation4], %s2572
      %s2575 = sshll.u32 [#allocation10], 4
      %s2576 = int_to_ptr.vmem [resolvable:$true] %s2575
      %2578 = dma.vmem_to_hbm [thread:$0]  %s2576, 128, %s8, [#allocation4]
    $region53: #{tpu_custom_call.1} parent=1 // pred_fallthru
      _
    // Predicated region
    $region54: #{tpu_custom_call.1} parent=1 // pred_check
      _
    $region55: #{tpu_custom_call.1} parent=1 // pred_check_branch
      %2580 = sbr.rel (0) target = $region57
    $region56: #{tpu_custom_call.1} parent=1 // pred_region
      %2581 = dma.done [#allocation4], 128
    $region57: #{tpu_custom_call.1} parent=1 // pred_fallthru
      _
    %2582 = vsyncpa [#allocation3], 1
    %2583 = vsyncpa [#allocation6], 1
    %2584 = vsyncpa [#allocation9], 1
    %2585 = vsyncpa [#allocation4], 1

</llo_original>
